<compile_context>
chip_gen: v7x
topology: tpu7x:2x2x1
jax: 0.10.0
libtpu: 0.0.40
codegen_flags: <defaults>
</compile_context>

<pallas_src>
import functools

import jax
import jax.numpy as jnp
from jax.experimental import pallas as pl
from jax.experimental.pallas import tpu as pltpu

D_IN = 1024      # input feature dim
D_MODEL = 64     # d_model of transformer_encoder2
D_FF = 2048      # nn.TransformerEncoderLayer default dim_feedforward
N_LAYERS = 2
LN_EPS = 1e-5
LEAKY_SLOPE = 0.01
TM_MAX = 1024    # row tile upper bound (sweep 512/1024)
FF_KC = 512      # feed-forward K-chunk (D_FF split into 2048/512 = 4 chunks)


def _round_up(x, m):
    return (x + m - 1) // m * m


def _pick_tm(n):
    """Row tile: as large as possible, but >=2 grid steps when N allows it
    (v7x has 2 TensorCores; a 1-step grid leaves one idle)."""
    if n <= 8:
        return 8
    return max(8, min(TM_MAX, _round_up(pl.cdiv(n, 2), 8)))


def _default_ff_dtype():
    """bf16 FFN epilogue on v6e/v7x (bf16 VPU packs 2 elems/lane); f32 on
    older chips (v5e has no bf16 VALU — bf16 elementwise would gain nothing)."""
    try:
        kind = jax.devices()[0].device_kind.lower()
    except Exception:
        return jnp.bfloat16
    return jnp.bfloat16 if ("v6" in kind or "v7" in kind) else jnp.float32


def _layer_norm(h, w, b):
    mu = jnp.mean(h, axis=-1, keepdims=True)
    var = jnp.mean(jnp.square(h - mu), axis=-1, keepdims=True)
    return (h - mu) * jax.lax.rsqrt(var + LN_EPS) * w + b


def gtm_kernel(x_ref, w_in, b_in, w_attn, b_attn, ln1_w, ln1_b,
               w1, b1, w2, b2, ln2_w, ln2_b, out_ref, *, ff_dtype, kc):
    mm_dtype = w_in.dtype

    # ---- input_block: LayerNorm(1024); gamma/beta folded into w_in/b_in.
    # x arrives as bf16 — accumulate the LN statistics in f32.
    x = x_ref[...].astype(jnp.float32)
    mu = jnp.mean(x, axis=-1, keepdims=True)
    var = jnp.mean(jnp.square(x - mu), axis=-1, keepdims=True)
    xn = ((x - mu) * jax.lax.rsqrt(var + LN_EPS)).astype(mm_dtype)

    # Linear(1024, 64) + LeakyReLU  (bf16 operands, f32 MXU accumulation)
    h = jnp.dot(xn, w_in[...], preferred_element_type=jnp.float32) + b_in[...]
    h = jnp.where(h >= 0, h, LEAKY_SLOPE * h)

    # ---- transformer_encoder2: 2 post-LN encoder layers, seq_len == 1 ----
    for l in range(N_LAYERS):
        # attention (seq_len=1 -> softmax==1) with residual folded into the
        # weight:  h + out_proj(v_proj(h)) = h @ (I + Wv@Wo) + b
        h_mm = h.astype(mm_dtype)
        pre = jnp.dot(h_mm, w_attn[l], preferred_element_type=jnp.float32) + b_attn[l]
        h = _layer_norm(pre, ln1_w[l], ln1_b[l])              # norm1

        # feed-forward, K-blocked over D_FF so the (TM, 2048) intermediate
        # never materializes (exact: ReLU is elementwise per column).
        h_mm = h.astype(mm_dtype)
        acc = jnp.zeros_like(h)                               # (TM, 64) f32
        for c in range(D_FF // kc):
            ks, ke = c * kc, (c + 1) * kc
            ff = jnp.dot(h_mm, w1[l, :, ks:ke], preferred_element_type=jnp.float32)
            ff = jnp.maximum(ff.astype(ff_dtype) + b1[l, :, ks:ke], 0)
            acc = acc + jnp.dot(ff.astype(mm_dtype), w2[l, ks:ke, :],
                                preferred_element_type=jnp.float32)
        h = _layer_norm(h + acc + b2[l], ln2_w[l], ln2_b[l])  # norm2(residual)

    out_ref[...] = h


def _prep_weights(p, mm_dtype, ff_dtype):
    """Exact algebraic folding done once in f32, then cast for the MXU."""
    # Fold input LayerNorm gamma/beta into the input projection.
    w_in = p["ln0_w"].reshape(-1, 1) * p["w_in"]                   # (1024, 64)
    b_in = p["ln0_b"] @ p["w_in"] + p["b_in"]                      # (1, 64)
    # Fuse attention v-proj + out-proj and fold the residual (seq_len == 1).
    eye = jnp.eye(D_MODEL, dtype=jnp.float32)
    w_attn = jnp.einsum("lij,ljk->lik", p["w_v"], p["w_o"]) + eye  # (L, 64, 64)
    b_attn = jnp.einsum("lij,ljk->lik", p["b_v"], p["w_o"]) + p["b_o"]
    return [w_in.astype(mm_dtype), b_in,
            w_attn.astype(mm_dtype), b_attn,
            p["ln1_w"], p["ln1_b"],
            p["w1"].astype(mm_dtype), p["b1"].astype(ff_dtype),
            p["w2"].astype(mm_dtype), p["b2"],
            p["ln2_w"], p["ln2_b"]]


def gtm_forward(x, params, *, mm_dtype=jnp.bfloat16, ff_dtype=None):
    if ff_dtype is None:
        ff_dtype = _default_ff_dtype()
    n = x.shape[0]
    weights = _prep_weights(params, mm_dtype, ff_dtype)

    # Halve the dominant x HBM stream.
    # TODO(synk): if the upstream producer can emit bf16 directly, drop this
    # wrapper cast (it is an extra, un-hidden XLA pass over x).
    if x.dtype != mm_dtype:
        x = x.astype(mm_dtype)

    tm = _pick_tm(n)
    grid = (pl.cdiv(n, tm),)        # no jnp.pad: ragged last block is masked

    def bcast_spec(shape):
        zeros = (0,) * len(shape)
        return pl.BlockSpec(shape, lambda i, z=zeros: z)   # resident across grid

    in_specs = [pl.BlockSpec((tm, D_IN), lambda i: (i, 0))]
    in_specs += [bcast_spec(w.shape) for w in weights]
    out_specs = pl.BlockSpec((tm, D_MODEL), lambda i: (i, 0))

    kernel = functools.partial(gtm_kernel, ff_dtype=ff_dtype, kc=FF_KC)
    out = pl.pallas_call(
        kernel,
        out_shape=jax.ShapeDtypeStruct((n, D_MODEL), jnp.float32),
        grid=grid,
        in_specs=in_specs,
        out_specs=out_specs,
        compiler_params=pltpu.CompilerParams(
            dimension_semantics=("parallel",),
            vmem_limit_bytes=48 * 1024 * 1024),
    )(x, *weights)
    return out


def init_params(key):
    ks = jax.random.split(key, 10)

    def mat(k, shape, scale=0.02):
        return (scale * jax.random.normal(k, shape)).astype(jnp.float32)

    p = {}
    # input_block: LayerNorm(1024) + Linear(1024, 64)
    p["ln0_w"] = jnp.ones((1, D_IN), jnp.float32)
    p["ln0_b"] = jnp.zeros((1, D_IN), jnp.float32)
    p["w_in"] = mat(ks[0], (D_IN, D_MODEL))
    p["b_in"] = mat(ks[1], (1, D_MODEL))
    # per encoder layer (stacked on leading layer axis)
    p["w_v"] = mat(ks[2], (N_LAYERS, D_MODEL, D_MODEL))   # value slice of in_proj (transposed)
    p["b_v"] = mat(ks[3], (N_LAYERS, 1, D_MODEL))
    p["w_o"] = mat(ks[4], (N_LAYERS, D_MODEL, D_MODEL))   # out_proj (transposed)
    p["b_o"] = mat(ks[5], (N_LAYERS, 1, D_MODEL))
    p["ln1_w"] = jnp.ones((N_LAYERS, 1, D_MODEL), jnp.float32)
    p["ln1_b"] = jnp.zeros((N_LAYERS, 1, D_MODEL), jnp.float32)
    p["w1"] = mat(ks[6], (N_LAYERS, D_MODEL, D_FF))
    p["b1"] = mat(ks[7], (N_LAYERS, 1, D_FF))
    p["w2"] = mat(ks[8], (N_LAYERS, D_FF, D_MODEL))
    p["b2"] = mat(ks[9], (N_LAYERS, 1, D_MODEL))
    p["ln2_w"] = jnp.ones((N_LAYERS, 1, D_MODEL), jnp.float32)
    p["ln2_b"] = jnp.zeros((N_LAYERS, 1, D_MODEL), jnp.float32)
    return p


def gtm_ref(x, p):
    """Pure-JAX f32 reference mirroring the PyTorch forward (eval mode)."""
    h = _layer_norm(x, p["ln0_w"], p["ln0_b"])
    h = h @ p["w_in"] + p["b_in"]
    h = jnp.where(h >= 0, h, LEAKY_SLOPE * h)
    for l in range(N_LAYERS):
        v = h @ p["w_v"][l] + p["b_v"][l]
        attn = v @ p["w_o"][l] + p["b_o"][l]
        h = _layer_norm(h + attn, p["ln1_w"][l], p["ln1_b"][l])
        ff = jnp.maximum(h @ p["w1"][l] + p["b1"][l], 0.0)
        ff = ff @ p["w2"][l] + p["b2"][l]
        h = _layer_norm(h + ff, p["ln2_w"][l], p["ln2_b"][l])
    return h


if __name__ == "__main__":
    key = jax.random.PRNGKey(0)
    k_x, k_p = jax.random.split(key)

    N_NODES = 16                                   # small graph: 16 nodes
    x = jax.random.normal(k_x, (N_NODES, D_IN), dtype=jnp.float32)
    params = init_params(k_p)

    out = gtm_forward(x, params)
    out = jax.block_until_ready(out)

    ref = gtm_ref(x, params)
    err = float(jnp.max(jnp.abs(out - ref)))
    assert out.shape == (N_NODES, D_MODEL), out.shape
    # bf16 input / weights / epilogue with f32 accumulation vs. all-f32
    # reference; post-LN activations are O(1), so abs err ~ rel err.
    assert err < 1e-1, f"mismatch vs f32 reference: {err}"
    print("KERNEL_OK")
</pallas_src>

<mosaic_0001>
module attributes {stable_mosaic.version = 11 : i64} {
  func.func @gtm_kernel(%arg0: i32, %arg1: memref<8x1024xbf16, #tpu.memory_space<vmem>>, %arg2: memref<1024x64xbf16, #tpu.memory_space<vmem>>, %arg3: memref<1x64xf32, #tpu.memory_space<vmem>>, %arg4: memref<2x64x64xbf16, #tpu.memory_space<vmem>>, %arg5: memref<2x1x64xf32, #tpu.memory_space<vmem>>, %arg6: memref<2x1x64xf32, #tpu.memory_space<vmem>>, %arg7: memref<2x1x64xf32, #tpu.memory_space<vmem>>, %arg8: memref<2x64x2048xbf16, #tpu.memory_space<vmem>>, %arg9: memref<2x1x2048xf32, #tpu.memory_space<vmem>>, %arg10: memref<2x2048x64xbf16, #tpu.memory_space<vmem>>, %arg11: memref<2x1x64xf32, #tpu.memory_space<vmem>>, %arg12: memref<2x1x64xf32, #tpu.memory_space<vmem>>, %arg13: memref<2x1x64xf32, #tpu.memory_space<vmem>>, %arg14: memref<8x64xf32, #tpu.memory_space<vmem>>) attributes {dimension_semantics = [#tpu.dimension_semantics<parallel>], iteration_bounds = array<i64: 2>, scalar_prefetch = 0 : i64, scratch_operands = 0 : i64, tpu.core_type = #tpu.core_type<tc>, window_params = [{transform_indices = @transform_0, window_bounds = array<i64: 8, 1024>}, {pipeline_mode = #tpu.pipeline_mode<synchronous>, transform_indices = @transform_1, window_bounds = array<i64: 1024, 64>}, {pipeline_mode = #tpu.pipeline_mode<synchronous>, transform_indices = @transform_2, window_bounds = array<i64: 1, 64>}, {pipeline_mode = #tpu.pipeline_mode<synchronous>, transform_indices = @transform_3, window_bounds = array<i64: 2, 64, 64>}, {pipeline_mode = #tpu.pipeline_mode<synchronous>, transform_indices = @transform_4, window_bounds = array<i64: 2, 1, 64>}, {pipeline_mode = #tpu.pipeline_mode<synchronous>, transform_indices = @transform_5, window_bounds = array<i64: 2, 1, 64>}, {pipeline_mode = #tpu.pipeline_mode<synchronous>, transform_indices = @transform_6, window_bounds = array<i64: 2, 1, 64>}, {pipeline_mode = #tpu.pipeline_mode<synchronous>, transform_indices = @transform_7, window_bounds = array<i64: 2, 64, 2048>}, {pipeline_mode = #tpu.pipeline_mode<synchronous>, transform_indices = @transform_8, window_bounds = array<i64: 2, 1, 2048>}, {pipeline_mode = #tpu.pipeline_mode<synchronous>, transform_indices = @transform_9, window_bounds = array<i64: 2, 2048, 64>}, {pipeline_mode = #tpu.pipeline_mode<synchronous>, transform_indices = @transform_10, window_bounds = array<i64: 2, 1, 64>}, {pipeline_mode = #tpu.pipeline_mode<synchronous>, transform_indices = @transform_11, window_bounds = array<i64: 2, 1, 64>}, {pipeline_mode = #tpu.pipeline_mode<synchronous>, transform_indices = @transform_12, window_bounds = array<i64: 2, 1, 64>}, {transform_indices = @transform_13, window_bounds = array<i64: 8, 64>}]} {
    %c0 = arith.constant 0 : index
    %c0_0 = arith.constant 0 : index
    %0 = vector.load %arg1[%c0, %c0_0] : memref<8x1024xbf16, #tpu.memory_space<vmem>>, vector<8x1024xbf16>
    %1 = arith.extf %0 : vector<8x1024xbf16> to vector<8x1024xf32>
    %cst = arith.constant dense<0.000000e+00> : vector<8xf32>
    %2 = vector.multi_reduction <add>, %1, %cst [1] : vector<8x1024xf32> to vector<8xf32>
    %3 = vector.shape_cast %2 : vector<8xf32> to vector<8x1xf32>
    %cst_1 = arith.constant 1.024000e+03 : f32
    %4 = vector.broadcast %cst_1 : f32 to vector<8x1xf32>
    %5 = arith.divf %3, %4 : vector<8x1xf32>
    %6 = vector.broadcast %5 : vector<8x1xf32> to vector<8x1024xf32>
    %7 = arith.subf %1, %6 : vector<8x1024xf32>
    %8 = arith.mulf %7, %7 : vector<8x1024xf32>
    %cst_2 = arith.constant dense<0.000000e+00> : vector<8xf32>
    %9 = vector.multi_reduction <add>, %8, %cst_2 [1] : vector<8x1024xf32> to vector<8xf32>
    %10 = vector.shape_cast %9 : vector<8xf32> to vector<8x1xf32>
    %cst_3 = arith.constant 1.024000e+03 : f32
    %11 = vector.broadcast %cst_3 : f32 to vector<8x1xf32>
    %12 = arith.divf %10, %11 : vector<8x1xf32>
    %13 = vector.broadcast %5 : vector<8x1xf32> to vector<8x1024xf32>
    %14 = arith.subf %1, %13 : vector<8x1024xf32>
    %cst_4 = arith.constant 9.99999974E-6 : f32
    %15 = vector.broadcast %cst_4 : f32 to vector<8x1xf32>
    %16 = arith.addf %12, %15 : vector<8x1xf32>
    %17 = math.rsqrt %16 : vector<8x1xf32>
    %18 = vector.broadcast %17 : vector<8x1xf32> to vector<8x1024xf32>
    %19 = arith.mulf %14, %18 : vector<8x1024xf32>
    %20 = arith.truncf %19 : vector<8x1024xf32> to vector<8x1024xbf16>
    %c0_5 = arith.constant 0 : index
    %c0_6 = arith.constant 0 : index
    %21 = vector.load %arg2[%c0_5, %c0_6] : memref<1024x64xbf16, #tpu.memory_space<vmem>>, vector<1024x64xbf16>
    %cst_7 = arith.constant dense<0.000000e+00> : vector<8x64xf32>
    %22 = tpu.matmul %20, %21, %cst_7 {dimension_numbers = #tpu.dot_dimension_numbers<[1], [0], [0], [1], [0, 0, 1, 1], [], []>} : vector<8x1024xbf16>, vector<1024x64xbf16>, vector<8x64xf32> -> vector<8x64xf32>
    %c0_8 = arith.constant 0 : index
    %c0_9 = arith.constant 0 : index
    %23 = vector.load %arg3[%c0_8, %c0_9] : memref<1x64xf32, #tpu.memory_space<vmem>>, vector<1x64xf32>
    %24 = vector.broadcast %23 : vector<1x64xf32> to vector<8x64xf32>
    %25 = arith.addf %22, %24 : vector<8x64xf32>
    %cst_10 = arith.constant 0.000000e+00 : f32
    %26 = vector.broadcast %cst_10 : f32 to vector<8x64xf32>
    %27 = arith.cmpf oge, %25, %26 : vector<8x64xf32>
    %cst_11 = arith.constant 0.00999999977 : f32
    %28 = vector.broadcast %cst_11 : f32 to vector<8x64xf32>
    %29 = arith.mulf %28, %25 : vector<8x64xf32>
    %30 = arith.select %27, %25, %29 : vector<8x64xi1>, vector<8x64xf32>
    %31 = arith.truncf %30 : vector<8x64xf32> to vector<8x64xbf16>
    %c0_12 = arith.constant 0 : index
    %c0_13 = arith.constant 0 : index
    %c0_14 = arith.constant 0 : index
    %32 = vector.load %arg4[%c0_12, %c0_13, %c0_14] : memref<2x64x64xbf16, #tpu.memory_space<vmem>>, vector<1x64x64xbf16>
    %33 = vector.shape_cast %32 : vector<1x64x64xbf16> to vector<64x64xbf16>
    %cst_15 = arith.constant dense<0.000000e+00> : vector<8x64xf32>
    %34 = tpu.matmul %31, %33, %cst_15 {dimension_numbers = #tpu.dot_dimension_numbers<[1], [0], [0], [1], [0, 0, 1, 1], [], []>} : vector<8x64xbf16>, vector<64x64xbf16>, vector<8x64xf32> -> vector<8x64xf32>
    %c0_16 = arith.constant 0 : index
    %c0_17 = arith.constant 0 : index
    %c0_18 = arith.constant 0 : index
    %35 = vector.load %arg5[%c0_16, %c0_17, %c0_18] : memref<2x1x64xf32, #tpu.memory_space<vmem>>, vector<1x1x64xf32>
    %36 = vector.shape_cast %35 : vector<1x1x64xf32> to vector<1x64xf32>
    %37 = vector.broadcast %36 : vector<1x64xf32> to vector<8x64xf32>
    %38 = arith.addf %34, %37 : vector<8x64xf32>
    %c0_19 = arith.constant 0 : index
    %c0_20 = arith.constant 0 : index
    %c0_21 = arith.constant 0 : index
    %39 = vector.load %arg6[%c0_19, %c0_20, %c0_21] : memref<2x1x64xf32, #tpu.memory_space<vmem>>, vector<1x1x64xf32>
    %40 = vector.shape_cast %39 : vector<1x1x64xf32> to vector<1x64xf32>
    %c0_22 = arith.constant 0 : index
    %c0_23 = arith.constant 0 : index
    %c0_24 = arith.constant 0 : index
    %41 = vector.load %arg7[%c0_22, %c0_23, %c0_24] : memref<2x1x64xf32, #tpu.memory_space<vmem>>, vector<1x1x64xf32>
    %42 = vector.shape_cast %41 : vector<1x1x64xf32> to vector<1x64xf32>
    %cst_25 = arith.constant dense<0.000000e+00> : vector<8xf32>
    %43 = vector.multi_reduction <add>, %38, %cst_25 [1] : vector<8x64xf32> to vector<8xf32>
    %44 = vector.shape_cast %43 : vector<8xf32> to vector<8x1xf32>
    %cst_26 = arith.constant 6.400000e+01 : f32
    %45 = vector.broadcast %cst_26 : f32 to vector<8x1xf32>
    %46 = arith.divf %44, %45 : vector<8x1xf32>
    %47 = vector.broadcast %46 : vector<8x1xf32> to vector<8x64xf32>
    %48 = arith.subf %38, %47 : vector<8x64xf32>
    %49 = arith.mulf %48, %48 : vector<8x64xf32>
    %cst_27 = arith.constant dense<0.000000e+00> : vector<8xf32>
    %50 = vector.multi_reduction <add>, %49, %cst_27 [1] : vector<8x64xf32> to vector<8xf32>
    %51 = vector.shape_cast %50 : vector<8xf32> to vector<8x1xf32>
    %cst_28 = arith.constant 6.400000e+01 : f32
    %52 = vector.broadcast %cst_28 : f32 to vector<8x1xf32>
    %53 = arith.divf %51, %52 : vector<8x1xf32>
    %54 = vector.broadcast %46 : vector<8x1xf32> to vector<8x64xf32>
    %55 = arith.subf %38, %54 : vector<8x64xf32>
    %cst_29 = arith.constant 9.99999974E-6 : f32
    %56 = vector.broadcast %cst_29 : f32 to vector<8x1xf32>
    %57 = arith.addf %53, %56 : vector<8x1xf32>
    %58 = math.rsqrt %57 : vector<8x1xf32>
    %59 = vector.broadcast %58 : vector<8x1xf32> to vector<8x64xf32>
    %60 = arith.mulf %55, %59 : vector<8x64xf32>
    %61 = vector.broadcast %40 : vector<1x64xf32> to vector<8x64xf32>
    %62 = arith.mulf %60, %61 : vector<8x64xf32>
    %63 = vector.broadcast %42 : vector<1x64xf32> to vector<8x64xf32>
    %64 = arith.addf %62, %63 : vector<8x64xf32>
    %65 = arith.truncf %64 : vector<8x64xf32> to vector<8x64xbf16>
    %cst_30 = arith.constant 0.000000e+00 : f32
    %66 = vector.broadcast %cst_30 : f32 to vector<8x64xf32>
    %c0_31 = arith.constant 0 : index
    %c0_32 = arith.constant 0 : index
    %c0_33 = arith.constant 0 : index
    %67 = vector.load %arg8[%c0_31, %c0_32, %c0_33] : memref<2x64x2048xbf16, #tpu.memory_space<vmem>>, vector<1x64x512xbf16>
    %68 = vector.shape_cast %67 : vector<1x64x512xbf16> to vector<64x512xbf16>
    %cst_34 = arith.constant dense<0.000000e+00> : vector<8x512xf32>
    %69 = tpu.matmul %65, %68, %cst_34 {dimension_numbers = #tpu.dot_dimension_numbers<[1], [0], [0], [1], [0, 0, 1, 1], [], []>} : vector<8x64xbf16>, vector<64x512xbf16>, vector<8x512xf32> -> vector<8x512xf32>
    %c0_35 = arith.constant 0 : index
    %c0_36 = arith.constant 0 : index
    %c0_37 = arith.constant 0 : index
    %70 = vector.load %arg9[%c0_35, %c0_36, %c0_37] : memref<2x1x2048xf32, #tpu.memory_space<vmem>>, vector<1x1x512xf32>
    %71 = vector.shape_cast %70 : vector<1x1x512xf32> to vector<1x512xf32>
    %72 = vector.broadcast %71 : vector<1x512xf32> to vector<8x512xf32>
    %73 = arith.addf %69, %72 : vector<8x512xf32>
    %cst_38 = arith.constant 0.000000e+00 : f32
    %74 = vector.broadcast %cst_38 : f32 to vector<8x512xf32>
    %75 = arith.maximumf %73, %74 : vector<8x512xf32>
    %76 = arith.truncf %75 : vector<8x512xf32> to vector<8x512xbf16>
    %c0_39 = arith.constant 0 : index
    %c0_40 = arith.constant 0 : index
    %c0_41 = arith.constant 0 : index
    %77 = vector.load %arg10[%c0_39, %c0_40, %c0_41] : memref<2x2048x64xbf16, #tpu.memory_space<vmem>>, vector<1x512x64xbf16>
    %78 = vector.shape_cast %77 : vector<1x512x64xbf16> to vector<512x64xbf16>
    %cst_42 = arith.constant dense<0.000000e+00> : vector<8x64xf32>
    %79 = tpu.matmul %76, %78, %cst_42 {dimension_numbers = #tpu.dot_dimension_numbers<[1], [0], [0], [1], [0, 0, 1, 1], [], []>} : vector<8x512xbf16>, vector<512x64xbf16>, vector<8x64xf32> -> vector<8x64xf32>
    %80 = arith.addf %66, %79 : vector<8x64xf32>
    %c0_43 = arith.constant 0 : index
    %c0_44 = arith.constant 0 : index
    %c512 = arith.constant 512 : index
    %81 = vector.load %arg8[%c0_43, %c0_44, %c512] : memref<2x64x2048xbf16, #tpu.memory_space<vmem>>, vector<1x64x512xbf16>
    %82 = vector.shape_cast %81 : vector<1x64x512xbf16> to vector<64x512xbf16>
    %cst_45 = arith.constant dense<0.000000e+00> : vector<8x512xf32>
    %83 = tpu.matmul %65, %82, %cst_45 {dimension_numbers = #tpu.dot_dimension_numbers<[1], [0], [0], [1], [0, 0, 1, 1], [], []>} : vector<8x64xbf16>, vector<64x512xbf16>, vector<8x512xf32> -> vector<8x512xf32>
    %c0_46 = arith.constant 0 : index
    %c0_47 = arith.constant 0 : index
    %c512_48 = arith.constant 512 : index
    %84 = vector.load %arg9[%c0_46, %c0_47, %c512_48] : memref<2x1x2048xf32, #tpu.memory_space<vmem>>, vector<1x1x512xf32>
    %85 = vector.shape_cast %84 : vector<1x1x512xf32> to vector<1x512xf32>
    %86 = vector.broadcast %85 : vector<1x512xf32> to vector<8x512xf32>
    %87 = arith.addf %83, %86 : vector<8x512xf32>
    %cst_49 = arith.constant 0.000000e+00 : f32
    %88 = vector.broadcast %cst_49 : f32 to vector<8x512xf32>
    %89 = arith.maximumf %87, %88 : vector<8x512xf32>
    %90 = arith.truncf %89 : vector<8x512xf32> to vector<8x512xbf16>
    %c0_50 = arith.constant 0 : index
    %c512_51 = arith.constant 512 : index
    %c0_52 = arith.constant 0 : index
    %91 = vector.load %arg10[%c0_50, %c512_51, %c0_52] : memref<2x2048x64xbf16, #tpu.memory_space<vmem>>, vector<1x512x64xbf16>
    %92 = vector.shape_cast %91 : vector<1x512x64xbf16> to vector<512x64xbf16>
    %cst_53 = arith.constant dense<0.000000e+00> : vector<8x64xf32>
    %93 = tpu.matmul %90, %92, %cst_53 {dimension_numbers = #tpu.dot_dimension_numbers<[1], [0], [0], [1], [0, 0, 1, 1], [], []>} : vector<8x512xbf16>, vector<512x64xbf16>, vector<8x64xf32> -> vector<8x64xf32>
    %94 = arith.addf %80, %93 : vector<8x64xf32>
    %c0_54 = arith.constant 0 : index
    %c0_55 = arith.constant 0 : index
    %c1024 = arith.constant 1024 : index
    %95 = vector.load %arg8[%c0_54, %c0_55, %c1024] : memref<2x64x2048xbf16, #tpu.memory_space<vmem>>, vector<1x64x512xbf16>
    %96 = vector.shape_cast %95 : vector<1x64x512xbf16> to vector<64x512xbf16>
    %cst_56 = arith.constant dense<0.000000e+00> : vector<8x512xf32>
    %97 = tpu.matmul %65, %96, %cst_56 {dimension_numbers = #tpu.dot_dimension_numbers<[1], [0], [0], [1], [0, 0, 1, 1], [], []>} : vector<8x64xbf16>, vector<64x512xbf16>, vector<8x512xf32> -> vector<8x512xf32>
    %c0_57 = arith.constant 0 : index
    %c0_58 = arith.constant 0 : index
    %c1024_59 = arith.constant 1024 : index
    %98 = vector.load %arg9[%c0_57, %c0_58, %c1024_59] : memref<2x1x2048xf32, #tpu.memory_space<vmem>>, vector<1x1x512xf32>
    %99 = vector.shape_cast %98 : vector<1x1x512xf32> to vector<1x512xf32>
    %100 = vector.broadcast %99 : vector<1x512xf32> to vector<8x512xf32>
    %101 = arith.addf %97, %100 : vector<8x512xf32>
    %cst_60 = arith.constant 0.000000e+00 : f32
    %102 = vector.broadcast %cst_60 : f32 to vector<8x512xf32>
    %103 = arith.maximumf %101, %102 : vector<8x512xf32>
    %104 = arith.truncf %103 : vector<8x512xf32> to vector<8x512xbf16>
    %c0_61 = arith.constant 0 : index
    %c1024_62 = arith.constant 1024 : index
    %c0_63 = arith.constant 0 : index
    %105 = vector.load %arg10[%c0_61, %c1024_62, %c0_63] : memref<2x2048x64xbf16, #tpu.memory_space<vmem>>, vector<1x512x64xbf16>
    %106 = vector.shape_cast %105 : vector<1x512x64xbf16> to vector<512x64xbf16>
    %cst_64 = arith.constant dense<0.000000e+00> : vector<8x64xf32>
    %107 = tpu.matmul %104, %106, %cst_64 {dimension_numbers = #tpu.dot_dimension_numbers<[1], [0], [0], [1], [0, 0, 1, 1], [], []>} : vector<8x512xbf16>, vector<512x64xbf16>, vector<8x64xf32> -> vector<8x64xf32>
    %108 = arith.addf %94, %107 : vector<8x64xf32>
    %c0_65 = arith.constant 0 : index
    %c0_66 = arith.constant 0 : index
    %c1536 = arith.constant 1536 : index
    %109 = vector.load %arg8[%c0_65, %c0_66, %c1536] : memref<2x64x2048xbf16, #tpu.memory_space<vmem>>, vector<1x64x512xbf16>
    %110 = vector.shape_cast %109 : vector<1x64x512xbf16> to vector<64x512xbf16>
    %cst_67 = arith.constant dense<0.000000e+00> : vector<8x512xf32>
    %111 = tpu.matmul %65, %110, %cst_67 {dimension_numbers = #tpu.dot_dimension_numbers<[1], [0], [0], [1], [0, 0, 1, 1], [], []>} : vector<8x64xbf16>, vector<64x512xbf16>, vector<8x512xf32> -> vector<8x512xf32>
    %c0_68 = arith.constant 0 : index
    %c0_69 = arith.constant 0 : index
    %c1536_70 = arith.constant 1536 : index
    %112 = vector.load %arg9[%c0_68, %c0_69, %c1536_70] : memref<2x1x2048xf32, #tpu.memory_space<vmem>>, vector<1x1x512xf32>
    %113 = vector.shape_cast %112 : vector<1x1x512xf32> to vector<1x512xf32>
    %114 = vector.broadcast %113 : vector<1x512xf32> to vector<8x512xf32>
    %115 = arith.addf %111, %114 : vector<8x512xf32>
    %cst_71 = arith.constant 0.000000e+00 : f32
    %116 = vector.broadcast %cst_71 : f32 to vector<8x512xf32>
    %117 = arith.maximumf %115, %116 : vector<8x512xf32>
    %118 = arith.truncf %117 : vector<8x512xf32> to vector<8x512xbf16>
    %c0_72 = arith.constant 0 : index
    %c1536_73 = arith.constant 1536 : index
    %c0_74 = arith.constant 0 : index
    %119 = vector.load %arg10[%c0_72, %c1536_73, %c0_74] : memref<2x2048x64xbf16, #tpu.memory_space<vmem>>, vector<1x512x64xbf16>
    %120 = vector.shape_cast %119 : vector<1x512x64xbf16> to vector<512x64xbf16>
    %cst_75 = arith.constant dense<0.000000e+00> : vector<8x64xf32>
    %121 = tpu.matmul %118, %120, %cst_75 {dimension_numbers = #tpu.dot_dimension_numbers<[1], [0], [0], [1], [0, 0, 1, 1], [], []>} : vector<8x512xbf16>, vector<512x64xbf16>, vector<8x64xf32> -> vector<8x64xf32>
    %122 = arith.addf %108, %121 : vector<8x64xf32>
    %123 = arith.addf %64, %122 : vector<8x64xf32>
    %c0_76 = arith.constant 0 : index
    %c0_77 = arith.constant 0 : index
    %c0_78 = arith.constant 0 : index
    %124 = vector.load %arg11[%c0_76, %c0_77, %c0_78] : memref<2x1x64xf32, #tpu.memory_space<vmem>>, vector<1x1x64xf32>
    %125 = vector.shape_cast %124 : vector<1x1x64xf32> to vector<1x64xf32>
    %126 = vector.broadcast %125 : vector<1x64xf32> to vector<8x64xf32>
    %127 = arith.addf %123, %126 : vector<8x64xf32>
    %c0_79 = arith.constant 0 : index
    %c0_80 = arith.constant 0 : index
    %c0_81 = arith.constant 0 : index
    %128 = vector.load %arg12[%c0_79, %c0_80, %c0_81] : memref<2x1x64xf32, #tpu.memory_space<vmem>>, vector<1x1x64xf32>
    %129 = vector.shape_cast %128 : vector<1x1x64xf32> to vector<1x64xf32>
    %c0_82 = arith.constant 0 : index
    %c0_83 = arith.constant 0 : index
    %c0_84 = arith.constant 0 : index
    %130 = vector.load %arg13[%c0_82, %c0_83, %c0_84] : memref<2x1x64xf32, #tpu.memory_space<vmem>>, vector<1x1x64xf32>
    %131 = vector.shape_cast %130 : vector<1x1x64xf32> to vector<1x64xf32>
    %cst_85 = arith.constant dense<0.000000e+00> : vector<8xf32>
    %132 = vector.multi_reduction <add>, %127, %cst_85 [1] : vector<8x64xf32> to vector<8xf32>
    %133 = vector.shape_cast %132 : vector<8xf32> to vector<8x1xf32>
    %cst_86 = arith.constant 6.400000e+01 : f32
    %134 = vector.broadcast %cst_86 : f32 to vector<8x1xf32>
    %135 = arith.divf %133, %134 : vector<8x1xf32>
    %136 = vector.broadcast %135 : vector<8x1xf32> to vector<8x64xf32>
    %137 = arith.subf %127, %136 : vector<8x64xf32>
    %138 = arith.mulf %137, %137 : vector<8x64xf32>
    %cst_87 = arith.constant dense<0.000000e+00> : vector<8xf32>
    %139 = vector.multi_reduction <add>, %138, %cst_87 [1] : vector<8x64xf32> to vector<8xf32>
    %140 = vector.shape_cast %139 : vector<8xf32> to vector<8x1xf32>
    %cst_88 = arith.constant 6.400000e+01 : f32
    %141 = vector.broadcast %cst_88 : f32 to vector<8x1xf32>
    %142 = arith.divf %140, %141 : vector<8x1xf32>
    %143 = vector.broadcast %135 : vector<8x1xf32> to vector<8x64xf32>
    %144 = arith.subf %127, %143 : vector<8x64xf32>
    %cst_89 = arith.constant 9.99999974E-6 : f32
    %145 = vector.broadcast %cst_89 : f32 to vector<8x1xf32>
    %146 = arith.addf %142, %145 : vector<8x1xf32>
    %147 = math.rsqrt %146 : vector<8x1xf32>
    %148 = vector.broadcast %147 : vector<8x1xf32> to vector<8x64xf32>
    %149 = arith.mulf %144, %148 : vector<8x64xf32>
    %150 = vector.broadcast %129 : vector<1x64xf32> to vector<8x64xf32>
    %151 = arith.mulf %149, %150 : vector<8x64xf32>
    %152 = vector.broadcast %131 : vector<1x64xf32> to vector<8x64xf32>
    %153 = arith.addf %151, %152 : vector<8x64xf32>
    %154 = arith.truncf %153 : vector<8x64xf32> to vector<8x64xbf16>
    %c1 = arith.constant 1 : index
    %c0_90 = arith.constant 0 : index
    %c0_91 = arith.constant 0 : index
    %155 = vector.load %arg4[%c1, %c0_90, %c0_91] : memref<2x64x64xbf16, #tpu.memory_space<vmem>>, vector<1x64x64xbf16>
    %156 = vector.shape_cast %155 : vector<1x64x64xbf16> to vector<64x64xbf16>
    %cst_92 = arith.constant dense<0.000000e+00> : vector<8x64xf32>
    %157 = tpu.matmul %154, %156, %cst_92 {dimension_numbers = #tpu.dot_dimension_numbers<[1], [0], [0], [1], [0, 0, 1, 1], [], []>} : vector<8x64xbf16>, vector<64x64xbf16>, vector<8x64xf32> -> vector<8x64xf32>
    %c1_93 = arith.constant 1 : index
    %c0_94 = arith.constant 0 : index
    %c0_95 = arith.constant 0 : index
    %158 = vector.load %arg5[%c1_93, %c0_94, %c0_95] : memref<2x1x64xf32, #tpu.memory_space<vmem>>, vector<1x1x64xf32>
    %159 = vector.shape_cast %158 : vector<1x1x64xf32> to vector<1x64xf32>
    %160 = vector.broadcast %159 : vector<1x64xf32> to vector<8x64xf32>
    %161 = arith.addf %157, %160 : vector<8x64xf32>
    %c1_96 = arith.constant 1 : index
    %c0_97 = arith.constant 0 : index
    %c0_98 = arith.constant 0 : index
    %162 = vector.load %arg6[%c1_96, %c0_97, %c0_98] : memref<2x1x64xf32, #tpu.memory_space<vmem>>, vector<1x1x64xf32>
    %163 = vector.shape_cast %162 : vector<1x1x64xf32> to vector<1x64xf32>
    %c1_99 = arith.constant 1 : index
    %c0_100 = arith.constant 0 : index
    %c0_101 = arith.constant 0 : index
    %164 = vector.load %arg7[%c1_99, %c0_100, %c0_101] : memref<2x1x64xf32, #tpu.memory_space<vmem>>, vector<1x1x64xf32>
    %165 = vector.shape_cast %164 : vector<1x1x64xf32> to vector<1x64xf32>
    %cst_102 = arith.constant dense<0.000000e+00> : vector<8xf32>
    %166 = vector.multi_reduction <add>, %161, %cst_102 [1] : vector<8x64xf32> to vector<8xf32>
    %167 = vector.shape_cast %166 : vector<8xf32> to vector<8x1xf32>
    %cst_103 = arith.constant 6.400000e+01 : f32
    %168 = vector.broadcast %cst_103 : f32 to vector<8x1xf32>
    %169 = arith.divf %167, %168 : vector<8x1xf32>
    %170 = vector.broadcast %169 : vector<8x1xf32> to vector<8x64xf32>
    %171 = arith.subf %161, %170 : vector<8x64xf32>
    %172 = arith.mulf %171, %171 : vector<8x64xf32>
    %cst_104 = arith.constant dense<0.000000e+00> : vector<8xf32>
    %173 = vector.multi_reduction <add>, %172, %cst_104 [1] : vector<8x64xf32> to vector<8xf32>
    %174 = vector.shape_cast %173 : vector<8xf32> to vector<8x1xf32>
    %cst_105 = arith.constant 6.400000e+01 : f32
    %175 = vector.broadcast %cst_105 : f32 to vector<8x1xf32>
    %176 = arith.divf %174, %175 : vector<8x1xf32>
    %177 = vector.broadcast %169 : vector<8x1xf32> to vector<8x64xf32>
    %178 = arith.subf %161, %177 : vector<8x64xf32>
    %cst_106 = arith.constant 9.99999974E-6 : f32
    %179 = vector.broadcast %cst_106 : f32 to vector<8x1xf32>
    %180 = arith.addf %176, %179 : vector<8x1xf32>
    %181 = math.rsqrt %180 : vector<8x1xf32>
    %182 = vector.broadcast %181 : vector<8x1xf32> to vector<8x64xf32>
    %183 = arith.mulf %178, %182 : vector<8x64xf32>
    %184 = vector.broadcast %163 : vector<1x64xf32> to vector<8x64xf32>
    %185 = arith.mulf %183, %184 : vector<8x64xf32>
    %186 = vector.broadcast %165 : vector<1x64xf32> to vector<8x64xf32>
    %187 = arith.addf %185, %186 : vector<8x64xf32>
    %188 = arith.truncf %187 : vector<8x64xf32> to vector<8x64xbf16>
    %cst_107 = arith.constant 0.000000e+00 : f32
    %189 = vector.broadcast %cst_107 : f32 to vector<8x64xf32>
    %c1_108 = arith.constant 1 : index
    %c0_109 = arith.constant 0 : index
    %c0_110 = arith.constant 0 : index
    %190 = vector.load %arg8[%c1_108, %c0_109, %c0_110] : memref<2x64x2048xbf16, #tpu.memory_space<vmem>>, vector<1x64x512xbf16>
    %191 = vector.shape_cast %190 : vector<1x64x512xbf16> to vector<64x512xbf16>
    %cst_111 = arith.constant dense<0.000000e+00> : vector<8x512xf32>
    %192 = tpu.matmul %188, %191, %cst_111 {dimension_numbers = #tpu.dot_dimension_numbers<[1], [0], [0], [1], [0, 0, 1, 1], [], []>} : vector<8x64xbf16>, vector<64x512xbf16>, vector<8x512xf32> -> vector<8x512xf32>
    %c1_112 = arith.constant 1 : index
    %c0_113 = arith.constant 0 : index
    %c0_114 = arith.constant 0 : index
    %193 = vector.load %arg9[%c1_112, %c0_113, %c0_114] : memref<2x1x2048xf32, #tpu.memory_space<vmem>>, vector<1x1x512xf32>
    %194 = vector.shape_cast %193 : vector<1x1x512xf32> to vector<1x512xf32>
    %195 = vector.broadcast %194 : vector<1x512xf32> to vector<8x512xf32>
    %196 = arith.addf %192, %195 : vector<8x512xf32>
    %cst_115 = arith.constant 0.000000e+00 : f32
    %197 = vector.broadcast %cst_115 : f32 to vector<8x512xf32>
    %198 = arith.maximumf %196, %197 : vector<8x512xf32>
    %199 = arith.truncf %198 : vector<8x512xf32> to vector<8x512xbf16>
    %c1_116 = arith.constant 1 : index
    %c0_117 = arith.constant 0 : index
    %c0_118 = arith.constant 0 : index
    %200 = vector.load %arg10[%c1_116, %c0_117, %c0_118] : memref<2x2048x64xbf16, #tpu.memory_space<vmem>>, vector<1x512x64xbf16>
    %201 = vector.shape_cast %200 : vector<1x512x64xbf16> to vector<512x64xbf16>
    %cst_119 = arith.constant dense<0.000000e+00> : vector<8x64xf32>
    %202 = tpu.matmul %199, %201, %cst_119 {dimension_numbers = #tpu.dot_dimension_numbers<[1], [0], [0], [1], [0, 0, 1, 1], [], []>} : vector<8x512xbf16>, vector<512x64xbf16>, vector<8x64xf32> -> vector<8x64xf32>
    %203 = arith.addf %189, %202 : vector<8x64xf32>
    %c1_120 = arith.constant 1 : index
    %c0_121 = arith.constant 0 : index
    %c512_122 = arith.constant 512 : index
    %204 = vector.load %arg8[%c1_120, %c0_121, %c512_122] : memref<2x64x2048xbf16, #tpu.memory_space<vmem>>, vector<1x64x512xbf16>
    %205 = vector.shape_cast %204 : vector<1x64x512xbf16> to vector<64x512xbf16>
    %cst_123 = arith.constant dense<0.000000e+00> : vector<8x512xf32>
    %206 = tpu.matmul %188, %205, %cst_123 {dimension_numbers = #tpu.dot_dimension_numbers<[1], [0], [0], [1], [0, 0, 1, 1], [], []>} : vector<8x64xbf16>, vector<64x512xbf16>, vector<8x512xf32> -> vector<8x512xf32>
    %c1_124 = arith.constant 1 : index
    %c0_125 = arith.constant 0 : index
    %c512_126 = arith.constant 512 : index
    %207 = vector.load %arg9[%c1_124, %c0_125, %c512_126] : memref<2x1x2048xf32, #tpu.memory_space<vmem>>, vector<1x1x512xf32>
    %208 = vector.shape_cast %207 : vector<1x1x512xf32> to vector<1x512xf32>
    %209 = vector.broadcast %208 : vector<1x512xf32> to vector<8x512xf32>
    %210 = arith.addf %206, %209 : vector<8x512xf32>
    %cst_127 = arith.constant 0.000000e+00 : f32
    %211 = vector.broadcast %cst_127 : f32 to vector<8x512xf32>
    %212 = arith.maximumf %210, %211 : vector<8x512xf32>
    %213 = arith.truncf %212 : vector<8x512xf32> to vector<8x512xbf16>
    %c1_128 = arith.constant 1 : index
    %c512_129 = arith.constant 512 : index
    %c0_130 = arith.constant 0 : index
    %214 = vector.load %arg10[%c1_128, %c512_129, %c0_130] : memref<2x2048x64xbf16, #tpu.memory_space<vmem>>, vector<1x512x64xbf16>
    %215 = vector.shape_cast %214 : vector<1x512x64xbf16> to vector<512x64xbf16>
    %cst_131 = arith.constant dense<0.000000e+00> : vector<8x64xf32>
    %216 = tpu.matmul %213, %215, %cst_131 {dimension_numbers = #tpu.dot_dimension_numbers<[1], [0], [0], [1], [0, 0, 1, 1], [], []>} : vector<8x512xbf16>, vector<512x64xbf16>, vector<8x64xf32> -> vector<8x64xf32>
    %217 = arith.addf %203, %216 : vector<8x64xf32>
    %c1_132 = arith.constant 1 : index
    %c0_133 = arith.constant 0 : index
    %c1024_134 = arith.constant 1024 : index
    %218 = vector.load %arg8[%c1_132, %c0_133, %c1024_134] : memref<2x64x2048xbf16, #tpu.memory_space<vmem>>, vector<1x64x512xbf16>
    %219 = vector.shape_cast %218 : vector<1x64x512xbf16> to vector<64x512xbf16>
    %cst_135 = arith.constant dense<0.000000e+00> : vector<8x512xf32>
    %220 = tpu.matmul %188, %219, %cst_135 {dimension_numbers = #tpu.dot_dimension_numbers<[1], [0], [0], [1], [0, 0, 1, 1], [], []>} : vector<8x64xbf16>, vector<64x512xbf16>, vector<8x512xf32> -> vector<8x512xf32>
    %c1_136 = arith.constant 1 : index
    %c0_137 = arith.constant 0 : index
    %c1024_138 = arith.constant 1024 : index
    %221 = vector.load %arg9[%c1_136, %c0_137, %c1024_138] : memref<2x1x2048xf32, #tpu.memory_space<vmem>>, vector<1x1x512xf32>
    %222 = vector.shape_cast %221 : vector<1x1x512xf32> to vector<1x512xf32>
    %223 = vector.broadcast %222 : vector<1x512xf32> to vector<8x512xf32>
    %224 = arith.addf %220, %223 : vector<8x512xf32>
    %cst_139 = arith.constant 0.000000e+00 : f32
    %225 = vector.broadcast %cst_139 : f32 to vector<8x512xf32>
    %226 = arith.maximumf %224, %225 : vector<8x512xf32>
    %227 = arith.truncf %226 : vector<8x512xf32> to vector<8x512xbf16>
    %c1_140 = arith.constant 1 : index
    %c1024_141 = arith.constant 1024 : index
    %c0_142 = arith.constant 0 : index
    %228 = vector.load %arg10[%c1_140, %c1024_141, %c0_142] : memref<2x2048x64xbf16, #tpu.memory_space<vmem>>, vector<1x512x64xbf16>
    %229 = vector.shape_cast %228 : vector<1x512x64xbf16> to vector<512x64xbf16>
    %cst_143 = arith.constant dense<0.000000e+00> : vector<8x64xf32>
    %230 = tpu.matmul %227, %229, %cst_143 {dimension_numbers = #tpu.dot_dimension_numbers<[1], [0], [0], [1], [0, 0, 1, 1], [], []>} : vector<8x512xbf16>, vector<512x64xbf16>, vector<8x64xf32> -> vector<8x64xf32>
    %231 = arith.addf %217, %230 : vector<8x64xf32>
    %c1_144 = arith.constant 1 : index
    %c0_145 = arith.constant 0 : index
    %c1536_146 = arith.constant 1536 : index
    %232 = vector.load %arg8[%c1_144, %c0_145, %c1536_146] : memref<2x64x2048xbf16, #tpu.memory_space<vmem>>, vector<1x64x512xbf16>
    %233 = vector.shape_cast %232 : vector<1x64x512xbf16> to vector<64x512xbf16>
    %cst_147 = arith.constant dense<0.000000e+00> : vector<8x512xf32>
    %234 = tpu.matmul %188, %233, %cst_147 {dimension_numbers = #tpu.dot_dimension_numbers<[1], [0], [0], [1], [0, 0, 1, 1], [], []>} : vector<8x64xbf16>, vector<64x512xbf16>, vector<8x512xf32> -> vector<8x512xf32>
    %c1_148 = arith.constant 1 : index
    %c0_149 = arith.constant 0 : index
    %c1536_150 = arith.constant 1536 : index
    %235 = vector.load %arg9[%c1_148, %c0_149, %c1536_150] : memref<2x1x2048xf32, #tpu.memory_space<vmem>>, vector<1x1x512xf32>
    %236 = vector.shape_cast %235 : vector<1x1x512xf32> to vector<1x512xf32>
    %237 = vector.broadcast %236 : vector<1x512xf32> to vector<8x512xf32>
    %238 = arith.addf %234, %237 : vector<8x512xf32>
    %cst_151 = arith.constant 0.000000e+00 : f32
    %239 = vector.broadcast %cst_151 : f32 to vector<8x512xf32>
    %240 = arith.maximumf %238, %239 : vector<8x512xf32>
    %241 = arith.truncf %240 : vector<8x512xf32> to vector<8x512xbf16>
    %c1_152 = arith.constant 1 : index
    %c1536_153 = arith.constant 1536 : index
    %c0_154 = arith.constant 0 : index
    %242 = vector.load %arg10[%c1_152, %c1536_153, %c0_154] : memref<2x2048x64xbf16, #tpu.memory_space<vmem>>, vector<1x512x64xbf16>
    %243 = vector.shape_cast %242 : vector<1x512x64xbf16> to vector<512x64xbf16>
    %cst_155 = arith.constant dense<0.000000e+00> : vector<8x64xf32>
    %244 = tpu.matmul %241, %243, %cst_155 {dimension_numbers = #tpu.dot_dimension_numbers<[1], [0], [0], [1], [0, 0, 1, 1], [], []>} : vector<8x512xbf16>, vector<512x64xbf16>, vector<8x64xf32> -> vector<8x64xf32>
    %245 = arith.addf %231, %244 : vector<8x64xf32>
    %246 = arith.addf %187, %245 : vector<8x64xf32>
    %c1_156 = arith.constant 1 : index
    %c0_157 = arith.constant 0 : index
    %c0_158 = arith.constant 0 : index
    %247 = vector.load %arg11[%c1_156, %c0_157, %c0_158] : memref<2x1x64xf32, #tpu.memory_space<vmem>>, vector<1x1x64xf32>
    %248 = vector.shape_cast %247 : vector<1x1x64xf32> to vector<1x64xf32>
    %249 = vector.broadcast %248 : vector<1x64xf32> to vector<8x64xf32>
    %250 = arith.addf %246, %249 : vector<8x64xf32>
    %c1_159 = arith.constant 1 : index
    %c0_160 = arith.constant 0 : index
    %c0_161 = arith.constant 0 : index
    %251 = vector.load %arg12[%c1_159, %c0_160, %c0_161] : memref<2x1x64xf32, #tpu.memory_space<vmem>>, vector<1x1x64xf32>
    %252 = vector.shape_cast %251 : vector<1x1x64xf32> to vector<1x64xf32>
    %c1_162 = arith.constant 1 : index
    %c0_163 = arith.constant 0 : index
    %c0_164 = arith.constant 0 : index
    %253 = vector.load %arg13[%c1_162, %c0_163, %c0_164] : memref<2x1x64xf32, #tpu.memory_space<vmem>>, vector<1x1x64xf32>
    %254 = vector.shape_cast %253 : vector<1x1x64xf32> to vector<1x64xf32>
    %cst_165 = arith.constant dense<0.000000e+00> : vector<8xf32>
    %255 = vector.multi_reduction <add>, %250, %cst_165 [1] : vector<8x64xf32> to vector<8xf32>
    %256 = vector.shape_cast %255 : vector<8xf32> to vector<8x1xf32>
    %cst_166 = arith.constant 6.400000e+01 : f32
    %257 = vector.broadcast %cst_166 : f32 to vector<8x1xf32>
    %258 = arith.divf %256, %257 : vector<8x1xf32>
    %259 = vector.broadcast %258 : vector<8x1xf32> to vector<8x64xf32>
    %260 = arith.subf %250, %259 : vector<8x64xf32>
    %261 = arith.mulf %260, %260 : vector<8x64xf32>
    %cst_167 = arith.constant dense<0.000000e+00> : vector<8xf32>
    %262 = vector.multi_reduction <add>, %261, %cst_167 [1] : vector<8x64xf32> to vector<8xf32>
    %263 = vector.shape_cast %262 : vector<8xf32> to vector<8x1xf32>
    %cst_168 = arith.constant 6.400000e+01 : f32
    %264 = vector.broadcast %cst_168 : f32 to vector<8x1xf32>
    %265 = arith.divf %263, %264 : vector<8x1xf32>
    %266 = vector.broadcast %258 : vector<8x1xf32> to vector<8x64xf32>
    %267 = arith.subf %250, %266 : vector<8x64xf32>
    %cst_169 = arith.constant 9.99999974E-6 : f32
    %268 = vector.broadcast %cst_169 : f32 to vector<8x1xf32>
    %269 = arith.addf %265, %268 : vector<8x1xf32>
    %270 = math.rsqrt %269 : vector<8x1xf32>
    %271 = vector.broadcast %270 : vector<8x1xf32> to vector<8x64xf32>
    %272 = arith.mulf %267, %271 : vector<8x64xf32>
    %273 = vector.broadcast %252 : vector<1x64xf32> to vector<8x64xf32>
    %274 = arith.mulf %272, %273 : vector<8x64xf32>
    %275 = vector.broadcast %254 : vector<1x64xf32> to vector<8x64xf32>
    %276 = arith.addf %274, %275 : vector<8x64xf32>
    %c0_170 = arith.constant 0 : index
    %c0_171 = arith.constant 0 : index
    %277 = vector.load %arg14[%c0_170, %c0_171] : memref<8x64xf32, #tpu.memory_space<vmem>>, vector<8x64xf32>
    tpu.vector_store %arg14[%c0_170, %c0_171], %276 {strides = array<i32>} : memref<8x64xf32, #tpu.memory_space<vmem>>, vector<8x64xf32>,
    return
  }
  func.func @transform_0(%arg0: i32) -> (i32, i32) {
    %c0_i32 = arith.constant 0 : i32
    %c0_i32_0 = arith.constant 0 : i32
    return %arg0, %c0_i32 : i32, i32
  }
  func.func @transform_1(%arg0: i32) -> (i32, i32) {
    %c0_i32 = arith.constant 0 : i32
    %c0_i32_0 = arith.constant 0 : i32
    %c0_i32_1 = arith.constant 0 : i32
    return %c0_i32, %c0_i32_0 : i32, i32
  }
  func.func @transform_2(%arg0: i32) -> (i32, i32) {
    %c0_i32 = arith.constant 0 : i32
    %c0_i32_0 = arith.constant 0 : i32
    %c0_i32_1 = arith.constant 0 : i32
    return %c0_i32, %c0_i32_0 : i32, i32
  }
  func.func @transform_3(%arg0: i32) -> (i32, i32, i32) {
    %c0_i32 = arith.constant 0 : i32
    %c0_i32_0 = arith.constant 0 : i32
    %c0_i32_1 = arith.constant 0 : i32
    %c0_i32_2 = arith.constant 0 : i32
    return %c0_i32, %c0_i32_0, %c0_i32_1 : i32, i32, i32
  }
  func.func @transform_4(%arg0: i32) -> (i32, i32, i32) {
    %c0_i32 = arith.constant 0 : i32
    %c0_i32_0 = arith.constant 0 : i32
    %c0_i32_1 = arith.constant 0 : i32
    %c0_i32_2 = arith.constant 0 : i32
    return %c0_i32, %c0_i32_0, %c0_i32_1 : i32, i32, i32
  }
  func.func @transform_5(%arg0: i32) -> (i32, i32, i32) {
    %c0_i32 = arith.constant 0 : i32
    %c0_i32_0 = arith.constant 0 : i32
    %c0_i32_1 = arith.constant 0 : i32
    %c0_i32_2 = arith.constant 0 : i32
    return %c0_i32, %c0_i32_0, %c0_i32_1 : i32, i32, i32
  }
  func.func @transform_6(%arg0: i32) -> (i32, i32, i32) {
    %c0_i32 = arith.constant 0 : i32
    %c0_i32_0 = arith.constant 0 : i32
    %c0_i32_1 = arith.constant 0 : i32
    %c0_i32_2 = arith.constant 0 : i32
    return %c0_i32, %c0_i32_0, %c0_i32_1 : i32, i32, i32
  }
  func.func @transform_7(%arg0: i32) -> (i32, i32, i32) {
    %c0_i32 = arith.constant 0 : i32
    %c0_i32_0 = arith.constant 0 : i32
    %c0_i32_1 = arith.constant 0 : i32
    %c0_i32_2 = arith.constant 0 : i32
    return %c0_i32, %c0_i32_0, %c0_i32_1 : i32, i32, i32
  }
  func.func @transform_8(%arg0: i32) -> (i32, i32, i32) {
    %c0_i32 = arith.constant 0 : i32
    %c0_i32_0 = arith.constant 0 : i32
    %c0_i32_1 = arith.constant 0 : i32
    %c0_i32_2 = arith.constant 0 : i32
    return %c0_i32, %c0_i32_0, %c0_i32_1 : i32, i32, i32
  }
  func.func @transform_9(%arg0: i32) -> (i32, i32, i32) {
    %c0_i32 = arith.constant 0 : i32
    %c0_i32_0 = arith.constant 0 : i32
    %c0_i32_1 = arith.constant 0 : i32
    %c0_i32_2 = arith.constant 0 : i32
    return %c0_i32, %c0_i32_0, %c0_i32_1 : i32, i32, i32
  }
  func.func @transform_10(%arg0: i32) -> (i32, i32, i32) {
    %c0_i32 = arith.constant 0 : i32
    %c0_i32_0 = arith.constant 0 : i32
    %c0_i32_1 = arith.constant 0 : i32
    %c0_i32_2 = arith.constant 0 : i32
    return %c0_i32, %c0_i32_0, %c0_i32_1 : i32, i32, i32
  }
  func.func @transform_11(%arg0: i32) -> (i32, i32, i32) {
    %c0_i32 = arith.constant 0 : i32
    %c0_i32_0 = arith.constant 0 : i32
    %c0_i32_1 = arith.constant 0 : i32
    %c0_i32_2 = arith.constant 0 : i32
    return %c0_i32, %c0_i32_0, %c0_i32_1 : i32, i32, i32
  }
  func.func @transform_12(%arg0: i32) -> (i32, i32, i32) {
    %c0_i32 = arith.constant 0 : i32
    %c0_i32_0 = arith.constant 0 : i32
    %c0_i32_1 = arith.constant 0 : i32
    %c0_i32_2 = arith.constant 0 : i32
    return %c0_i32, %c0_i32_0, %c0_i32_1 : i32, i32, i32
  }
  func.func @transform_13(%arg0: i32) -> (i32, i32) {
    %c0_i32 = arith.constant 0 : i32
    %c0_i32_0 = arith.constant 0 : i32
    return %arg0, %c0_i32 : i32, i32
  }
}

</mosaic_0001>

<llo_original>
// kernel: tpu_custom_call.1
$region0: #{tpu_custom_call.1}
  #allocation0 [shape = 'u32[]', space=smem, size = 0x4, offset = 0x4, fixed_abs, tag = 'smem constant byte address 0x4 - core index']
  #allocation1 [shape = 'u32[144,128]{1,0:T(1,128)}', space=vmem, size = 0x12000, scoped, tag = 'internal scratch']
  %s0 = inlined_call_operand.vmem [shape: bf16[16,1024], index: 0, kind: input, shape index: {}]
  %s1 = inlined_call_operand.vmem [shape: bf16[1024,64], index: 1, kind: input, shape index: {}]
  %s2 = inlined_call_operand.vmem [shape: f32[1,64], index: 2, kind: input, shape index: {}]
  %s3 = inlined_call_operand.vmem [shape: bf16[2,64,64], index: 3, kind: input, shape index: {}]
  %s4 = inlined_call_operand.vmem [shape: f32[2,1,64], index: 4, kind: input, shape index: {}]
  %s5 = inlined_call_operand.vmem [shape: f32[2,1,64], index: 5, kind: input, shape index: {}]
  %s6 = inlined_call_operand.vmem [shape: f32[2,1,64], index: 6, kind: input, shape index: {}]
  %s7 = inlined_call_operand.vmem [shape: bf16[2,64,2048], index: 7, kind: input, shape index: {}]
  %s8 = inlined_call_operand.vmem [shape: f32[2,1,2048], index: 8, kind: input, shape index: {}]
  %s9 = inlined_call_operand.vmem [shape: bf16[2,2048,64], index: 9, kind: input, shape index: {}]
  %s10 = inlined_call_operand.vmem [shape: f32[2,1,64], index: 10, kind: input, shape index: {}]
  %s11 = inlined_call_operand.vmem [shape: f32[2,1,64], index: 11, kind: input, shape index: {}]
  %s12 = inlined_call_operand.vmem [shape: f32[2,1,64], index: 12, kind: input, shape index: {}]
  %s13 = inlined_call_operand.hbm [shape: f32[16,64], index: 13, kind: output, shape index: {}]
  %s14 = sld [smem:[#allocation0]]
  $region85: #{tpu_custom_call.1} parent=0
    _
  %s16 = ssub.s32 1, %s14
  %s17 = scalar_select 0, %s16, %s14
  $region1: #{tpu_custom_call.1} parent=0
    #allocation2 [shape = 'u8[8192]{0}', space=vmem, size = 0x2000, scoped, tag = 'output window, operand 0']
    #allocation3 [shape = 's32[2]{0}', space=sflag, size = 0x8, scoped, tag = 'scoped memory for tpu_custom_call.1']
    %18 = vsyncpa [#allocation3], 0
    %s19 = scalar_lea.sflag [#allocation3], 1
    %20 = vsyncpa %s19, 0
    loop: start=0, step=1, limit=4
    $region2: #{tpu_custom_call.1} parent=1 // loop_pre_header
      _
    $region3: #{tpu_custom_call.1} parent=1 // loop_header
      %s22 = sphi 0, %s26
      %p23 = scmp.ge.s32.totalorder %s22, 4
      %s32 = sphi 0, %s34
      %s35 = sphi 0, %s32
      %s36 = sphi 0, %s35
      %s52 = sphi 0, %s36
      %s56 = sphi 0, %s56
      %s58 = sphi 0, %s56
      %s59 = sphi 0, %s58
      %s73 = sphi 0, %s59
      %s77 = sphi 0, %s77
      %s79 = sphi 0, %s77
      %s80 = sphi 0, %s79
      %s94 = sphi 0, %s80
      %s98 = sphi 0, %s98
      %s100 = sphi 0, %s98
      %s101 = sphi 0, %s100
      %s115 = sphi 0, %s101
      %s119 = sphi 0, %s119
      %s121 = sphi 0, %s119
      %s122 = sphi 0, %s121
      %s136 = sphi 0, %s122
      %s140 = sphi 0, %s140
      %s142 = sphi 0, %s140
      %s143 = sphi 0, %s142
      %s157 = sphi 0, %s143
      %s161 = sphi 0, %s161
      %s163 = sphi 0, %s161
      %s164 = sphi 0, %s163
      %s178 = sphi 0, %s164
      %s182 = sphi 0, %s182
      %s184 = sphi 0, %s182
      %s185 = sphi 0, %s184
      %s199 = sphi 0, %s185
      %s203 = sphi 0, %s203
      %s205 = sphi 0, %s203
      %s206 = sphi 0, %s205
      %s220 = sphi 0, %s206
      %s224 = sphi 0, %s224
      %s226 = sphi 0, %s224
      %s227 = sphi 0, %s226
      %s241 = sphi 0, %s227
      %s245 = sphi 0, %s245
      %s247 = sphi 0, %s245
      %s248 = sphi 0, %s247
      %s262 = sphi 0, %s248
      %s266 = sphi 0, %s266
      %s268 = sphi 0, %s266
      %s269 = sphi 0, %s268
      %s283 = sphi 0, %s269
      %s287 = sphi 0, %s287
      %s289 = sphi 0, %s287
      %s290 = sphi 0, %s289
      %s304 = sphi 0, %s290
      %s310 = sphi 0, %s312
      %s313 = sphi 0, %s310
      %s314 = sphi 0, %s313
      %s330 = sphi 0, %s314
    $region4: #{tpu_custom_call.1} parent=1 // loop_header_branch
      %25 = sbr.rel (%p23) target = $region8
    $region5: #{tpu_custom_call.1} parent=1 // loop_body
      %s27 = ssub.s32 %s22, 1
      %s28 = ssub.s32 %s22, 2
      %s29 = sadd.s32 %s22, 1
      %s30 = ssub.s32 %s22, %s29
      %p31 = scmp.eq.s32.totalorder %s30, 0
      %s33 = sadd.s32 %s32, 1
      %s34 = scalar_select %p31, %s32, %s33
      %p37 = pneg %p31
      %p38 = scmp.eq.s32.totalorder %s22, 1
      %p39 = por %p37, %p38
      %p40 = scmp.ne.s32.totalorder %s32, %s35
      %p41 = scmp.eq.s32.totalorder %s22, 0
      %p42 = por %p40, %p41
      %p43 = scmp.ne.s32.totalorder %s32, %s35
      %p44 = scmp.eq.s32.totalorder %s27, 1
      %p45 = por %p43, %p44
      %p46 = scmp.ne.s32.totalorder %s35, %s36
      %p47 = scmp.eq.s32.totalorder %s27, 0
      %p48 = por %p46, %p47
      %p49 = scmp.ne.s32.totalorder %s35, %s36
      %p50 = scmp.eq.s32.totalorder %s28, 1
      %p51 = por %p49, %p50
      %p53 = scmp.ne.s32.totalorder %s36, %s52
      %p54 = scmp.eq.s32.totalorder %s28, 0
      %p55 = por %p53, %p54
      %s57 = sadd.s32 %s56, 1
      %p60 = scmp.eq.s32.totalorder %s22, 1
      %p61 = scmp.ne.s32.totalorder %s56, %s58
      %p62 = scmp.eq.s32.totalorder %s22, 0
      %p63 = por %p61, %p62
      %p64 = scmp.ne.s32.totalorder %s56, %s58
      %p65 = scmp.eq.s32.totalorder %s27, 1
      %p66 = por %p64, %p65
      %p67 = scmp.ne.s32.totalorder %s58, %s59
      %p68 = scmp.eq.s32.totalorder %s27, 0
      %p69 = por %p67, %p68
      %p70 = scmp.ne.s32.totalorder %s58, %s59
      %p71 = scmp.eq.s32.totalorder %s28, 1
      %p72 = por %p70, %p71
      %p74 = scmp.ne.s32.totalorder %s59, %s73
      %p75 = scmp.eq.s32.totalorder %s28, 0
      %p76 = por %p74, %p75
      %s78 = sadd.s32 %s77, 1
      %p81 = scmp.eq.s32.totalorder %s22, 1
      %p82 = scmp.ne.s32.totalorder %s77, %s79
      %p83 = scmp.eq.s32.totalorder %s22, 0
      %p84 = por %p82, %p83
      %p85 = scmp.ne.s32.totalorder %s77, %s79
      %p86 = scmp.eq.s32.totalorder %s27, 1
      %p87 = por %p85, %p86
      %p88 = scmp.ne.s32.totalorder %s79, %s80
      %p89 = scmp.eq.s32.totalorder %s27, 0
      %p90 = por %p88, %p89
      %p91 = scmp.ne.s32.totalorder %s79, %s80
      %p92 = scmp.eq.s32.totalorder %s28, 1
      %p93 = por %p91, %p92
      %p95 = scmp.ne.s32.totalorder %s80, %s94
      %p96 = scmp.eq.s32.totalorder %s28, 0
      %p97 = por %p95, %p96
      %s99 = sadd.s32 %s98, 1
      %p102 = scmp.eq.s32.totalorder %s22, 1
      %p103 = scmp.ne.s32.totalorder %s98, %s100
      %p104 = scmp.eq.s32.totalorder %s22, 0
      %p105 = por %p103, %p104
      %p106 = scmp.ne.s32.totalorder %s98, %s100
      %p107 = scmp.eq.s32.totalorder %s27, 1
      %p108 = por %p106, %p107
      %p109 = scmp.ne.s32.totalorder %s100, %s101
      %p110 = scmp.eq.s32.totalorder %s27, 0
      %p111 = por %p109, %p110
      %p112 = scmp.ne.s32.totalorder %s100, %s101
      %p113 = scmp.eq.s32.totalorder %s28, 1
      %p114 = por %p112, %p113
      %p116 = scmp.ne.s32.totalorder %s101, %s115
      %p117 = scmp.eq.s32.totalorder %s28, 0
      %p118 = por %p116, %p117
      %s120 = sadd.s32 %s119, 1
      %p123 = scmp.eq.s32.totalorder %s22, 1
      %p124 = scmp.ne.s32.totalorder %s119, %s121
      %p125 = scmp.eq.s32.totalorder %s22, 0
      %p126 = por %p124, %p125
      %p127 = scmp.ne.s32.totalorder %s119, %s121
      %p128 = scmp.eq.s32.totalorder %s27, 1
      %p129 = por %p127, %p128
      %p130 = scmp.ne.s32.totalorder %s121, %s122
      %p131 = scmp.eq.s32.totalorder %s27, 0
      %p132 = por %p130, %p131
      %p133 = scmp.ne.s32.totalorder %s121, %s122
      %p134 = scmp.eq.s32.totalorder %s28, 1
      %p135 = por %p133, %p134
      %p137 = scmp.ne.s32.totalorder %s122, %s136
      %p138 = scmp.eq.s32.totalorder %s28, 0
      %p139 = por %p137, %p138
      %s141 = sadd.s32 %s140, 1
      %p144 = scmp.eq.s32.totalorder %s22, 1
      %p145 = scmp.ne.s32.totalorder %s140, %s142
      %p146 = scmp.eq.s32.totalorder %s22, 0
      %p147 = por %p145, %p146
      %p148 = scmp.ne.s32.totalorder %s140, %s142
      %p149 = scmp.eq.s32.totalorder %s27, 1
      %p150 = por %p148, %p149
      %p151 = scmp.ne.s32.totalorder %s142, %s143
      %p152 = scmp.eq.s32.totalorder %s27, 0
      %p153 = por %p151, %p152
      %p154 = scmp.ne.s32.totalorder %s142, %s143
      %p155 = scmp.eq.s32.totalorder %s28, 1
      %p156 = por %p154, %p155
      %p158 = scmp.ne.s32.totalorder %s143, %s157
      %p159 = scmp.eq.s32.totalorder %s28, 0
      %p160 = por %p158, %p159
      %s162 = sadd.s32 %s161, 1
      %p165 = scmp.eq.s32.totalorder %s22, 1
      %p166 = scmp.ne.s32.totalorder %s161, %s163
      %p167 = scmp.eq.s32.totalorder %s22, 0
      %p168 = por %p166, %p167
      %p169 = scmp.ne.s32.totalorder %s161, %s163
      %p170 = scmp.eq.s32.totalorder %s27, 1
      %p171 = por %p169, %p170
      %p172 = scmp.ne.s32.totalorder %s163, %s164
      %p173 = scmp.eq.s32.totalorder %s27, 0
      %p174 = por %p172, %p173
      %p175 = scmp.ne.s32.totalorder %s163, %s164
      %p176 = scmp.eq.s32.totalorder %s28, 1
      %p177 = por %p175, %p176
      %p179 = scmp.ne.s32.totalorder %s164, %s178
      %p180 = scmp.eq.s32.totalorder %s28, 0
      %p181 = por %p179, %p180
      %s183 = sadd.s32 %s182, 1
      %p186 = scmp.eq.s32.totalorder %s22, 1
      %p187 = scmp.ne.s32.totalorder %s182, %s184
      %p188 = scmp.eq.s32.totalorder %s22, 0
      %p189 = por %p187, %p188
      %p190 = scmp.ne.s32.totalorder %s182, %s184
      %p191 = scmp.eq.s32.totalorder %s27, 1
      %p192 = por %p190, %p191
      %p193 = scmp.ne.s32.totalorder %s184, %s185
      %p194 = scmp.eq.s32.totalorder %s27, 0
      %p195 = por %p193, %p194
      %p196 = scmp.ne.s32.totalorder %s184, %s185
      %p197 = scmp.eq.s32.totalorder %s28, 1
      %p198 = por %p196, %p197
      %p200 = scmp.ne.s32.totalorder %s185, %s199
      %p201 = scmp.eq.s32.totalorder %s28, 0
      %p202 = por %p200, %p201
      %s204 = sadd.s32 %s203, 1
      %p207 = scmp.eq.s32.totalorder %s22, 1
      %p208 = scmp.ne.s32.totalorder %s203, %s205
      %p209 = scmp.eq.s32.totalorder %s22, 0
      %p210 = por %p208, %p209
      %p211 = scmp.ne.s32.totalorder %s203, %s205
      %p212 = scmp.eq.s32.totalorder %s27, 1
      %p213 = por %p211, %p212
      %p214 = scmp.ne.s32.totalorder %s205, %s206
      %p215 = scmp.eq.s32.totalorder %s27, 0
      %p216 = por %p214, %p215
      %p217 = scmp.ne.s32.totalorder %s205, %s206
      %p218 = scmp.eq.s32.totalorder %s28, 1
      %p219 = por %p217, %p218
      %p221 = scmp.ne.s32.totalorder %s206, %s220
      %p222 = scmp.eq.s32.totalorder %s28, 0
      %p223 = por %p221, %p222
      %s225 = sadd.s32 %s224, 1
      %p228 = scmp.eq.s32.totalorder %s22, 1
      %p229 = scmp.ne.s32.totalorder %s224, %s226
      %p230 = scmp.eq.s32.totalorder %s22, 0
      %p231 = por %p229, %p230
      %p232 = scmp.ne.s32.totalorder %s224, %s226
      %p233 = scmp.eq.s32.totalorder %s27, 1
      %p234 = por %p232, %p233
      %p235 = scmp.ne.s32.totalorder %s226, %s227
      %p236 = scmp.eq.s32.totalorder %s27, 0
      %p237 = por %p235, %p236
      %p238 = scmp.ne.s32.totalorder %s226, %s227
      %p239 = scmp.eq.s32.totalorder %s28, 1
      %p240 = por %p238, %p239
      %p242 = scmp.ne.s32.totalorder %s227, %s241
      %p243 = scmp.eq.s32.totalorder %s28, 0
      %p244 = por %p242, %p243
      %s246 = sadd.s32 %s245, 1
      %p249 = scmp.eq.s32.totalorder %s22, 1
      %p250 = scmp.ne.s32.totalorder %s245, %s247
      %p251 = scmp.eq.s32.totalorder %s22, 0
      %p252 = por %p250, %p251
      %p253 = scmp.ne.s32.totalorder %s245, %s247
      %p254 = scmp.eq.s32.totalorder %s27, 1
      %p255 = por %p253, %p254
      %p256 = scmp.ne.s32.totalorder %s247, %s248
      %p257 = scmp.eq.s32.totalorder %s27, 0
      %p258 = por %p256, %p257
      %p259 = scmp.ne.s32.totalorder %s247, %s248
      %p260 = scmp.eq.s32.totalorder %s28, 1
      %p261 = por %p259, %p260
      %p263 = scmp.ne.s32.totalorder %s248, %s262
      %p264 = scmp.eq.s32.totalorder %s28, 0
      %p265 = por %p263, %p264
      %s267 = sadd.s32 %s266, 1
      %p270 = scmp.eq.s32.totalorder %s22, 1
      %p271 = scmp.ne.s32.totalorder %s266, %s268
      %p272 = scmp.eq.s32.totalorder %s22, 0
      %p273 = por %p271, %p272
      %p274 = scmp.ne.s32.totalorder %s266, %s268
      %p275 = scmp.eq.s32.totalorder %s27, 1
      %p276 = por %p274, %p275
      %p277 = scmp.ne.s32.totalorder %s268, %s269
      %p278 = scmp.eq.s32.totalorder %s27, 0
      %p279 = por %p277, %p278
      %p280 = scmp.ne.s32.totalorder %s268, %s269
      %p281 = scmp.eq.s32.totalorder %s28, 1
      %p282 = por %p280, %p281
      %p284 = scmp.ne.s32.totalorder %s269, %s283
      %p285 = scmp.eq.s32.totalorder %s28, 0
      %p286 = por %p284, %p285
      %s288 = sadd.s32 %s287, 1
      %p291 = scmp.eq.s32.totalorder %s22, 1
      %p292 = scmp.ne.s32.totalorder %s287, %s289
      %p293 = scmp.eq.s32.totalorder %s22, 0
      %p294 = por %p292, %p293
      %p295 = scmp.ne.s32.totalorder %s287, %s289
      %p296 = scmp.eq.s32.totalorder %s27, 1
      %p297 = por %p295, %p296
      %p298 = scmp.ne.s32.totalorder %s289, %s290
      %p299 = scmp.eq.s32.totalorder %s27, 0
      %p300 = por %p298, %p299
      %p301 = scmp.ne.s32.totalorder %s289, %s290
      %p302 = scmp.eq.s32.totalorder %s28, 1
      %p303 = por %p301, %p302
      %p305 = scmp.ne.s32.totalorder %s290, %s304
      %p306 = scmp.eq.s32.totalorder %s28, 0
      %p307 = por %p305, %p306
      %s308 = ssub.s32 %s22, %s29
      %p309 = scmp.eq.s32.totalorder %s308, 0
      %s311 = sadd.s32 %s310, 1
      %s312 = scalar_select %p309, %s310, %s311
      %p315 = pneg %p309
      %p316 = scmp.eq.s32.totalorder %s22, 1
      %p317 = por %p315, %p316
      %p318 = scmp.ne.s32.totalorder %s310, %s313
      %p319 = scmp.eq.s32.totalorder %s22, 0
      %p320 = por %p318, %p319
      %p321 = scmp.ne.s32.totalorder %s310, %s313
      %p322 = scmp.eq.s32.totalorder %s27, 1
      %p323 = por %p321, %p322
      %p324 = scmp.ne.s32.totalorder %s313, %s314
      %p325 = scmp.eq.s32.totalorder %s27, 0
      %p326 = por %p324, %p325
      %p327 = scmp.ne.s32.totalorder %s313, %s314
      %p328 = scmp.eq.s32.totalorder %s28, 1
      %p329 = por %p327, %p328
      %p331 = scmp.ne.s32.totalorder %s314, %s330
      %p332 = scmp.eq.s32.totalorder %s28, 0
      %p333 = por %p331, %p332
      %p334 = scmp.le.s32.totalorder 1, %s22
      %p335 = scmp.lt.s32.totalorder %s22, 3
      %p336 = pnand %p334, %p335
      %p337 = pneg %p336
      // Predicated region
      $region9: #{tpu_custom_call.1} parent=5 // pred_check
        _
      $region10: #{tpu_custom_call.1} parent=5 // pred_check_branch
        %339 = sbr.rel (%p336) target = $region12
      $region11: #{tpu_custom_call.1} parent=5 // pred_region
        %s340 = ssub.s32 %s22, 1
        // Predicated region
        $region13: #{tpu_custom_call.1} parent=11 // pred_check
          %p341 = pneg %p69
        $region14: #{tpu_custom_call.1} parent=11 // pred_check_branch
          %343 = sbr.rel (%p341) target = $region16
        $region15: #{tpu_custom_call.1} parent=11 // pred_region
          _
        $region16: #{tpu_custom_call.1} parent=11 // pred_fallthru
          _
        // Predicated region
        $region17: #{tpu_custom_call.1} parent=11 // pred_check
          %p344 = pneg %p90
        $region18: #{tpu_custom_call.1} parent=11 // pred_check_branch
          %346 = sbr.rel (%p344) target = $region20
        $region19: #{tpu_custom_call.1} parent=11 // pred_region
          _
        $region20: #{tpu_custom_call.1} parent=11 // pred_fallthru
          _
        // Predicated region
        $region21: #{tpu_custom_call.1} parent=11 // pred_check
          %p347 = pneg %p111
        $region22: #{tpu_custom_call.1} parent=11 // pred_check_branch
          %349 = sbr.rel (%p347) target = $region24
        $region23: #{tpu_custom_call.1} parent=11 // pred_region
          _
        $region24: #{tpu_custom_call.1} parent=11 // pred_fallthru
          _
        // Predicated region
        $region25: #{tpu_custom_call.1} parent=11 // pred_check
          %p350 = pneg %p132
        $region26: #{tpu_custom_call.1} parent=11 // pred_check_branch
          %352 = sbr.rel (%p350) target = $region28
        $region27: #{tpu_custom_call.1} parent=11 // pred_region
          _
        $region28: #{tpu_custom_call.1} parent=11 // pred_fallthru
          _
        // Predicated region
        $region29: #{tpu_custom_call.1} parent=11 // pred_check
          %p353 = pneg %p153
        $region30: #{tpu_custom_call.1} parent=11 // pred_check_branch
          %355 = sbr.rel (%p353) target = $region32
        $region31: #{tpu_custom_call.1} parent=11 // pred_region
          _
        $region32: #{tpu_custom_call.1} parent=11 // pred_fallthru
          _
        // Predicated region
        $region33: #{tpu_custom_call.1} parent=11 // pred_check
          %p356 = pneg %p174
        $region34: #{tpu_custom_call.1} parent=11 // pred_check_branch
          %358 = sbr.rel (%p356) target = $region36
        $region35: #{tpu_custom_call.1} parent=11 // pred_region
          _
        $region36: #{tpu_custom_call.1} parent=11 // pred_fallthru
          _
        // Predicated region
        $region37: #{tpu_custom_call.1} parent=11 // pred_check
          %p359 = pneg %p195
        $region38: #{tpu_custom_call.1} parent=11 // pred_check_branch
          %361 = sbr.rel (%p359) target = $region40
        $region39: #{tpu_custom_call.1} parent=11 // pred_region
          _
        $region40: #{tpu_custom_call.1} parent=11 // pred_fallthru
          _
        // Predicated region
        $region41: #{tpu_custom_call.1} parent=11 // pred_check
          %p362 = pneg %p216
        $region42: #{tpu_custom_call.1} parent=11 // pred_check_branch
          %364 = sbr.rel (%p362) target = $region44
        $region43: #{tpu_custom_call.1} parent=11 // pred_region
          _
        $region44: #{tpu_custom_call.1} parent=11 // pred_fallthru
          _
        // Predicated region
        $region45: #{tpu_custom_call.1} parent=11 // pred_check
          %p365 = pneg %p237
        $region46: #{tpu_custom_call.1} parent=11 // pred_check_branch
          %367 = sbr.rel (%p365) target = $region48
        $region47: #{tpu_custom_call.1} parent=11 // pred_region
          _
        $region48: #{tpu_custom_call.1} parent=11 // pred_fallthru
          _
        // Predicated region
        $region49: #{tpu_custom_call.1} parent=11 // pred_check
          %p368 = pneg %p258
        $region50: #{tpu_custom_call.1} parent=11 // pred_check_branch
          %370 = sbr.rel (%p368) target = $region52
        $region51: #{tpu_custom_call.1} parent=11 // pred_region
          _
        $region52: #{tpu_custom_call.1} parent=11 // pred_fallthru
          _
        // Predicated region
        $region53: #{tpu_custom_call.1} parent=11 // pred_check
          %p371 = pneg %p279
        $region54: #{tpu_custom_call.1} parent=11 // pred_check_branch
          %373 = sbr.rel (%p371) target = $region56
        $region55: #{tpu_custom_call.1} parent=11 // pred_region
          _
        $region56: #{tpu_custom_call.1} parent=11 // pred_fallthru
          _
        // Predicated region
        $region57: #{tpu_custom_call.1} parent=11 // pred_check
          %p374 = pneg %p300
        $region58: #{tpu_custom_call.1} parent=11 // pred_check_branch
          %376 = sbr.rel (%p374) target = $region60
        $region59: #{tpu_custom_call.1} parent=11 // pred_region
          _
        $region60: #{tpu_custom_call.1} parent=11 // pred_fallthru
          _
      $region12: #{tpu_custom_call.1} parent=5 // pred_fallthru
        _
      %p377 = scmp.lt.s32.totalorder %s22, 2
      // Predicated region
      $region61: #{tpu_custom_call.1} parent=5 // pred_check
        %p378 = pneg %p377
      $region62: #{tpu_custom_call.1} parent=5 // pred_check_branch
        %380 = sbr.rel (%p378) target = $region64
      $region63: #{tpu_custom_call.1} parent=5 // pred_region
        // Predicated region
        $region65: #{tpu_custom_call.1} parent=63 // pred_check
          %p381 = pneg %p42
        $region66: #{tpu_custom_call.1} parent=63 // pred_check_branch
          %383 = sbr.rel (%p381) target = $region68
        $region67: #{tpu_custom_call.1} parent=63 // pred_region
          %p384 = scmp.lt.s32.totalorder %s22, 1
          %s385 = scalar_select %p384, %s22, 1
          %s386 = smul.addr %s385, 8
          %s387 = smul.addr %s386, 4
          %s388 = scalar_lea.vmem %s0, %s387
        $region68: #{tpu_custom_call.1} parent=63 // pred_fallthru
          _
      $region64: #{tpu_custom_call.1} parent=5 // pred_fallthru
        _
      %p389 = scmp.le.s32.totalorder 1, %s22
      %p390 = scmp.lt.s32.totalorder %s22, 3
      %p391 = pnand %p389, %p390
      %p392 = pneg %p391
      // Predicated region
      $region69: #{tpu_custom_call.1} parent=5 // pred_check
        _
      $region70: #{tpu_custom_call.1} parent=5 // pred_check_branch
        %394 = sbr.rel (%p391) target = $region72
      $region71: #{tpu_custom_call.1} parent=5 // pred_region
        %s395 = ssub.s32 %s22, 1
        %p396 = scmp.lt.s32.totalorder %s27, 1
        %s397 = scalar_select %p396, %s27, 1
        %s398 = smul.addr %s397, 8
        %s399 = smul.addr %s398, 4
        %s400 = scalar_lea.vmem %s0, %s399
        %p401 = pneg %p48
        %p402 = pneg %p45
        %p403 = pneg %p69
        %p404 = pneg %p66
        %p405 = pneg %p90
        %p406 = pneg %p87
        %p407 = pneg %p111
        %p408 = pneg %p108
        %p409 = pneg %p132
        %p410 = pneg %p129
        %p411 = pneg %p153
        %p412 = pneg %p150
        %p413 = pneg %p174
        %p414 = pneg %p171
        %p415 = pneg %p195
        %p416 = pneg %p192
        %p417 = pneg %p216
        %p418 = pneg %p213
        %p419 = pneg %p237
        %p420 = pneg %p234
        %p421 = pneg %p258
        %p422 = pneg %p255
        %p423 = pneg %p279
        %p424 = pneg %p276
        %p425 = pneg %p300
        %p426 = pneg %p297
        %p427 = pneg %p326
        %p428 = pneg %p323
        %s429 = sand.u32 %s313, 1
        %s430 = scalar_lea.sflag [#allocation3], %s429
        %s431 = sand.u32 %s313, 1
        %s432 = smul.addr %s431, 8
        %s433 = scalar_lea.vmem [#allocation2], %s432
        %p434 = scmp.lt.s32.totalorder %s27, 1
        %s435 = scalar_select %p434, %s27, 1
        %s436 = smul.addr %s435, 8
        %s437 = smul.addr %s436, 4
        %s438 = scalar_lea.vmem %s0, %s437
        %v440 = vld [vmem:[%s438] sm:$0xff]
        %v441 = vld [vmem:[%s438 + $0x8] sm:$0xff]
        %v442 = vld [vmem:[%s438 + $0x10] sm:$0xff]
        %v443 = vld [vmem:[%s438 + $0x18] sm:$0xff]
        %v444 = vunpack.c.l.bf16 %v440
        %v445 = vunpack.c.h.bf16 %v440
        %v446 = vunpack.c.l.bf16 %v441
        %v447 = vunpack.c.h.bf16 %v441
        %v448 = vunpack.c.l.bf16 %v442
        %v449 = vunpack.c.h.bf16 %v442
        %v450 = vunpack.c.l.bf16 %v443
        %v451 = vunpack.c.h.bf16 %v443
        %v452 = vadd.f32 %v444, %v445
        %v453 = vadd.f32 %v452, %v446
        %v454 = vadd.f32 %v453, %v447
        %v455 = vadd.f32 %v454, %v448
        %v456 = vadd.f32 %v455, %v449
        %v457 = vadd.f32 %v456, %v450
        %v458 = vadd.f32 %v457, %v451
        %459 = vadd.xlane.f32.xlu0 %v458
        %v460 = vpop.xlane.xlu0 %459
        %v461 = vrcp.pop 1024.0
        %v462 = vmul.f32 %v460, %v461
        %v463 = vsub.f32 %v444, %v462
        %v464 = vsub.f32 %v445, %v462
        %v465 = vsub.f32 %v446, %v462
        %v466 = vsub.f32 %v447, %v462
        %v467 = vsub.f32 %v448, %v462
        %v468 = vsub.f32 %v449, %v462
        %v469 = vsub.f32 %v450, %v462
        %v470 = vsub.f32 %v451, %v462
        %v471 = vmul.f32 %v463, %v463
        %v472 = vmul.f32 %v464, %v464
        %v473 = vmul.f32 %v465, %v465
        %v474 = vmul.f32 %v466, %v466
        %v475 = vmul.f32 %v467, %v467
        %v476 = vmul.f32 %v468, %v468
        %v477 = vmul.f32 %v469, %v469
        %v478 = vmul.f32 %v470, %v470
        %v479 = vadd.f32 %v471, %v472
        %v480 = vadd.f32 %v479, %v473
        %v481 = vadd.f32 %v480, %v474
        %v482 = vadd.f32 %v481, %v475
        %v483 = vadd.f32 %v482, %v476
        %v484 = vadd.f32 %v483, %v477
        %v485 = vadd.f32 %v484, %v478
        %486 = vadd.xlane.f32.xlu0 %v485
        %v487 = vpop.xlane.xlu0 %486
        %v488 = vmul.f32 %v487, %v461
        %v489 = vadd.f32 %v488, 1e-05
        %v490 = vrsqrt.pop %v489
        %v491 = vmul.f32 %v463, %v490
        %v492 = vmul.f32 %v464, %v490
        %v493 = vmul.f32 %v465, %v490
        %v494 = vmul.f32 %v466, %v490
        %v495 = vmul.f32 %v467, %v490
        %v496 = vmul.f32 %v468, %v490
        %v497 = vmul.f32 %v469, %v490
        %v498 = vmul.f32 %v470, %v490
        %v499 = vpack.c.bf16 %v491, %v491
        %v500 = vpack.c.bf16 %v492, %v492
        %v501 = vpack.c.bf16 %v493, %v493
        %v502 = vpack.c.bf16 %v494, %v494
        %v503 = vpack.c.bf16 %v495, %v495
        %v504 = vpack.c.bf16 %v496, %v496
        %v505 = vpack.c.bf16 %v497, %v497
        %v506 = vpack.c.bf16 %v498, %v498
        %v507 = vld [vmem:[%s1] sm:$0xf]
        %v508 = vld [vmem:[%s1 + $0x4] sm:$0xf]
        %v509 = vld [vmem:[%s1 + $0x8] sm:$0xf]
        %v510 = vld [vmem:[%s1 + $0xc] sm:$0xf]
        %v511 = vld [vmem:[%s1 + $0x10] sm:$0xf]
        %v512 = vld [vmem:[%s1 + $0x14] sm:$0xf]
        %v513 = vld [vmem:[%s1 + $0x18] sm:$0xf]
        %v514 = vld [vmem:[%s1 + $0x1c] sm:$0xf]
        %v515 = vld [vmem:[%s1 + $0x20] sm:$0xf]
        %v516 = vld [vmem:[%s1 + $0x24] sm:$0xf]
        %v517 = vld [vmem:[%s1 + $0x28] sm:$0xf]
        %v518 = vld [vmem:[%s1 + $0x2c] sm:$0xf]
        %v519 = vld [vmem:[%s1 + $0x30] sm:$0xf]
        %v520 = vld [vmem:[%s1 + $0x34] sm:$0xf]
        %v521 = vld [vmem:[%s1 + $0x38] sm:$0xf]
        %v522 = vld [vmem:[%s1 + $0x3c] sm:$0xf]
        %v523 = vld [vmem:[%s1 + $0x40] sm:$0xf]
        %v524 = vld [vmem:[%s1 + $0x44] sm:$0xf]
        %v525 = vld [vmem:[%s1 + $0x48] sm:$0xf]
        %v526 = vld [vmem:[%s1 + $0x4c] sm:$0xf]
        %v527 = vld [vmem:[%s1 + $0x50] sm:$0xf]
        %v528 = vld [vmem:[%s1 + $0x54] sm:$0xf]
        %v529 = vld [vmem:[%s1 + $0x58] sm:$0xf]
        %v530 = vld [vmem:[%s1 + $0x5c] sm:$0xf]
        %v531 = vld [vmem:[%s1 + $0x60] sm:$0xf]
        %v532 = vld [vmem:[%s1 + $0x64] sm:$0xf]
        %v533 = vld [vmem:[%s1 + $0x68] sm:$0xf]
        %v534 = vld [vmem:[%s1 + $0x6c] sm:$0xf]
        %v535 = vld [vmem:[%s1 + $0x70] sm:$0xf]
        %v536 = vld [vmem:[%s1 + $0x74] sm:$0xf]
        %v537 = vld [vmem:[%s1 + $0x78] sm:$0xf]
        %v538 = vld [vmem:[%s1 + $0x7c] sm:$0xf]
        %v539 = vld [vmem:[%s1 + $0x80] sm:$0xf]
        %v540 = vld [vmem:[%s1 + $0x84] sm:$0xf]
        %v541 = vld [vmem:[%s1 + $0x88] sm:$0xf]
        %v542 = vld [vmem:[%s1 + $0x8c] sm:$0xf]
        %v543 = vld [vmem:[%s1 + $0x90] sm:$0xf]
        %v544 = vld [vmem:[%s1 + $0x94] sm:$0xf]
        %v545 = vld [vmem:[%s1 + $0x98] sm:$0xf]
        %v546 = vld [vmem:[%s1 + $0x9c] sm:$0xf]
        %v547 = vld [vmem:[%s1 + $0xa0] sm:$0xf]
        %v548 = vld [vmem:[%s1 + $0xa4] sm:$0xf]
        %v549 = vld [vmem:[%s1 + $0xa8] sm:$0xf]
        %v550 = vld [vmem:[%s1 + $0xac] sm:$0xf]
        %v551 = vld [vmem:[%s1 + $0xb0] sm:$0xf]
        %v552 = vld [vmem:[%s1 + $0xb4] sm:$0xf]
        %v553 = vld [vmem:[%s1 + $0xb8] sm:$0xf]
        %v554 = vld [vmem:[%s1 + $0xbc] sm:$0xf]
        %v555 = vld [vmem:[%s1 + $0xc0] sm:$0xf]
        %v556 = vld [vmem:[%s1 + $0xc4] sm:$0xf]
        %v557 = vld [vmem:[%s1 + $0xc8] sm:$0xf]
        %v558 = vld [vmem:[%s1 + $0xcc] sm:$0xf]
        %v559 = vld [vmem:[%s1 + $0xd0] sm:$0xf]
        %v560 = vld [vmem:[%s1 + $0xd4] sm:$0xf]
        %v561 = vld [vmem:[%s1 + $0xd8] sm:$0xf]
        %v562 = vld [vmem:[%s1 + $0xdc] sm:$0xf]
        %v563 = vld [vmem:[%s1 + $0xe0] sm:$0xf]
        %v564 = vld [vmem:[%s1 + $0xe4] sm:$0xf]
        %v565 = vld [vmem:[%s1 + $0xe8] sm:$0xf]
        %v566 = vld [vmem:[%s1 + $0xec] sm:$0xf]
        %v567 = vld [vmem:[%s1 + $0xf0] sm:$0xf]
        %v568 = vld [vmem:[%s1 + $0xf4] sm:$0xf]
        %v569 = vld [vmem:[%s1 + $0xf8] sm:$0xf]
        %v570 = vld [vmem:[%s1 + $0xfc] sm:$0xf]
        %v571 = vld [vmem:[%s1 + $0x100] sm:$0xf]
        %v572 = vld [vmem:[%s1 + $0x104] sm:$0xf]
        %v573 = vld [vmem:[%s1 + $0x108] sm:$0xf]
        %v574 = vld [vmem:[%s1 + $0x10c] sm:$0xf]
        %v575 = vld [vmem:[%s1 + $0x110] sm:$0xf]
        %v576 = vld [vmem:[%s1 + $0x114] sm:$0xf]
        %v577 = vld [vmem:[%s1 + $0x118] sm:$0xf]
        %v578 = vld [vmem:[%s1 + $0x11c] sm:$0xf]
        %v579 = vld [vmem:[%s1 + $0x120] sm:$0xf]
        %v580 = vld [vmem:[%s1 + $0x124] sm:$0xf]
        %v581 = vld [vmem:[%s1 + $0x128] sm:$0xf]
        %v582 = vld [vmem:[%s1 + $0x12c] sm:$0xf]
        %v583 = vld [vmem:[%s1 + $0x130] sm:$0xf]
        %v584 = vld [vmem:[%s1 + $0x134] sm:$0xf]
        %v585 = vld [vmem:[%s1 + $0x138] sm:$0xf]
        %v586 = vld [vmem:[%s1 + $0x13c] sm:$0xf]
        %v587 = vld [vmem:[%s1 + $0x140] sm:$0xf]
        %v588 = vld [vmem:[%s1 + $0x144] sm:$0xf]
        %v589 = vld [vmem:[%s1 + $0x148] sm:$0xf]
        %v590 = vld [vmem:[%s1 + $0x14c] sm:$0xf]
        %v591 = vld [vmem:[%s1 + $0x150] sm:$0xf]
        %v592 = vld [vmem:[%s1 + $0x154] sm:$0xf]
        %v593 = vld [vmem:[%s1 + $0x158] sm:$0xf]
        %v594 = vld [vmem:[%s1 + $0x15c] sm:$0xf]
        %v595 = vld [vmem:[%s1 + $0x160] sm:$0xf]
        %v596 = vld [vmem:[%s1 + $0x164] sm:$0xf]
        %v597 = vld [vmem:[%s1 + $0x168] sm:$0xf]
        %v598 = vld [vmem:[%s1 + $0x16c] sm:$0xf]
        %v599 = vld [vmem:[%s1 + $0x170] sm:$0xf]
        %v600 = vld [vmem:[%s1 + $0x174] sm:$0xf]
        %v601 = vld [vmem:[%s1 + $0x178] sm:$0xf]
        %v602 = vld [vmem:[%s1 + $0x17c] sm:$0xf]
        %v603 = vld [vmem:[%s1 + $0x180] sm:$0xf]
        %v604 = vld [vmem:[%s1 + $0x184] sm:$0xf]
        %v605 = vld [vmem:[%s1 + $0x188] sm:$0xf]
        %v606 = vld [vmem:[%s1 + $0x18c] sm:$0xf]
        %v607 = vld [vmem:[%s1 + $0x190] sm:$0xf]
        %v608 = vld [vmem:[%s1 + $0x194] sm:$0xf]
        %v609 = vld [vmem:[%s1 + $0x198] sm:$0xf]
        %v610 = vld [vmem:[%s1 + $0x19c] sm:$0xf]
        %v611 = vld [vmem:[%s1 + $0x1a0] sm:$0xf]
        %v612 = vld [vmem:[%s1 + $0x1a4] sm:$0xf]
        %v613 = vld [vmem:[%s1 + $0x1a8] sm:$0xf]
        %v614 = vld [vmem:[%s1 + $0x1ac] sm:$0xf]
        %v615 = vld [vmem:[%s1 + $0x1b0] sm:$0xf]
        %v616 = vld [vmem:[%s1 + $0x1b4] sm:$0xf]
        %v617 = vld [vmem:[%s1 + $0x1b8] sm:$0xf]
        %v618 = vld [vmem:[%s1 + $0x1bc] sm:$0xf]
        %v619 = vld [vmem:[%s1 + $0x1c0] sm:$0xf]
        %v620 = vld [vmem:[%s1 + $0x1c4] sm:$0xf]
        %v621 = vld [vmem:[%s1 + $0x1c8] sm:$0xf]
        %v622 = vld [vmem:[%s1 + $0x1cc] sm:$0xf]
        %v623 = vld [vmem:[%s1 + $0x1d0] sm:$0xf]
        %v624 = vld [vmem:[%s1 + $0x1d4] sm:$0xf]
        %v625 = vld [vmem:[%s1 + $0x1d8] sm:$0xf]
        %v626 = vld [vmem:[%s1 + $0x1dc] sm:$0xf]
        %v627 = vld [vmem:[%s1 + $0x1e0] sm:$0xf]
        %v628 = vld [vmem:[%s1 + $0x1e4] sm:$0xf]
        %v629 = vld [vmem:[%s1 + $0x1e8] sm:$0xf]
        %v630 = vld [vmem:[%s1 + $0x1ec] sm:$0xf]
        %v631 = vld [vmem:[%s1 + $0x1f0] sm:$0xf]
        %v632 = vld [vmem:[%s1 + $0x1f4] sm:$0xf]
        %v633 = vld [vmem:[%s1 + $0x1f8] sm:$0xf]
        %v634 = vld [vmem:[%s1 + $0x1fc] sm:$0xf]
        %v635 = vld [vmem:[%s2] sm:$0x1]
        %v637 = vlaneseq
        %v638 = vshrl.u32 %v637, 7
        %v639 = vsub.s32 0, %v638
        %v640 = vrot.slane %v635, %v639
        %v770 = vunpack.c.l.b16 %v507
        %v771 = vunpack.c.l.b16 %v508
        %v772 = vunpack.c.l.b16 %v509
        %v773 = vunpack.c.l.b16 %v510
        %v774 = vunpack.c.l.b16 %v511
        %v775 = vunpack.c.l.b16 %v512
        %v776 = vunpack.c.l.b16 %v513
        %v777 = vunpack.c.l.b16 %v514
        %v778 = vunpack.c.l.b16 %v515
        %v779 = vunpack.c.l.b16 %v516
        %v780 = vunpack.c.l.b16 %v517
        %v781 = vunpack.c.l.b16 %v518
        %v782 = vunpack.c.l.b16 %v519
        %v783 = vunpack.c.l.b16 %v520
        %v784 = vunpack.c.l.b16 %v521
        %v785 = vunpack.c.l.b16 %v522
        %v786 = vunpack.c.l.b16 %v523
        %v787 = vunpack.c.l.b16 %v524
        %v788 = vunpack.c.l.b16 %v525
        %v789 = vunpack.c.l.b16 %v526
        %v790 = vunpack.c.l.b16 %v527
        %v791 = vunpack.c.l.b16 %v528
        %v792 = vunpack.c.l.b16 %v529
        %v793 = vunpack.c.l.b16 %v530
        %v794 = vunpack.c.l.b16 %v531
        %v795 = vunpack.c.l.b16 %v532
        %v796 = vunpack.c.l.b16 %v533
        %v797 = vunpack.c.l.b16 %v534
        %v798 = vunpack.c.l.b16 %v535
        %v799 = vunpack.c.l.b16 %v536
        %v800 = vunpack.c.l.b16 %v537
        %v801 = vunpack.c.l.b16 %v538
        %v802 = vunpack.c.l.b16 %v539
        %v803 = vunpack.c.l.b16 %v540
        %v804 = vunpack.c.l.b16 %v541
        %v805 = vunpack.c.l.b16 %v542
        %v806 = vunpack.c.l.b16 %v543
        %v807 = vunpack.c.l.b16 %v544
        %v808 = vunpack.c.l.b16 %v545
        %v809 = vunpack.c.l.b16 %v546
        %v810 = vunpack.c.l.b16 %v547
        %v811 = vunpack.c.l.b16 %v548
        %v812 = vunpack.c.l.b16 %v549
        %v813 = vunpack.c.l.b16 %v550
        %v814 = vunpack.c.l.b16 %v551
        %v815 = vunpack.c.l.b16 %v552
        %v816 = vunpack.c.l.b16 %v553
        %v817 = vunpack.c.l.b16 %v554
        %v818 = vunpack.c.l.b16 %v555
        %v819 = vunpack.c.l.b16 %v556
        %v820 = vunpack.c.l.b16 %v557
        %v821 = vunpack.c.l.b16 %v558
        %v822 = vunpack.c.l.b16 %v559
        %v823 = vunpack.c.l.b16 %v560
        %v824 = vunpack.c.l.b16 %v561
        %v825 = vunpack.c.l.b16 %v562
        %v826 = vunpack.c.l.b16 %v563
        %v827 = vunpack.c.l.b16 %v564
        %v828 = vunpack.c.l.b16 %v565
        %v829 = vunpack.c.l.b16 %v566
        %v830 = vunpack.c.l.b16 %v567
        %v831 = vunpack.c.l.b16 %v568
        %v832 = vunpack.c.l.b16 %v569
        %v833 = vunpack.c.l.b16 %v570
        %v834 = vunpack.c.l.b16 %v571
        %v835 = vunpack.c.l.b16 %v572
        %v836 = vunpack.c.l.b16 %v573
        %v837 = vunpack.c.l.b16 %v574
        %v838 = vunpack.c.l.b16 %v575
        %v839 = vunpack.c.l.b16 %v576
        %v840 = vunpack.c.l.b16 %v577
        %v841 = vunpack.c.l.b16 %v578
        %v842 = vunpack.c.l.b16 %v579
        %v843 = vunpack.c.l.b16 %v580
        %v844 = vunpack.c.l.b16 %v581
        %v845 = vunpack.c.l.b16 %v582
        %v846 = vunpack.c.l.b16 %v583
        %v847 = vunpack.c.l.b16 %v584
        %v848 = vunpack.c.l.b16 %v585
        %v849 = vunpack.c.l.b16 %v586
        %v850 = vunpack.c.l.b16 %v587
        %v851 = vunpack.c.l.b16 %v588
        %v852 = vunpack.c.l.b16 %v589
        %v853 = vunpack.c.l.b16 %v590
        %v854 = vunpack.c.l.b16 %v591
        %v855 = vunpack.c.l.b16 %v592
        %v856 = vunpack.c.l.b16 %v593
        %v857 = vunpack.c.l.b16 %v594
        %v858 = vunpack.c.l.b16 %v595
        %v859 = vunpack.c.l.b16 %v596
        %v860 = vunpack.c.l.b16 %v597
        %v861 = vunpack.c.l.b16 %v598
        %v862 = vunpack.c.l.b16 %v599
        %v863 = vunpack.c.l.b16 %v600
        %v864 = vunpack.c.l.b16 %v601
        %v865 = vunpack.c.l.b16 %v602
        %v866 = vunpack.c.l.b16 %v603
        %v867 = vunpack.c.l.b16 %v604
        %v868 = vunpack.c.l.b16 %v605
        %v869 = vunpack.c.l.b16 %v606
        %v870 = vunpack.c.l.b16 %v607
        %v871 = vunpack.c.l.b16 %v608
        %v872 = vunpack.c.l.b16 %v609
        %v873 = vunpack.c.l.b16 %v610
        %v874 = vunpack.c.l.b16 %v611
        %v875 = vunpack.c.l.b16 %v612
        %v876 = vunpack.c.l.b16 %v613
        %v877 = vunpack.c.l.b16 %v614
        %v878 = vunpack.c.l.b16 %v615
        %v879 = vunpack.c.l.b16 %v616
        %v880 = vunpack.c.l.b16 %v617
        %v881 = vunpack.c.l.b16 %v618
        %v882 = vunpack.c.l.b16 %v619
        %v883 = vunpack.c.l.b16 %v620
        %v884 = vunpack.c.l.b16 %v621
        %v885 = vunpack.c.l.b16 %v622
        %v886 = vunpack.c.l.b16 %v623
        %v887 = vunpack.c.l.b16 %v624
        %v888 = vunpack.c.l.b16 %v625
        %v889 = vunpack.c.l.b16 %v626
        %v890 = vunpack.c.l.b16 %v627
        %v891 = vunpack.c.l.b16 %v628
        %v892 = vunpack.c.l.b16 %v629
        %v893 = vunpack.c.l.b16 %v630
        %v894 = vunpack.c.l.b16 %v631
        %v895 = vunpack.c.l.b16 %v632
        %v896 = vunpack.c.l.b16 %v633
        %v897 = vunpack.c.l.b16 %v634
        %v898 = vpack.c.b16 %v771, %v770
        %v899 = vpack.c.b16 %v773, %v772
        %v900 = vpack.c.b16 %v775, %v774
        %v901 = vpack.c.b16 %v777, %v776
        %v902 = vpack.c.b16 %v779, %v778
        %v903 = vpack.c.b16 %v781, %v780
        %v904 = vpack.c.b16 %v783, %v782
        %v905 = vpack.c.b16 %v785, %v784
        %v906 = vpack.c.b16 %v787, %v786
        %v907 = vpack.c.b16 %v789, %v788
        %v908 = vpack.c.b16 %v791, %v790
        %v909 = vpack.c.b16 %v793, %v792
        %v910 = vpack.c.b16 %v795, %v794
        %v911 = vpack.c.b16 %v797, %v796
        %v912 = vpack.c.b16 %v799, %v798
        %v913 = vpack.c.b16 %v801, %v800
        %v914 = vpack.c.b16 %v803, %v802
        %v915 = vpack.c.b16 %v805, %v804
        %v916 = vpack.c.b16 %v807, %v806
        %v917 = vpack.c.b16 %v809, %v808
        %v918 = vpack.c.b16 %v811, %v810
        %v919 = vpack.c.b16 %v813, %v812
        %v920 = vpack.c.b16 %v815, %v814
        %v921 = vpack.c.b16 %v817, %v816
        %v922 = vpack.c.b16 %v819, %v818
        %v923 = vpack.c.b16 %v821, %v820
        %v924 = vpack.c.b16 %v823, %v822
        %v925 = vpack.c.b16 %v825, %v824
        %v926 = vpack.c.b16 %v827, %v826
        %v927 = vpack.c.b16 %v829, %v828
        %v928 = vpack.c.b16 %v831, %v830
        %v929 = vpack.c.b16 %v833, %v832
        %v930 = vpack.c.b16 %v835, %v834
        %v931 = vpack.c.b16 %v837, %v836
        %v932 = vpack.c.b16 %v839, %v838
        %v933 = vpack.c.b16 %v841, %v840
        %v934 = vpack.c.b16 %v843, %v842
        %v935 = vpack.c.b16 %v845, %v844
        %v936 = vpack.c.b16 %v847, %v846
        %v937 = vpack.c.b16 %v849, %v848
        %v938 = vpack.c.b16 %v851, %v850
        %v939 = vpack.c.b16 %v853, %v852
        %v940 = vpack.c.b16 %v855, %v854
        %v941 = vpack.c.b16 %v857, %v856
        %v942 = vpack.c.b16 %v859, %v858
        %v943 = vpack.c.b16 %v861, %v860
        %v944 = vpack.c.b16 %v863, %v862
        %v945 = vpack.c.b16 %v865, %v864
        %v946 = vpack.c.b16 %v867, %v866
        %v947 = vpack.c.b16 %v869, %v868
        %v948 = vpack.c.b16 %v871, %v870
        %v949 = vpack.c.b16 %v873, %v872
        %v950 = vpack.c.b16 %v875, %v874
        %v951 = vpack.c.b16 %v877, %v876
        %v952 = vpack.c.b16 %v879, %v878
        %v953 = vpack.c.b16 %v881, %v880
        %v954 = vpack.c.b16 %v883, %v882
        %v955 = vpack.c.b16 %v885, %v884
        %v956 = vpack.c.b16 %v887, %v886
        %v957 = vpack.c.b16 %v889, %v888
        %v958 = vpack.c.b16 %v891, %v890
        %v959 = vpack.c.b16 %v893, %v892
        %v960 = vpack.c.b16 %v895, %v894
        %v961 = vpack.c.b16 %v897, %v896
        %1026 = vmatprep.subr.bf16.mxu0 0
        %1027 = vmatpush1.bf16.msra.mxu0 %v898
        %1028 = vmatprep.subr.bf16.mxu0 0
        %1029 = vmatpush1.bf16.msra.mxu0 %v899
        %1030 = vmatprep.subr.bf16.mxu0 0
        %1031 = vmatpush1.bf16.msra.mxu0 %v900
        %1032 = vmatprep.subr.bf16.mxu0 0
        %1033 = vmatpush1.bf16.msra.mxu0 %v901
        %1034 = vmatprep.subr.bf16.mxu0 0
        %1035 = vmatpush1.bf16.msra.mxu0 %v902
        %1036 = vmatprep.subr.bf16.mxu0 0
        %1037 = vmatpush1.bf16.msra.mxu0 %v903
        %1038 = vmatprep.subr.bf16.mxu0 0
        %1039 = vmatpush1.bf16.msra.mxu0 %v904
        %1040 = vmatprep.subr.bf16.mxu0 0
        %1041 = vmatpush1.bf16.msra.mxu0 %v905
        %1042 = vmatprep.subr.bf16.mxu0 0
        %1043 = vmatpush1.bf16.msra.mxu0 %v906
        %1044 = vmatprep.subr.bf16.mxu0 0
        %1045 = vmatpush1.bf16.msra.mxu0 %v907
        %1046 = vmatprep.subr.bf16.mxu0 0
        %1047 = vmatpush1.bf16.msra.mxu0 %v908
        %1048 = vmatprep.subr.bf16.mxu0 0
        %1049 = vmatpush1.bf16.msra.mxu0 %v909
        %1050 = vmatprep.subr.bf16.mxu0 0
        %1051 = vmatpush1.bf16.msra.mxu0 %v910
        %1052 = vmatprep.subr.bf16.mxu0 0
        %1053 = vmatpush1.bf16.msra.mxu0 %v911
        %1054 = vmatprep.subr.bf16.mxu0 0
        %1055 = vmatpush1.bf16.msra.mxu0 %v912
        %1056 = vmatprep.subr.bf16.mxu0 0
        %1057 = vmatpush1.bf16.msra.mxu0 %v913
        %1058 = vmatprep.mubr.bf16.mxu0 %v500
        %1059 = vmatmul.mubr.bf16.gmra.mrb[0].mxu0 %v499
        %v1060 = vpop.f32.mrb[0].mxu0
        %v1061 = vadd.f32 %v640, %v1060
        %v1062 = vpop.f32.mrb[0].mxu0
        %v1063 = vpop.f32.mrb[0].mxu0
        %v1064 = vpop.f32.mrb[0].mxu0
        %1065 = vdwg.mxu0
        %1066 = vmatprep.subr.bf16.mxu0 0
        %1067 = vmatpush1.bf16.msra.mxu0 %v914
        %1068 = vmatprep.subr.bf16.mxu0 0
        %1069 = vmatpush1.bf16.msra.mxu0 %v915
        %1070 = vmatprep.subr.bf16.mxu0 0
        %1071 = vmatpush1.bf16.msra.mxu0 %v916
        %1072 = vmatprep.subr.bf16.mxu0 0
        %1073 = vmatpush1.bf16.msra.mxu0 %v917
        %1074 = vmatprep.subr.bf16.mxu0 0
        %1075 = vmatpush1.bf16.msra.mxu0 %v918
        %1076 = vmatprep.subr.bf16.mxu0 0
        %1077 = vmatpush1.bf16.msra.mxu0 %v919
        %1078 = vmatprep.subr.bf16.mxu0 0
        %1079 = vmatpush1.bf16.msra.mxu0 %v920
        %1080 = vmatprep.subr.bf16.mxu0 0
        %1081 = vmatpush1.bf16.msra.mxu0 %v921
        %1082 = vmatprep.subr.bf16.mxu0 0
        %1083 = vmatpush1.bf16.msra.mxu0 %v922
        %1084 = vmatprep.subr.bf16.mxu0 0
        %1085 = vmatpush1.bf16.msra.mxu0 %v923
        %1086 = vmatprep.subr.bf16.mxu0 0
        %1087 = vmatpush1.bf16.msra.mxu0 %v924
        %1088 = vmatprep.subr.bf16.mxu0 0
        %1089 = vmatpush1.bf16.msra.mxu0 %v925
        %1090 = vmatprep.subr.bf16.mxu0 0
        %1091 = vmatpush1.bf16.msra.mxu0 %v926
        %1092 = vmatprep.subr.bf16.mxu0 0
        %1093 = vmatpush1.bf16.msra.mxu0 %v927
        %1094 = vmatprep.subr.bf16.mxu0 0
        %1095 = vmatpush1.bf16.msra.mxu0 %v928
        %1096 = vmatprep.subr.bf16.mxu0 0
        %1097 = vmatpush1.bf16.msra.mxu0 %v929
        %1098 = vmatprep.mubr.bf16.mxu0 %v502
        %1099 = vmatmul.mubr.bf16.gmra.mrb[0].mxu0 %v501
        %v1100 = vpop.f32.mrb[0].mxu0
        %v1101 = vadd.f32 %v1061, %v1100
        %v1102 = vpop.f32.mrb[0].mxu0
        %v1103 = vpop.f32.mrb[0].mxu0
        %v1104 = vpop.f32.mrb[0].mxu0
        %1105 = vdwg.mxu0
        %1106 = vmatprep.subr.bf16.mxu0 0
        %1107 = vmatpush1.bf16.msra.mxu0 %v930
        %1108 = vmatprep.subr.bf16.mxu0 0
        %1109 = vmatpush1.bf16.msra.mxu0 %v931
        %1110 = vmatprep.subr.bf16.mxu0 0
        %1111 = vmatpush1.bf16.msra.mxu0 %v932
        %1112 = vmatprep.subr.bf16.mxu0 0
        %1113 = vmatpush1.bf16.msra.mxu0 %v933
        %1114 = vmatprep.subr.bf16.mxu0 0
        %1115 = vmatpush1.bf16.msra.mxu0 %v934
        %1116 = vmatprep.subr.bf16.mxu0 0
        %1117 = vmatpush1.bf16.msra.mxu0 %v935
        %1118 = vmatprep.subr.bf16.mxu0 0
        %1119 = vmatpush1.bf16.msra.mxu0 %v936
        %1120 = vmatprep.subr.bf16.mxu0 0
        %1121 = vmatpush1.bf16.msra.mxu0 %v937
        %1122 = vmatprep.subr.bf16.mxu0 0
        %1123 = vmatpush1.bf16.msra.mxu0 %v938
        %1124 = vmatprep.subr.bf16.mxu0 0
        %1125 = vmatpush1.bf16.msra.mxu0 %v939
        %1126 = vmatprep.subr.bf16.mxu0 0
        %1127 = vmatpush1.bf16.msra.mxu0 %v940
        %1128 = vmatprep.subr.bf16.mxu0 0
        %1129 = vmatpush1.bf16.msra.mxu0 %v941
        %1130 = vmatprep.subr.bf16.mxu0 0
        %1131 = vmatpush1.bf16.msra.mxu0 %v942
        %1132 = vmatprep.subr.bf16.mxu0 0
        %1133 = vmatpush1.bf16.msra.mxu0 %v943
        %1134 = vmatprep.subr.bf16.mxu0 0
        %1135 = vmatpush1.bf16.msra.mxu0 %v944
        %1136 = vmatprep.subr.bf16.mxu0 0
        %1137 = vmatpush1.bf16.msra.mxu0 %v945
        %1138 = vmatprep.mubr.bf16.mxu0 %v504
        %1139 = vmatmul.mubr.bf16.gmra.mrb[0].mxu0 %v503
        %v1140 = vpop.f32.mrb[0].mxu0
        %v1141 = vadd.f32 %v1101, %v1140
        %v1142 = vpop.f32.mrb[0].mxu0
        %v1143 = vpop.f32.mrb[0].mxu0
        %v1144 = vpop.f32.mrb[0].mxu0
        %1145 = vdwg.mxu0
        %1146 = vmatprep.subr.bf16.mxu0 0
        %1147 = vmatpush1.bf16.msra.mxu0 %v946
        %1148 = vmatprep.subr.bf16.mxu0 0
        %1149 = vmatpush1.bf16.msra.mxu0 %v947
        %1150 = vmatprep.subr.bf16.mxu0 0
        %1151 = vmatpush1.bf16.msra.mxu0 %v948
        %1152 = vmatprep.subr.bf16.mxu0 0
        %1153 = vmatpush1.bf16.msra.mxu0 %v949
        %1154 = vmatprep.subr.bf16.mxu0 0
        %1155 = vmatpush1.bf16.msra.mxu0 %v950
        %1156 = vmatprep.subr.bf16.mxu0 0
        %1157 = vmatpush1.bf16.msra.mxu0 %v951
        %1158 = vmatprep.subr.bf16.mxu0 0
        %1159 = vmatpush1.bf16.msra.mxu0 %v952
        %1160 = vmatprep.subr.bf16.mxu0 0
        %1161 = vmatpush1.bf16.msra.mxu0 %v953
        %1162 = vmatprep.subr.bf16.mxu0 0
        %1163 = vmatpush1.bf16.msra.mxu0 %v954
        %1164 = vmatprep.subr.bf16.mxu0 0
        %1165 = vmatpush1.bf16.msra.mxu0 %v955
        %1166 = vmatprep.subr.bf16.mxu0 0
        %1167 = vmatpush1.bf16.msra.mxu0 %v956
        %1168 = vmatprep.subr.bf16.mxu0 0
        %1169 = vmatpush1.bf16.msra.mxu0 %v957
        %1170 = vmatprep.subr.bf16.mxu0 0
        %1171 = vmatpush1.bf16.msra.mxu0 %v958
        %1172 = vmatprep.subr.bf16.mxu0 0
        %1173 = vmatpush1.bf16.msra.mxu0 %v959
        %1174 = vmatprep.subr.bf16.mxu0 0
        %1175 = vmatpush1.bf16.msra.mxu0 %v960
        %1176 = vmatprep.subr.bf16.mxu0 0
        %1177 = vmatpush1.bf16.msra.mxu0 %v961
        %1178 = vmatprep.mubr.bf16.mxu0 %v506
        %1179 = vmatmul.mubr.bf16.gmra.mrb[0].mxu0 %v505
        %v1180 = vpop.f32.mrb[0].mxu0
        %v1181 = vadd.f32 %v1141, %v1180
        %v1182 = vpop.f32.mrb[0].mxu0
        %v1183 = vpop.f32.mrb[0].mxu0
        %v1184 = vpop.f32.mrb[0].mxu0
        %1185 = vdwg.mxu0
        %vm1186 = vcmp.ge.f32.partialorder %v1181, 0.0
        %v1187 = vmul.f32 %v1181, 0.01
        %v1188 = vsel %vm1186, %v1181, %v1187
        %v1189 = vpack.c.bf16 %v1188, %v1188
        %v1190 = vld [vmem:[%s3] sm:$0xf]
        %v1191 = vld [vmem:[%s3 + $0x4] sm:$0xf]
        %v1192 = vld [vmem:[%s3 + $0x8] sm:$0xf]
        %v1193 = vld [vmem:[%s3 + $0xc] sm:$0xf]
        %v1194 = vld [vmem:[%s3 + $0x10] sm:$0xf]
        %v1195 = vld [vmem:[%s3 + $0x14] sm:$0xf]
        %v1196 = vld [vmem:[%s3 + $0x18] sm:$0xf]
        %v1197 = vld [vmem:[%s3 + $0x1c] sm:$0xf]
        %v1198 = vld [vmem:[%s4] sm:$0x1]
        %v1200 = vlaneseq
        %v1201 = vshrl.u32 %v1200, 7
        %v1202 = vsub.s32 0, %v1201
        %v1203 = vrot.slane %v1198, %v1202
        %v1213 = vunpack.c.l.b16 %v1190
        %v1214 = vunpack.c.l.b16 %v1191
        %v1215 = vunpack.c.l.b16 %v1192
        %v1216 = vunpack.c.l.b16 %v1193
        %v1217 = vunpack.c.l.b16 %v1194
        %v1218 = vunpack.c.l.b16 %v1195
        %v1219 = vunpack.c.l.b16 %v1196
        %v1220 = vunpack.c.l.b16 %v1197
        %v1221 = vpack.c.b16 %v1214, %v1213
        %v1222 = vpack.c.b16 %v1216, %v1215
        %v1223 = vpack.c.b16 %v1218, %v1217
        %v1224 = vpack.c.b16 %v1220, %v1219
        %vm1229 = vcmask 523264
        %v1231 = vsel %vm1229, %v1189, 0
        %1233 = vmatprep.subr.bf16.mxu0 0
        %1234 = vmatpush1.bf16.msra.mxu0 %v1221
        %1235 = vmatprep.subr.bf16.mxu0 0
        %1236 = vmatpush1.bf16.msra.mxu0 %v1222
        %1237 = vmatprep.subr.bf16.mxu0 0
        %1238 = vmatpush1.bf16.msra.mxu0 %v1223
        %1239 = vmatprep.subr.bf16.mxu0 0
        %1240 = vmatpush1.bf16.msra.mxu0 %v1224
        %1241 = vmatprep.subr.bf16.mxu0 0
        %1242 = vmatpush1.bf16.msra.mxu0 0
        %1243 = vmatprep.subr.bf16.mxu0 0
        %1244 = vmatpush1.bf16.msra.mxu0 0
        %1245 = vmatprep.subr.bf16.mxu0 0
        %1246 = vmatpush1.bf16.msra.mxu0 0
        %1247 = vmatprep.subr.bf16.mxu0 0
        %1248 = vmatpush1.bf16.msra.mxu0 0
        %1249 = vmatprep.subr.bf16.mxu0 0
        %1250 = vmatpush1.bf16.msra.mxu0 0
        %1251 = vmatprep.subr.bf16.mxu0 0
        %1252 = vmatpush1.bf16.msra.mxu0 0
        %1253 = vmatprep.subr.bf16.mxu0 0
        %1254 = vmatpush1.bf16.msra.mxu0 0
        %1255 = vmatprep.subr.bf16.mxu0 0
        %1256 = vmatpush1.bf16.msra.mxu0 0
        %1257 = vmatprep.subr.bf16.mxu0 0
        %1258 = vmatpush1.bf16.msra.mxu0 0
        %1259 = vmatprep.subr.bf16.mxu0 0
        %1260 = vmatpush1.bf16.msra.mxu0 0
        %1261 = vmatprep.subr.bf16.mxu0 0
        %1262 = vmatpush1.bf16.msra.mxu0 0
        %1263 = vmatprep.subr.bf16.mxu0 0
        %1264 = vmatpush1.bf16.msra.mxu0 0
        %1265 = vmatprep.mubr.bf16.mxu0 0
        %1266 = vmatmul.mubr.bf16.gmra.mrb[0].mxu0 %v1231
        %v1267 = vpop.f32.mrb[0].mxu0
        %v1268 = vadd.f32 %v1203, %v1267
        %v1269 = vpop.f32.mrb[0].mxu0
        %v1270 = vpop.f32.mrb[0].mxu0
        %v1271 = vpop.f32.mrb[0].mxu0
        %1272 = vdwg.mxu0
        %v1273 = vld [vmem:[%s5] sm:$0x1]
        %v1274 = vld [vmem:[%s6] sm:$0x1]
        %v1275 = vsel %vm1229, %v1268, 0.0
        %1276 = vadd.xlane.f32.xlu0 %v1275
        %v1277 = vpop.xlane.xlu0 %1276
        %v1278 = vrcp.pop 64.0
        %v1279 = vmul.f32 %v1277, %v1278
        %v1280 = vsub.f32 %v1268, %v1279
        %v1281 = vmul.f32 %v1280, %v1280
        %v1282 = vsel %vm1229, %v1281, 0.0
        %1283 = vadd.xlane.f32.xlu0 %v1282
        %v1284 = vpop.xlane.xlu0 %1283
        %v1285 = vmul.f32 %v1284, %v1278
        %v1286 = vadd.f32 %v1285, 1e-05
        %v1287 = vrsqrt.pop %v1286
        %v1288 = vmul.f32 %v1280, %v1287
        %v1290 = vlaneseq
        %v1291 = vshrl.u32 %v1290, 7
        %v1292 = vsub.s32 0, %v1291
        %v1293 = vrot.slane %v1273, %v1292
        %v1295 = vmul.f32 %v1288, %v1293
        %v1297 = vlaneseq
        %v1298 = vshrl.u32 %v1297, 7
        %v1299 = vsub.s32 0, %v1298
        %v1300 = vrot.slane %v1274, %v1299
        %v1302 = vadd.f32 %v1295, %v1300
        %v1303 = vpack.c.bf16 %v1302, %v1302
        %v1304 = vld [vmem:[%s7] sm:$0xff]
        %v1305 = vld [vmem:[%s7 + $0x8] sm:$0xff]
        %v1306 = vld [vmem:[%s7 + $0x40] sm:$0xff]
        %v1307 = vld [vmem:[%s7 + $0x48] sm:$0xff]
        %v1308 = vld [vmem:[%s7 + $0x80] sm:$0xff]
        %v1309 = vld [vmem:[%s7 + $0x88] sm:$0xff]
        %v1310 = vld [vmem:[%s7 + $0xc0] sm:$0xff]
        %v1311 = vld [vmem:[%s7 + $0xc8] sm:$0xff]
        %v1312 = vld [vmem:[%s7 + $0x100] sm:$0xff]
        %v1313 = vld [vmem:[%s7 + $0x108] sm:$0xff]
        %v1314 = vld [vmem:[%s7 + $0x140] sm:$0xff]
        %v1315 = vld [vmem:[%s7 + $0x148] sm:$0xff]
        %v1316 = vld [vmem:[%s7 + $0x180] sm:$0xff]
        %v1317 = vld [vmem:[%s7 + $0x188] sm:$0xff]
        %v1318 = vld [vmem:[%s7 + $0x1c0] sm:$0xff]
        %v1319 = vld [vmem:[%s7 + $0x1c8] sm:$0xff]
        %v1320 = vld [vmem:[%s8] sm:$0xf]
        %v1322 = vlaneseq
        %v1323 = vshrl.u32 %v1322, 7
        %v1324 = vsub.s32 0, %v1323
        %v1325 = vrot.slane %v1320, %v1324
        %v1326 = vlaneseq
        %v1327 = vshrl.u32 %v1326, 7
        %v1328 = vsub.s32 1, %v1327
        %v1329 = vrot.slane %v1320, %v1328
        %v1330 = vlaneseq
        %v1331 = vshrl.u32 %v1330, 7
        %v1332 = vsub.s32 2, %v1331
        %v1333 = vrot.slane %v1320, %v1332
        %v1334 = vlaneseq
        %v1335 = vshrl.u32 %v1334, 7
        %v1336 = vsub.s32 3, %v1335
        %v1337 = vrot.slane %v1320, %v1336
        %v1358 = vunpack.c.l.b16 %v1304
        %v1359 = vunpack.c.h.b16 %v1304
        %v1360 = vunpack.c.l.b16 %v1305
        %v1361 = vunpack.c.h.b16 %v1305
        %v1362 = vunpack.c.l.b16 %v1306
        %v1363 = vunpack.c.h.b16 %v1306
        %v1364 = vunpack.c.l.b16 %v1307
        %v1365 = vunpack.c.h.b16 %v1307
        %v1366 = vunpack.c.l.b16 %v1308
        %v1367 = vunpack.c.h.b16 %v1308
        %v1368 = vunpack.c.l.b16 %v1309
        %v1369 = vunpack.c.h.b16 %v1309
        %v1370 = vunpack.c.l.b16 %v1310
        %v1371 = vunpack.c.h.b16 %v1310
        %v1372 = vunpack.c.l.b16 %v1311
        %v1373 = vunpack.c.h.b16 %v1311
        %v1374 = vunpack.c.l.b16 %v1312
        %v1375 = vunpack.c.h.b16 %v1312
        %v1376 = vunpack.c.l.b16 %v1313
        %v1377 = vunpack.c.h.b16 %v1313
        %v1378 = vunpack.c.l.b16 %v1314
        %v1379 = vunpack.c.h.b16 %v1314
        %v1380 = vunpack.c.l.b16 %v1315
        %v1381 = vunpack.c.h.b16 %v1315
        %v1382 = vunpack.c.l.b16 %v1316
        %v1383 = vunpack.c.h.b16 %v1316
        %v1384 = vunpack.c.l.b16 %v1317
        %v1385 = vunpack.c.h.b16 %v1317
        %v1386 = vunpack.c.l.b16 %v1318
        %v1387 = vunpack.c.h.b16 %v1318
        %v1388 = vunpack.c.l.b16 %v1319
        %v1389 = vunpack.c.h.b16 %v1319
        %v1390 = vpack.c.b16 %v1362, %v1358
        %v1391 = vpack.c.b16 %v1363, %v1359
        %v1392 = vpack.c.b16 %v1364, %v1360
        %v1393 = vpack.c.b16 %v1365, %v1361
        %v1394 = vpack.c.b16 %v1370, %v1366
        %v1395 = vpack.c.b16 %v1371, %v1367
        %v1396 = vpack.c.b16 %v1372, %v1368
        %v1397 = vpack.c.b16 %v1373, %v1369
        %v1398 = vpack.c.b16 %v1378, %v1374
        %v1399 = vpack.c.b16 %v1379, %v1375
        %v1400 = vpack.c.b16 %v1380, %v1376
        %v1401 = vpack.c.b16 %v1381, %v1377
        %v1402 = vpack.c.b16 %v1386, %v1382
        %v1403 = vpack.c.b16 %v1387, %v1383
        %v1404 = vpack.c.b16 %v1388, %v1384
        %v1405 = vpack.c.b16 %v1389, %v1385
        %v1423 = vsel %vm1229, %v1303, 0
        %1425 = vmatprep.subr.bf16.mxu0 %v1391
        %1426 = vmatpush1.bf16.msra.mxu0 %v1390
        %1427 = vmatprep.subr.bf16.mxu0 %v1395
        %1428 = vmatpush1.bf16.msra.mxu0 %v1394
        %1429 = vmatprep.subr.bf16.mxu0 %v1399
        %1430 = vmatpush1.bf16.msra.mxu0 %v1398
        %1431 = vmatprep.subr.bf16.mxu0 %v1403
        %1432 = vmatpush1.bf16.msra.mxu0 %v1402
        %1433 = vmatprep.subr.bf16.mxu0 0
        %1434 = vmatpush1.bf16.msra.mxu0 0
        %1435 = vmatprep.subr.bf16.mxu0 0
        %1436 = vmatpush1.bf16.msra.mxu0 0
        %1437 = vmatprep.subr.bf16.mxu0 0
        %1438 = vmatpush1.bf16.msra.mxu0 0
        %1439 = vmatprep.subr.bf16.mxu0 0
        %1440 = vmatpush1.bf16.msra.mxu0 0
        %1441 = vmatprep.subr.bf16.mxu0 0
        %1442 = vmatpush1.bf16.msra.mxu0 0
        %1443 = vmatprep.subr.bf16.mxu0 0
        %1444 = vmatpush1.bf16.msra.mxu0 0
        %1445 = vmatprep.subr.bf16.mxu0 0
        %1446 = vmatpush1.bf16.msra.mxu0 0
        %1447 = vmatprep.subr.bf16.mxu0 0
        %1448 = vmatpush1.bf16.msra.mxu0 0
        %1449 = vmatprep.subr.bf16.mxu0 0
        %1450 = vmatpush1.bf16.msra.mxu0 0
        %1451 = vmatprep.subr.bf16.mxu0 0
        %1452 = vmatpush1.bf16.msra.mxu0 0
        %1453 = vmatprep.subr.bf16.mxu0 0
        %1454 = vmatpush1.bf16.msra.mxu0 0
        %1455 = vmatprep.subr.bf16.mxu0 0
        %1456 = vmatpush1.bf16.msra.mxu0 0
        %1457 = vmatprep.mubr.bf16.mxu0 0
        %1458 = vmatmul.mubr.bf16.gmra.mrb[0].mxu0 %v1423
        %v1459 = vpop.f32.mrb[0].mxu0
        %v1460 = vadd.f32 %v1325, %v1459
        %v1461 = vpop.f32.mrb[0].mxu0
        %v1462 = vadd.f32 %v1329, %v1461
        %v1463 = vpop.f32.mrb[0].mxu0
        %v1464 = vpop.f32.mrb[0].mxu0
        %1465 = vdwg.mxu0
        %1466 = vmatprep.subr.bf16.mxu0 %v1393
        %1467 = vmatpush1.bf16.msra.mxu0 %v1392
        %1468 = vmatprep.subr.bf16.mxu0 %v1397
        %1469 = vmatpush1.bf16.msra.mxu0 %v1396
        %1470 = vmatprep.subr.bf16.mxu0 %v1401
        %1471 = vmatpush1.bf16.msra.mxu0 %v1400
        %1472 = vmatprep.subr.bf16.mxu0 %v1405
        %1473 = vmatpush1.bf16.msra.mxu0 %v1404
        %1474 = vmatprep.subr.bf16.mxu0 0
        %1475 = vmatpush1.bf16.msra.mxu0 0
        %1476 = vmatprep.subr.bf16.mxu0 0
        %1477 = vmatpush1.bf16.msra.mxu0 0
        %1478 = vmatprep.subr.bf16.mxu0 0
        %1479 = vmatpush1.bf16.msra.mxu0 0
        %1480 = vmatprep.subr.bf16.mxu0 0
        %1481 = vmatpush1.bf16.msra.mxu0 0
        %1482 = vmatprep.subr.bf16.mxu0 0
        %1483 = vmatpush1.bf16.msra.mxu0 0
        %1484 = vmatprep.subr.bf16.mxu0 0
        %1485 = vmatpush1.bf16.msra.mxu0 0
        %1486 = vmatprep.subr.bf16.mxu0 0
        %1487 = vmatpush1.bf16.msra.mxu0 0
        %1488 = vmatprep.subr.bf16.mxu0 0
        %1489 = vmatpush1.bf16.msra.mxu0 0
        %1490 = vmatprep.subr.bf16.mxu0 0
        %1491 = vmatpush1.bf16.msra.mxu0 0
        %1492 = vmatprep.subr.bf16.mxu0 0
        %1493 = vmatpush1.bf16.msra.mxu0 0
        %1494 = vmatprep.subr.bf16.mxu0 0
        %1495 = vmatpush1.bf16.msra.mxu0 0
        %1496 = vmatprep.subr.bf16.mxu0 0
        %1497 = vmatpush1.bf16.msra.mxu0 0
        %1498 = vmatprep.mubr.bf16.mxu0 0
        %1499 = vmatmul.mubr.bf16.gmra.mrb[0].mxu0 %v1423
        %v1500 = vpop.f32.mrb[0].mxu0
        %v1501 = vadd.f32 %v1333, %v1500
        %v1502 = vpop.f32.mrb[0].mxu0
        %v1503 = vadd.f32 %v1337, %v1502
        %v1504 = vpop.f32.mrb[0].mxu0
        %v1505 = vpop.f32.mrb[0].mxu0
        %1506 = vdwg.mxu0
        %v1507 = vmax.f32 %v1460, 0.0
        %v1508 = vmax.f32 %v1462, 0.0
        %v1509 = vmax.f32 %v1501, 0.0
        %v1510 = vmax.f32 %v1503, 0.0
        %v1511 = vpack.c.bf16 %v1507, %v1507
        %v1512 = vpack.c.bf16 %v1508, %v1508
        %v1513 = vpack.c.bf16 %v1509, %v1509
        %v1514 = vpack.c.bf16 %v1510, %v1510
        %v1515 = vld [vmem:[%s9] sm:$0xf]
        %v1516 = vld [vmem:[%s9 + $0x4] sm:$0xf]
        %v1517 = vld [vmem:[%s9 + $0x8] sm:$0xf]
        %v1518 = vld [vmem:[%s9 + $0xc] sm:$0xf]
        %v1519 = vld [vmem:[%s9 + $0x10] sm:$0xf]
        %v1520 = vld [vmem:[%s9 + $0x14] sm:$0xf]
        %v1521 = vld [vmem:[%s9 + $0x18] sm:$0xf]
        %v1522 = vld [vmem:[%s9 + $0x1c] sm:$0xf]
        %v1523 = vld [vmem:[%s9 + $0x20] sm:$0xf]
        %v1524 = vld [vmem:[%s9 + $0x24] sm:$0xf]
        %v1525 = vld [vmem:[%s9 + $0x28] sm:$0xf]
        %v1526 = vld [vmem:[%s9 + $0x2c] sm:$0xf]
        %v1527 = vld [vmem:[%s9 + $0x30] sm:$0xf]
        %v1528 = vld [vmem:[%s9 + $0x34] sm:$0xf]
        %v1529 = vld [vmem:[%s9 + $0x38] sm:$0xf]
        %v1530 = vld [vmem:[%s9 + $0x3c] sm:$0xf]
        %v1531 = vld [vmem:[%s9 + $0x40] sm:$0xf]
        %v1532 = vld [vmem:[%s9 + $0x44] sm:$0xf]
        %v1533 = vld [vmem:[%s9 + $0x48] sm:$0xf]
        %v1534 = vld [vmem:[%s9 + $0x4c] sm:$0xf]
        %v1535 = vld [vmem:[%s9 + $0x50] sm:$0xf]
        %v1536 = vld [vmem:[%s9 + $0x54] sm:$0xf]
        %v1537 = vld [vmem:[%s9 + $0x58] sm:$0xf]
        %v1538 = vld [vmem:[%s9 + $0x5c] sm:$0xf]
        %v1539 = vld [vmem:[%s9 + $0x60] sm:$0xf]
        %v1540 = vld [vmem:[%s9 + $0x64] sm:$0xf]
        %v1541 = vld [vmem:[%s9 + $0x68] sm:$0xf]
        %v1542 = vld [vmem:[%s9 + $0x6c] sm:$0xf]
        %v1543 = vld [vmem:[%s9 + $0x70] sm:$0xf]
        %v1544 = vld [vmem:[%s9 + $0x74] sm:$0xf]
        %v1545 = vld [vmem:[%s9 + $0x78] sm:$0xf]
        %v1546 = vld [vmem:[%s9 + $0x7c] sm:$0xf]
        %v1547 = vld [vmem:[%s9 + $0x80] sm:$0xf]
        %v1548 = vld [vmem:[%s9 + $0x84] sm:$0xf]
        %v1549 = vld [vmem:[%s9 + $0x88] sm:$0xf]
        %v1550 = vld [vmem:[%s9 + $0x8c] sm:$0xf]
        %v1551 = vld [vmem:[%s9 + $0x90] sm:$0xf]
        %v1552 = vld [vmem:[%s9 + $0x94] sm:$0xf]
        %v1553 = vld [vmem:[%s9 + $0x98] sm:$0xf]
        %v1554 = vld [vmem:[%s9 + $0x9c] sm:$0xf]
        %v1555 = vld [vmem:[%s9 + $0xa0] sm:$0xf]
        %v1556 = vld [vmem:[%s9 + $0xa4] sm:$0xf]
        %v1557 = vld [vmem:[%s9 + $0xa8] sm:$0xf]
        %v1558 = vld [vmem:[%s9 + $0xac] sm:$0xf]
        %v1559 = vld [vmem:[%s9 + $0xb0] sm:$0xf]
        %v1560 = vld [vmem:[%s9 + $0xb4] sm:$0xf]
        %v1561 = vld [vmem:[%s9 + $0xb8] sm:$0xf]
        %v1562 = vld [vmem:[%s9 + $0xbc] sm:$0xf]
        %v1563 = vld [vmem:[%s9 + $0xc0] sm:$0xf]
        %v1564 = vld [vmem:[%s9 + $0xc4] sm:$0xf]
        %v1565 = vld [vmem:[%s9 + $0xc8] sm:$0xf]
        %v1566 = vld [vmem:[%s9 + $0xcc] sm:$0xf]
        %v1567 = vld [vmem:[%s9 + $0xd0] sm:$0xf]
        %v1568 = vld [vmem:[%s9 + $0xd4] sm:$0xf]
        %v1569 = vld [vmem:[%s9 + $0xd8] sm:$0xf]
        %v1570 = vld [vmem:[%s9 + $0xdc] sm:$0xf]
        %v1571 = vld [vmem:[%s9 + $0xe0] sm:$0xf]
        %v1572 = vld [vmem:[%s9 + $0xe4] sm:$0xf]
        %v1573 = vld [vmem:[%s9 + $0xe8] sm:$0xf]
        %v1574 = vld [vmem:[%s9 + $0xec] sm:$0xf]
        %v1575 = vld [vmem:[%s9 + $0xf0] sm:$0xf]
        %v1576 = vld [vmem:[%s9 + $0xf4] sm:$0xf]
        %v1577 = vld [vmem:[%s9 + $0xf8] sm:$0xf]
        %v1578 = vld [vmem:[%s9 + $0xfc] sm:$0xf]
        %v1579 = vld [vmem:[%s7 + $0x10] sm:$0xff]
        %v1580 = vld [vmem:[%s7 + $0x18] sm:$0xff]
        %v1581 = vld [vmem:[%s7 + $0x50] sm:$0xff]
        %v1582 = vld [vmem:[%s7 + $0x58] sm:$0xff]
        %v1583 = vld [vmem:[%s7 + $0x90] sm:$0xff]
        %v1584 = vld [vmem:[%s7 + $0x98] sm:$0xff]
        %v1585 = vld [vmem:[%s7 + $0xd0] sm:$0xff]
        %v1586 = vld [vmem:[%s7 + $0xd8] sm:$0xff]
        %v1587 = vld [vmem:[%s7 + $0x110] sm:$0xff]
        %v1588 = vld [vmem:[%s7 + $0x118] sm:$0xff]
        %v1589 = vld [vmem:[%s7 + $0x150] sm:$0xff]
        %v1590 = vld [vmem:[%s7 + $0x158] sm:$0xff]
        %v1591 = vld [vmem:[%s7 + $0x190] sm:$0xff]
        %v1592 = vld [vmem:[%s7 + $0x198] sm:$0xff]
        %v1593 = vld [vmem:[%s7 + $0x1d0] sm:$0xff]
        %v1594 = vld [vmem:[%s7 + $0x1d8] sm:$0xff]
        %v1595 = vld [vmem:[%s8 + $0x4] sm:$0xf]
        %v1597 = vlaneseq
        %v1598 = vshrl.u32 %v1597, 7
        %v1599 = vsub.s32 0, %v1598
        %v1600 = vrot.slane %v1595, %v1599
        %v1601 = vlaneseq
        %v1602 = vshrl.u32 %v1601, 7
        %v1603 = vsub.s32 1, %v1602
        %v1604 = vrot.slane %v1595, %v1603
        %v1605 = vlaneseq
        %v1606 = vshrl.u32 %v1605, 7
        %v1607 = vsub.s32 2, %v1606
        %v1608 = vrot.slane %v1595, %v1607
        %v1609 = vlaneseq
        %v1610 = vshrl.u32 %v1609, 7
        %v1611 = vsub.s32 3, %v1610
        %v1612 = vrot.slane %v1595, %v1611
        %v1633 = vunpack.c.l.b16 %v1579
        %v1634 = vunpack.c.h.b16 %v1579
        %v1635 = vunpack.c.l.b16 %v1580
        %v1636 = vunpack.c.h.b16 %v1580
        %v1637 = vunpack.c.l.b16 %v1581
        %v1638 = vunpack.c.h.b16 %v1581
        %v1639 = vunpack.c.l.b16 %v1582
        %v1640 = vunpack.c.h.b16 %v1582
        %v1641 = vunpack.c.l.b16 %v1583
        %v1642 = vunpack.c.h.b16 %v1583
        %v1643 = vunpack.c.l.b16 %v1584
        %v1644 = vunpack.c.h.b16 %v1584
        %v1645 = vunpack.c.l.b16 %v1585
        %v1646 = vunpack.c.h.b16 %v1585
        %v1647 = vunpack.c.l.b16 %v1586
        %v1648 = vunpack.c.h.b16 %v1586
        %v1649 = vunpack.c.l.b16 %v1587
        %v1650 = vunpack.c.h.b16 %v1587
        %v1651 = vunpack.c.l.b16 %v1588
        %v1652 = vunpack.c.h.b16 %v1588
        %v1653 = vunpack.c.l.b16 %v1589
        %v1654 = vunpack.c.h.b16 %v1589
        %v1655 = vunpack.c.l.b16 %v1590
        %v1656 = vunpack.c.h.b16 %v1590
        %v1657 = vunpack.c.l.b16 %v1591
        %v1658 = vunpack.c.h.b16 %v1591
        %v1659 = vunpack.c.l.b16 %v1592
        %v1660 = vunpack.c.h.b16 %v1592
        %v1661 = vunpack.c.l.b16 %v1593
        %v1662 = vunpack.c.h.b16 %v1593
        %v1663 = vunpack.c.l.b16 %v1594
        %v1664 = vunpack.c.h.b16 %v1594
        %v1665 = vpack.c.b16 %v1637, %v1633
        %v1666 = vpack.c.b16 %v1638, %v1634
        %v1667 = vpack.c.b16 %v1639, %v1635
        %v1668 = vpack.c.b16 %v1640, %v1636
        %v1669 = vpack.c.b16 %v1645, %v1641
        %v1670 = vpack.c.b16 %v1646, %v1642
        %v1671 = vpack.c.b16 %v1647, %v1643
        %v1672 = vpack.c.b16 %v1648, %v1644
        %v1673 = vpack.c.b16 %v1653, %v1649
        %v1674 = vpack.c.b16 %v1654, %v1650
        %v1675 = vpack.c.b16 %v1655, %v1651
        %v1676 = vpack.c.b16 %v1656, %v1652
        %v1677 = vpack.c.b16 %v1661, %v1657
        %v1678 = vpack.c.b16 %v1662, %v1658
        %v1679 = vpack.c.b16 %v1663, %v1659
        %v1680 = vpack.c.b16 %v1664, %v1660
        %1697 = vmatprep.subr.bf16.mxu0 %v1666
        %1698 = vmatpush1.bf16.msra.mxu0 %v1665
        %1699 = vmatprep.subr.bf16.mxu0 %v1670
        %1700 = vmatpush1.bf16.msra.mxu0 %v1669
        %1701 = vmatprep.subr.bf16.mxu0 %v1674
        %1702 = vmatpush1.bf16.msra.mxu0 %v1673
        %1703 = vmatprep.subr.bf16.mxu0 %v1678
        %1704 = vmatpush1.bf16.msra.mxu0 %v1677
        %1705 = vmatprep.subr.bf16.mxu0 0
        %1706 = vmatpush1.bf16.msra.mxu0 0
        %1707 = vmatprep.subr.bf16.mxu0 0
        %1708 = vmatpush1.bf16.msra.mxu0 0
        %1709 = vmatprep.subr.bf16.mxu0 0
        %1710 = vmatpush1.bf16.msra.mxu0 0
        %1711 = vmatprep.subr.bf16.mxu0 0
        %1712 = vmatpush1.bf16.msra.mxu0 0
        %1713 = vmatprep.subr.bf16.mxu0 0
        %1714 = vmatpush1.bf16.msra.mxu0 0
        %1715 = vmatprep.subr.bf16.mxu0 0
        %1716 = vmatpush1.bf16.msra.mxu0 0
        %1717 = vmatprep.subr.bf16.mxu0 0
        %1718 = vmatpush1.bf16.msra.mxu0 0
        %1719 = vmatprep.subr.bf16.mxu0 0
        %1720 = vmatpush1.bf16.msra.mxu0 0
        %1721 = vmatprep.subr.bf16.mxu0 0
        %1722 = vmatpush1.bf16.msra.mxu0 0
        %1723 = vmatprep.subr.bf16.mxu0 0
        %1724 = vmatpush1.bf16.msra.mxu0 0
        %1725 = vmatprep.subr.bf16.mxu0 0
        %1726 = vmatpush1.bf16.msra.mxu0 0
        %1727 = vmatprep.subr.bf16.mxu0 0
        %1728 = vmatpush1.bf16.msra.mxu0 0
        %1729 = vmatprep.mubr.bf16.mxu0 0
        %1730 = vmatmul.mubr.bf16.gmra.mrb[0].mxu0 %v1423
        %v1731 = vpop.f32.mrb[0].mxu0
        %v1732 = vadd.f32 %v1600, %v1731
        %v1733 = vpop.f32.mrb[0].mxu0
        %v1734 = vadd.f32 %v1604, %v1733
        %v1735 = vpop.f32.mrb[0].mxu0
        %v1736 = vpop.f32.mrb[0].mxu0
        %1737 = vdwg.mxu0
        %1738 = vmatprep.subr.bf16.mxu0 %v1668
        %1739 = vmatpush1.bf16.msra.mxu0 %v1667
        %1740 = vmatprep.subr.bf16.mxu0 %v1672
        %1741 = vmatpush1.bf16.msra.mxu0 %v1671
        %1742 = vmatprep.subr.bf16.mxu0 %v1676
        %1743 = vmatpush1.bf16.msra.mxu0 %v1675
        %1744 = vmatprep.subr.bf16.mxu0 %v1680
        %1745 = vmatpush1.bf16.msra.mxu0 %v1679
        %1746 = vmatprep.subr.bf16.mxu0 0
        %1747 = vmatpush1.bf16.msra.mxu0 0
        %1748 = vmatprep.subr.bf16.mxu0 0
        %1749 = vmatpush1.bf16.msra.mxu0 0
        %1750 = vmatprep.subr.bf16.mxu0 0
        %1751 = vmatpush1.bf16.msra.mxu0 0
        %1752 = vmatprep.subr.bf16.mxu0 0
        %1753 = vmatpush1.bf16.msra.mxu0 0
        %1754 = vmatprep.subr.bf16.mxu0 0
        %1755 = vmatpush1.bf16.msra.mxu0 0
        %1756 = vmatprep.subr.bf16.mxu0 0
        %1757 = vmatpush1.bf16.msra.mxu0 0
        %1758 = vmatprep.subr.bf16.mxu0 0
        %1759 = vmatpush1.bf16.msra.mxu0 0
        %1760 = vmatprep.subr.bf16.mxu0 0
        %1761 = vmatpush1.bf16.msra.mxu0 0
        %1762 = vmatprep.subr.bf16.mxu0 0
        %1763 = vmatpush1.bf16.msra.mxu0 0
        %1764 = vmatprep.subr.bf16.mxu0 0
        %1765 = vmatpush1.bf16.msra.mxu0 0
        %1766 = vmatprep.subr.bf16.mxu0 0
        %1767 = vmatpush1.bf16.msra.mxu0 0
        %1768 = vmatprep.subr.bf16.mxu0 0
        %1769 = vmatpush1.bf16.msra.mxu0 0
        %1770 = vmatprep.mubr.bf16.mxu0 0
        %1771 = vmatmul.mubr.bf16.gmra.mrb[0].mxu0 %v1423
        %v1772 = vpop.f32.mrb[0].mxu0
        %v1773 = vadd.f32 %v1608, %v1772
        %v1774 = vpop.f32.mrb[0].mxu0
        %v1775 = vadd.f32 %v1612, %v1774
        %v1776 = vpop.f32.mrb[0].mxu0
        %v1777 = vpop.f32.mrb[0].mxu0
        %1778 = vdwg.mxu0
        %v1779 = vmax.f32 %v1732, 0.0
        %v1780 = vmax.f32 %v1734, 0.0
        %v1781 = vmax.f32 %v1773, 0.0
        %v1782 = vmax.f32 %v1775, 0.0
        %v1783 = vpack.c.bf16 %v1779, %v1779
        %v1784 = vpack.c.bf16 %v1780, %v1780
        %v1785 = vpack.c.bf16 %v1781, %v1781
        %v1786 = vpack.c.bf16 %v1782, %v1782
        %v1787 = vld [vmem:[%s9 + $0x100] sm:$0xf]
        %v1788 = vld [vmem:[%s9 + $0x104] sm:$0xf]
        %v1789 = vld [vmem:[%s9 + $0x108] sm:$0xf]
        %v1790 = vld [vmem:[%s9 + $0x10c] sm:$0xf]
        %v1791 = vld [vmem:[%s9 + $0x110] sm:$0xf]
        %v1792 = vld [vmem:[%s9 + $0x114] sm:$0xf]
        %v1793 = vld [vmem:[%s9 + $0x118] sm:$0xf]
        %v1794 = vld [vmem:[%s9 + $0x11c] sm:$0xf]
        %v1795 = vld [vmem:[%s9 + $0x120] sm:$0xf]
        %v1796 = vld [vmem:[%s9 + $0x124] sm:$0xf]
        %v1797 = vld [vmem:[%s9 + $0x128] sm:$0xf]
        %v1798 = vld [vmem:[%s9 + $0x12c] sm:$0xf]
        %v1799 = vld [vmem:[%s9 + $0x130] sm:$0xf]
        %v1800 = vld [vmem:[%s9 + $0x134] sm:$0xf]
        %v1801 = vld [vmem:[%s9 + $0x138] sm:$0xf]
        %v1802 = vld [vmem:[%s9 + $0x13c] sm:$0xf]
        %v1803 = vld [vmem:[%s9 + $0x140] sm:$0xf]
        %v1804 = vld [vmem:[%s9 + $0x144] sm:$0xf]
        %v1805 = vld [vmem:[%s9 + $0x148] sm:$0xf]
        %v1806 = vld [vmem:[%s9 + $0x14c] sm:$0xf]
        %v1807 = vld [vmem:[%s9 + $0x150] sm:$0xf]
        %v1808 = vld [vmem:[%s9 + $0x154] sm:$0xf]
        %v1809 = vld [vmem:[%s9 + $0x158] sm:$0xf]
        %v1810 = vld [vmem:[%s9 + $0x15c] sm:$0xf]
        %v1811 = vld [vmem:[%s9 + $0x160] sm:$0xf]
        %v1812 = vld [vmem:[%s9 + $0x164] sm:$0xf]
        %v1813 = vld [vmem:[%s9 + $0x168] sm:$0xf]
        %v1814 = vld [vmem:[%s9 + $0x16c] sm:$0xf]
        %v1815 = vld [vmem:[%s9 + $0x170] sm:$0xf]
        %v1816 = vld [vmem:[%s9 + $0x174] sm:$0xf]
        %v1817 = vld [vmem:[%s9 + $0x178] sm:$0xf]
        %v1818 = vld [vmem:[%s9 + $0x17c] sm:$0xf]
        %v1819 = vld [vmem:[%s9 + $0x180] sm:$0xf]
        %v1820 = vld [vmem:[%s9 + $0x184] sm:$0xf]
        %v1821 = vld [vmem:[%s9 + $0x188] sm:$0xf]
        %v1822 = vld [vmem:[%s9 + $0x18c] sm:$0xf]
        %v1823 = vld [vmem:[%s9 + $0x190] sm:$0xf]
        %v1824 = vld [vmem:[%s9 + $0x194] sm:$0xf]
        %v1825 = vld [vmem:[%s9 + $0x198] sm:$0xf]
        %v1826 = vld [vmem:[%s9 + $0x19c] sm:$0xf]
        %v1827 = vld [vmem:[%s9 + $0x1a0] sm:$0xf]
        %v1828 = vld [vmem:[%s9 + $0x1a4] sm:$0xf]
        %v1829 = vld [vmem:[%s9 + $0x1a8] sm:$0xf]
        %v1830 = vld [vmem:[%s9 + $0x1ac] sm:$0xf]
        %v1831 = vld [vmem:[%s9 + $0x1b0] sm:$0xf]
        %v1832 = vld [vmem:[%s9 + $0x1b4] sm:$0xf]
        %v1833 = vld [vmem:[%s9 + $0x1b8] sm:$0xf]
        %v1834 = vld [vmem:[%s9 + $0x1bc] sm:$0xf]
        %v1835 = vld [vmem:[%s9 + $0x1c0] sm:$0xf]
        %v1836 = vld [vmem:[%s9 + $0x1c4] sm:$0xf]
        %v1837 = vld [vmem:[%s9 + $0x1c8] sm:$0xf]
        %v1838 = vld [vmem:[%s9 + $0x1cc] sm:$0xf]
        %v1839 = vld [vmem:[%s9 + $0x1d0] sm:$0xf]
        %v1840 = vld [vmem:[%s9 + $0x1d4] sm:$0xf]
        %v1841 = vld [vmem:[%s9 + $0x1d8] sm:$0xf]
        %v1842 = vld [vmem:[%s9 + $0x1dc] sm:$0xf]
        %v1843 = vld [vmem:[%s9 + $0x1e0] sm:$0xf]
        %v1844 = vld [vmem:[%s9 + $0x1e4] sm:$0xf]
        %v1845 = vld [vmem:[%s9 + $0x1e8] sm:$0xf]
        %v1846 = vld [vmem:[%s9 + $0x1ec] sm:$0xf]
        %v1847 = vld [vmem:[%s9 + $0x1f0] sm:$0xf]
        %v1848 = vld [vmem:[%s9 + $0x1f4] sm:$0xf]
        %v1849 = vld [vmem:[%s9 + $0x1f8] sm:$0xf]
        %v1850 = vld [vmem:[%s9 + $0x1fc] sm:$0xf]
        %v1915 = vunpack.c.l.b16 %v1787
        %v1916 = vunpack.c.l.b16 %v1788
        %v1917 = vunpack.c.l.b16 %v1789
        %v1918 = vunpack.c.l.b16 %v1790
        %v1919 = vunpack.c.l.b16 %v1791
        %v1920 = vunpack.c.l.b16 %v1792
        %v1921 = vunpack.c.l.b16 %v1793
        %v1922 = vunpack.c.l.b16 %v1794
        %v1923 = vunpack.c.l.b16 %v1795
        %v1924 = vunpack.c.l.b16 %v1796
        %v1925 = vunpack.c.l.b16 %v1797
        %v1926 = vunpack.c.l.b16 %v1798
        %v1927 = vunpack.c.l.b16 %v1799
        %v1928 = vunpack.c.l.b16 %v1800
        %v1929 = vunpack.c.l.b16 %v1801
        %v1930 = vunpack.c.l.b16 %v1802
        %v1931 = vunpack.c.l.b16 %v1803
        %v1932 = vunpack.c.l.b16 %v1804
        %v1933 = vunpack.c.l.b16 %v1805
        %v1934 = vunpack.c.l.b16 %v1806
        %v1935 = vunpack.c.l.b16 %v1807
        %v1936 = vunpack.c.l.b16 %v1808
        %v1937 = vunpack.c.l.b16 %v1809
        %v1938 = vunpack.c.l.b16 %v1810
        %v1939 = vunpack.c.l.b16 %v1811
        %v1940 = vunpack.c.l.b16 %v1812
        %v1941 = vunpack.c.l.b16 %v1813
        %v1942 = vunpack.c.l.b16 %v1814
        %v1943 = vunpack.c.l.b16 %v1815
        %v1944 = vunpack.c.l.b16 %v1816
        %v1945 = vunpack.c.l.b16 %v1817
        %v1946 = vunpack.c.l.b16 %v1818
        %v1947 = vunpack.c.l.b16 %v1819
        %v1948 = vunpack.c.l.b16 %v1820
        %v1949 = vunpack.c.l.b16 %v1821
        %v1950 = vunpack.c.l.b16 %v1822
        %v1951 = vunpack.c.l.b16 %v1823
        %v1952 = vunpack.c.l.b16 %v1824
        %v1953 = vunpack.c.l.b16 %v1825
        %v1954 = vunpack.c.l.b16 %v1826
        %v1955 = vunpack.c.l.b16 %v1827
        %v1956 = vunpack.c.l.b16 %v1828
        %v1957 = vunpack.c.l.b16 %v1829
        %v1958 = vunpack.c.l.b16 %v1830
        %v1959 = vunpack.c.l.b16 %v1831
        %v1960 = vunpack.c.l.b16 %v1832
        %v1961 = vunpack.c.l.b16 %v1833
        %v1962 = vunpack.c.l.b16 %v1834
        %v1963 = vunpack.c.l.b16 %v1835
        %v1964 = vunpack.c.l.b16 %v1836
        %v1965 = vunpack.c.l.b16 %v1837
        %v1966 = vunpack.c.l.b16 %v1838
        %v1967 = vunpack.c.l.b16 %v1839
        %v1968 = vunpack.c.l.b16 %v1840
        %v1969 = vunpack.c.l.b16 %v1841
        %v1970 = vunpack.c.l.b16 %v1842
        %v1971 = vunpack.c.l.b16 %v1843
        %v1972 = vunpack.c.l.b16 %v1844
        %v1973 = vunpack.c.l.b16 %v1845
        %v1974 = vunpack.c.l.b16 %v1846
        %v1975 = vunpack.c.l.b16 %v1847
        %v1976 = vunpack.c.l.b16 %v1848
        %v1977 = vunpack.c.l.b16 %v1849
        %v1978 = vunpack.c.l.b16 %v1850
        %v1979 = vpack.c.b16 %v1916, %v1915
        %v1980 = vpack.c.b16 %v1918, %v1917
        %v1981 = vpack.c.b16 %v1920, %v1919
        %v1982 = vpack.c.b16 %v1922, %v1921
        %v1983 = vpack.c.b16 %v1924, %v1923
        %v1984 = vpack.c.b16 %v1926, %v1925
        %v1985 = vpack.c.b16 %v1928, %v1927
        %v1986 = vpack.c.b16 %v1930, %v1929
        %v1987 = vpack.c.b16 %v1932, %v1931
        %v1988 = vpack.c.b16 %v1934, %v1933
        %v1989 = vpack.c.b16 %v1936, %v1935
        %v1990 = vpack.c.b16 %v1938, %v1937
        %v1991 = vpack.c.b16 %v1940, %v1939
        %v1992 = vpack.c.b16 %v1942, %v1941
        %v1993 = vpack.c.b16 %v1944, %v1943
        %v1994 = vpack.c.b16 %v1946, %v1945
        %v1995 = vpack.c.b16 %v1948, %v1947
        %v1996 = vpack.c.b16 %v1950, %v1949
        %v1997 = vpack.c.b16 %v1952, %v1951
        %v1998 = vpack.c.b16 %v1954, %v1953
        %v1999 = vpack.c.b16 %v1956, %v1955
        %v2000 = vpack.c.b16 %v1958, %v1957
        %v2001 = vpack.c.b16 %v1960, %v1959
        %v2002 = vpack.c.b16 %v1962, %v1961
        %v2003 = vpack.c.b16 %v1964, %v1963
        %v2004 = vpack.c.b16 %v1966, %v1965
        %v2005 = vpack.c.b16 %v1968, %v1967
        %v2006 = vpack.c.b16 %v1970, %v1969
        %v2007 = vpack.c.b16 %v1972, %v1971
        %v2008 = vpack.c.b16 %v1974, %v1973
        %v2009 = vpack.c.b16 %v1976, %v1975
        %v2010 = vpack.c.b16 %v1978, %v1977
        %2043 = vmatprep.subr.bf16.mxu0 0
        %2044 = vmatpush1.bf16.msra.mxu0 %v1979
        %2045 = vmatprep.subr.bf16.mxu0 0
        %2046 = vmatpush1.bf16.msra.mxu0 %v1980
        %2047 = vmatprep.subr.bf16.mxu0 0
        %2048 = vmatpush1.bf16.msra.mxu0 %v1981
        %2049 = vmatprep.subr.bf16.mxu0 0
        %2050 = vmatpush1.bf16.msra.mxu0 %v1982
        %2051 = vmatprep.subr.bf16.mxu0 0
        %2052 = vmatpush1.bf16.msra.mxu0 %v1983
        %2053 = vmatprep.subr.bf16.mxu0 0
        %2054 = vmatpush1.bf16.msra.mxu0 %v1984
        %2055 = vmatprep.subr.bf16.mxu0 0
        %2056 = vmatpush1.bf16.msra.mxu0 %v1985
        %2057 = vmatprep.subr.bf16.mxu0 0
        %2058 = vmatpush1.bf16.msra.mxu0 %v1986
        %2059 = vmatprep.subr.bf16.mxu0 0
        %2060 = vmatpush1.bf16.msra.mxu0 %v1987
        %2061 = vmatprep.subr.bf16.mxu0 0
        %2062 = vmatpush1.bf16.msra.mxu0 %v1988
        %2063 = vmatprep.subr.bf16.mxu0 0
        %2064 = vmatpush1.bf16.msra.mxu0 %v1989
        %2065 = vmatprep.subr.bf16.mxu0 0
        %2066 = vmatpush1.bf16.msra.mxu0 %v1990
        %2067 = vmatprep.subr.bf16.mxu0 0
        %2068 = vmatpush1.bf16.msra.mxu0 %v1991
        %2069 = vmatprep.subr.bf16.mxu0 0
        %2070 = vmatpush1.bf16.msra.mxu0 %v1992
        %2071 = vmatprep.subr.bf16.mxu0 0
        %2072 = vmatpush1.bf16.msra.mxu0 %v1993
        %2073 = vmatprep.subr.bf16.mxu0 0
        %2074 = vmatpush1.bf16.msra.mxu0 %v1994
        %2075 = vmatprep.mubr.bf16.mxu0 %v1784
        %2076 = vmatmul.mubr.bf16.gmra.mrb[0].mxu0 %v1783
        %v2077 = vpop.f32.mrb[0].mxu0
        %v2078 = vadd.f32 0.0, %v2077
        %v2079 = vpop.f32.mrb[0].mxu0
        %v2080 = vpop.f32.mrb[0].mxu0
        %v2081 = vpop.f32.mrb[0].mxu0
        %2082 = vdwg.mxu0
        %2083 = vmatprep.subr.bf16.mxu0 0
        %2084 = vmatpush1.bf16.msra.mxu0 %v1995
        %2085 = vmatprep.subr.bf16.mxu0 0
        %2086 = vmatpush1.bf16.msra.mxu0 %v1996
        %2087 = vmatprep.subr.bf16.mxu0 0
        %2088 = vmatpush1.bf16.msra.mxu0 %v1997
        %2089 = vmatprep.subr.bf16.mxu0 0
        %2090 = vmatpush1.bf16.msra.mxu0 %v1998
        %2091 = vmatprep.subr.bf16.mxu0 0
        %2092 = vmatpush1.bf16.msra.mxu0 %v1999
        %2093 = vmatprep.subr.bf16.mxu0 0
        %2094 = vmatpush1.bf16.msra.mxu0 %v2000
        %2095 = vmatprep.subr.bf16.mxu0 0
        %2096 = vmatpush1.bf16.msra.mxu0 %v2001
        %2097 = vmatprep.subr.bf16.mxu0 0
        %2098 = vmatpush1.bf16.msra.mxu0 %v2002
        %2099 = vmatprep.subr.bf16.mxu0 0
        %2100 = vmatpush1.bf16.msra.mxu0 %v2003
        %2101 = vmatprep.subr.bf16.mxu0 0
        %2102 = vmatpush1.bf16.msra.mxu0 %v2004
        %2103 = vmatprep.subr.bf16.mxu0 0
        %2104 = vmatpush1.bf16.msra.mxu0 %v2005
        %2105 = vmatprep.subr.bf16.mxu0 0
        %2106 = vmatpush1.bf16.msra.mxu0 %v2006
        %2107 = vmatprep.subr.bf16.mxu0 0
        %2108 = vmatpush1.bf16.msra.mxu0 %v2007
        %2109 = vmatprep.subr.bf16.mxu0 0
        %2110 = vmatpush1.bf16.msra.mxu0 %v2008
        %2111 = vmatprep.subr.bf16.mxu0 0
        %2112 = vmatpush1.bf16.msra.mxu0 %v2009
        %2113 = vmatprep.subr.bf16.mxu0 0
        %2114 = vmatpush1.bf16.msra.mxu0 %v2010
        %2115 = vmatprep.mubr.bf16.mxu0 %v1786
        %2116 = vmatmul.mubr.bf16.gmra.mrb[0].mxu0 %v1785
        %v2117 = vpop.f32.mrb[0].mxu0
        %v2118 = vadd.f32 %v2078, %v2117
        %v2119 = vpop.f32.mrb[0].mxu0
        %v2120 = vpop.f32.mrb[0].mxu0
        %v2121 = vpop.f32.mrb[0].mxu0
        %2122 = vdwg.mxu0
        %v2187 = vunpack.c.l.b16 %v1515
        %v2188 = vunpack.c.l.b16 %v1516
        %v2189 = vunpack.c.l.b16 %v1517
        %v2190 = vunpack.c.l.b16 %v1518
        %v2191 = vunpack.c.l.b16 %v1519
        %v2192 = vunpack.c.l.b16 %v1520
        %v2193 = vunpack.c.l.b16 %v1521
        %v2194 = vunpack.c.l.b16 %v1522
        %v2195 = vunpack.c.l.b16 %v1523
        %v2196 = vunpack.c.l.b16 %v1524
        %v2197 = vunpack.c.l.b16 %v1525
        %v2198 = vunpack.c.l.b16 %v1526
        %v2199 = vunpack.c.l.b16 %v1527
        %v2200 = vunpack.c.l.b16 %v1528
        %v2201 = vunpack.c.l.b16 %v1529
        %v2202 = vunpack.c.l.b16 %v1530
        %v2203 = vunpack.c.l.b16 %v1531
        %v2204 = vunpack.c.l.b16 %v1532
        %v2205 = vunpack.c.l.b16 %v1533
        %v2206 = vunpack.c.l.b16 %v1534
        %v2207 = vunpack.c.l.b16 %v1535
        %v2208 = vunpack.c.l.b16 %v1536
        %v2209 = vunpack.c.l.b16 %v1537
        %v2210 = vunpack.c.l.b16 %v1538
        %v2211 = vunpack.c.l.b16 %v1539
        %v2212 = vunpack.c.l.b16 %v1540
        %v2213 = vunpack.c.l.b16 %v1541
        %v2214 = vunpack.c.l.b16 %v1542
        %v2215 = vunpack.c.l.b16 %v1543
        %v2216 = vunpack.c.l.b16 %v1544
        %v2217 = vunpack.c.l.b16 %v1545
        %v2218 = vunpack.c.l.b16 %v1546
        %v2219 = vunpack.c.l.b16 %v1547
        %v2220 = vunpack.c.l.b16 %v1548
        %v2221 = vunpack.c.l.b16 %v1549
        %v2222 = vunpack.c.l.b16 %v1550
        %v2223 = vunpack.c.l.b16 %v1551
        %v2224 = vunpack.c.l.b16 %v1552
        %v2225 = vunpack.c.l.b16 %v1553
        %v2226 = vunpack.c.l.b16 %v1554
        %v2227 = vunpack.c.l.b16 %v1555
        %v2228 = vunpack.c.l.b16 %v1556
        %v2229 = vunpack.c.l.b16 %v1557
        %v2230 = vunpack.c.l.b16 %v1558
        %v2231 = vunpack.c.l.b16 %v1559
        %v2232 = vunpack.c.l.b16 %v1560
        %v2233 = vunpack.c.l.b16 %v1561
        %v2234 = vunpack.c.l.b16 %v1562
        %v2235 = vunpack.c.l.b16 %v1563
        %v2236 = vunpack.c.l.b16 %v1564
        %v2237 = vunpack.c.l.b16 %v1565
        %v2238 = vunpack.c.l.b16 %v1566
        %v2239 = vunpack.c.l.b16 %v1567
        %v2240 = vunpack.c.l.b16 %v1568
        %v2241 = vunpack.c.l.b16 %v1569
        %v2242 = vunpack.c.l.b16 %v1570
        %v2243 = vunpack.c.l.b16 %v1571
        %v2244 = vunpack.c.l.b16 %v1572
        %v2245 = vunpack.c.l.b16 %v1573
        %v2246 = vunpack.c.l.b16 %v1574
        %v2247 = vunpack.c.l.b16 %v1575
        %v2248 = vunpack.c.l.b16 %v1576
        %v2249 = vunpack.c.l.b16 %v1577
        %v2250 = vunpack.c.l.b16 %v1578
        %v2251 = vpack.c.b16 %v2188, %v2187
        %v2252 = vpack.c.b16 %v2190, %v2189
        %v2253 = vpack.c.b16 %v2192, %v2191
        %v2254 = vpack.c.b16 %v2194, %v2193
        %v2255 = vpack.c.b16 %v2196, %v2195
        %v2256 = vpack.c.b16 %v2198, %v2197
        %v2257 = vpack.c.b16 %v2200, %v2199
        %v2258 = vpack.c.b16 %v2202, %v2201
        %v2259 = vpack.c.b16 %v2204, %v2203
        %v2260 = vpack.c.b16 %v2206, %v2205
        %v2261 = vpack.c.b16 %v2208, %v2207
        %v2262 = vpack.c.b16 %v2210, %v2209
        %v2263 = vpack.c.b16 %v2212, %v2211
        %v2264 = vpack.c.b16 %v2214, %v2213
        %v2265 = vpack.c.b16 %v2216, %v2215
        %v2266 = vpack.c.b16 %v2218, %v2217
        %v2267 = vpack.c.b16 %v2220, %v2219
        %v2268 = vpack.c.b16 %v2222, %v2221
        %v2269 = vpack.c.b16 %v2224, %v2223
        %v2270 = vpack.c.b16 %v2226, %v2225
        %v2271 = vpack.c.b16 %v2228, %v2227
        %v2272 = vpack.c.b16 %v2230, %v2229
        %v2273 = vpack.c.b16 %v2232, %v2231
        %v2274 = vpack.c.b16 %v2234, %v2233
        %v2275 = vpack.c.b16 %v2236, %v2235
        %v2276 = vpack.c.b16 %v2238, %v2237
        %v2277 = vpack.c.b16 %v2240, %v2239
        %v2278 = vpack.c.b16 %v2242, %v2241
        %v2279 = vpack.c.b16 %v2244, %v2243
        %v2280 = vpack.c.b16 %v2246, %v2245
        %v2281 = vpack.c.b16 %v2248, %v2247
        %v2282 = vpack.c.b16 %v2250, %v2249
        %2315 = vmatprep.subr.bf16.mxu0 0
        %2316 = vmatpush1.bf16.msra.mxu0 %v2251
        %2317 = vmatprep.subr.bf16.mxu0 0
        %2318 = vmatpush1.bf16.msra.mxu0 %v2252
        %2319 = vmatprep.subr.bf16.mxu0 0
        %2320 = vmatpush1.bf16.msra.mxu0 %v2253
        %2321 = vmatprep.subr.bf16.mxu0 0
        %2322 = vmatpush1.bf16.msra.mxu0 %v2254
        %2323 = vmatprep.subr.bf16.mxu0 0
        %2324 = vmatpush1.bf16.msra.mxu0 %v2255
        %2325 = vmatprep.subr.bf16.mxu0 0
        %2326 = vmatpush1.bf16.msra.mxu0 %v2256
        %2327 = vmatprep.subr.bf16.mxu0 0
        %2328 = vmatpush1.bf16.msra.mxu0 %v2257
        %2329 = vmatprep.subr.bf16.mxu0 0
        %2330 = vmatpush1.bf16.msra.mxu0 %v2258
        %2331 = vmatprep.subr.bf16.mxu0 0
        %2332 = vmatpush1.bf16.msra.mxu0 %v2259
        %2333 = vmatprep.subr.bf16.mxu0 0
        %2334 = vmatpush1.bf16.msra.mxu0 %v2260
        %2335 = vmatprep.subr.bf16.mxu0 0
        %2336 = vmatpush1.bf16.msra.mxu0 %v2261
        %2337 = vmatprep.subr.bf16.mxu0 0
        %2338 = vmatpush1.bf16.msra.mxu0 %v2262
        %2339 = vmatprep.subr.bf16.mxu0 0
        %2340 = vmatpush1.bf16.msra.mxu0 %v2263
        %2341 = vmatprep.subr.bf16.mxu0 0
        %2342 = vmatpush1.bf16.msra.mxu0 %v2264
        %2343 = vmatprep.subr.bf16.mxu0 0
        %2344 = vmatpush1.bf16.msra.mxu0 %v2265
        %2345 = vmatprep.subr.bf16.mxu0 0
        %2346 = vmatpush1.bf16.msra.mxu0 %v2266
        %2347 = vmatprep.mubr.bf16.mxu0 %v1512
        %2348 = vmatmul.mubr.bf16.gmra.mrb[0].mxu0 %v1511
        %v2349 = vpop.f32.mrb[0].mxu0
        %v2350 = vadd.f32 %v2118, %v2349
        %v2351 = vpop.f32.mrb[0].mxu0
        %v2352 = vpop.f32.mrb[0].mxu0
        %v2353 = vpop.f32.mrb[0].mxu0
        %2354 = vdwg.mxu0
        %2355 = vmatprep.subr.bf16.mxu0 0
        %2356 = vmatpush1.bf16.msra.mxu0 %v2267
        %2357 = vmatprep.subr.bf16.mxu0 0
        %2358 = vmatpush1.bf16.msra.mxu0 %v2268
        %2359 = vmatprep.subr.bf16.mxu0 0
        %2360 = vmatpush1.bf16.msra.mxu0 %v2269
        %2361 = vmatprep.subr.bf16.mxu0 0
        %2362 = vmatpush1.bf16.msra.mxu0 %v2270
        %2363 = vmatprep.subr.bf16.mxu0 0
        %2364 = vmatpush1.bf16.msra.mxu0 %v2271
        %2365 = vmatprep.subr.bf16.mxu0 0
        %2366 = vmatpush1.bf16.msra.mxu0 %v2272
        %2367 = vmatprep.subr.bf16.mxu0 0
        %2368 = vmatpush1.bf16.msra.mxu0 %v2273
        %2369 = vmatprep.subr.bf16.mxu0 0
        %2370 = vmatpush1.bf16.msra.mxu0 %v2274
        %2371 = vmatprep.subr.bf16.mxu0 0
        %2372 = vmatpush1.bf16.msra.mxu0 %v2275
        %2373 = vmatprep.subr.bf16.mxu0 0
        %2374 = vmatpush1.bf16.msra.mxu0 %v2276
        %2375 = vmatprep.subr.bf16.mxu0 0
        %2376 = vmatpush1.bf16.msra.mxu0 %v2277
        %2377 = vmatprep.subr.bf16.mxu0 0
        %2378 = vmatpush1.bf16.msra.mxu0 %v2278
        %2379 = vmatprep.subr.bf16.mxu0 0
        %2380 = vmatpush1.bf16.msra.mxu0 %v2279
        %2381 = vmatprep.subr.bf16.mxu0 0
        %2382 = vmatpush1.bf16.msra.mxu0 %v2280
        %2383 = vmatprep.subr.bf16.mxu0 0
        %2384 = vmatpush1.bf16.msra.mxu0 %v2281
        %2385 = vmatprep.subr.bf16.mxu0 0
        %2386 = vmatpush1.bf16.msra.mxu0 %v2282
        %2387 = vmatprep.mubr.bf16.mxu0 %v1514
        %2388 = vmatmul.mubr.bf16.gmra.mrb[0].mxu0 %v1513
        %v2389 = vpop.f32.mrb[0].mxu0
        %v2390 = vadd.f32 %v2350, %v2389
        %v2391 = vpop.f32.mrb[0].mxu0
        %v2392 = vpop.f32.mrb[0].mxu0
        %v2393 = vpop.f32.mrb[0].mxu0
        %2394 = vdwg.mxu0
        %v2395 = vld [vmem:[%s7 + $0x20] sm:$0xff]
        %v2396 = vld [vmem:[%s7 + $0x28] sm:$0xff]
        %v2397 = vld [vmem:[%s7 + $0x60] sm:$0xff]
        %v2398 = vld [vmem:[%s7 + $0x68] sm:$0xff]
        %v2399 = vld [vmem:[%s7 + $0xa0] sm:$0xff]
        %v2400 = vld [vmem:[%s7 + $0xa8] sm:$0xff]
        %v2401 = vld [vmem:[%s7 + $0xe0] sm:$0xff]
        %v2402 = vld [vmem:[%s7 + $0xe8] sm:$0xff]
        %v2403 = vld [vmem:[%s7 + $0x120] sm:$0xff]
        %v2404 = vld [vmem:[%s7 + $0x128] sm:$0xff]
        %v2405 = vld [vmem:[%s7 + $0x160] sm:$0xff]
        %v2406 = vld [vmem:[%s7 + $0x168] sm:$0xff]
        %v2407 = vld [vmem:[%s7 + $0x1a0] sm:$0xff]
        %v2408 = vld [vmem:[%s7 + $0x1a8] sm:$0xff]
        %v2409 = vld [vmem:[%s7 + $0x1e0] sm:$0xff]
        %v2410 = vld [vmem:[%s7 + $0x1e8] sm:$0xff]
        %v2411 = vld [vmem:[%s8 + $0x8] sm:$0xf]
        %v2413 = vlaneseq
        %v2414 = vshrl.u32 %v2413, 7
        %v2415 = vsub.s32 0, %v2414
        %v2416 = vrot.slane %v2411, %v2415
        %v2417 = vlaneseq
        %v2418 = vshrl.u32 %v2417, 7
        %v2419 = vsub.s32 1, %v2418
        %v2420 = vrot.slane %v2411, %v2419
        %v2421 = vlaneseq
        %v2422 = vshrl.u32 %v2421, 7
        %v2423 = vsub.s32 2, %v2422
        %v2424 = vrot.slane %v2411, %v2423
        %v2425 = vlaneseq
        %v2426 = vshrl.u32 %v2425, 7
        %v2427 = vsub.s32 3, %v2426
        %v2428 = vrot.slane %v2411, %v2427
        %v2449 = vunpack.c.l.b16 %v2395
        %v2450 = vunpack.c.h.b16 %v2395
        %v2451 = vunpack.c.l.b16 %v2396
        %v2452 = vunpack.c.h.b16 %v2396
        %v2453 = vunpack.c.l.b16 %v2397
        %v2454 = vunpack.c.h.b16 %v2397
        %v2455 = vunpack.c.l.b16 %v2398
        %v2456 = vunpack.c.h.b16 %v2398
        %v2457 = vunpack.c.l.b16 %v2399
        %v2458 = vunpack.c.h.b16 %v2399
        %v2459 = vunpack.c.l.b16 %v2400
        %v2460 = vunpack.c.h.b16 %v2400
        %v2461 = vunpack.c.l.b16 %v2401
        %v2462 = vunpack.c.h.b16 %v2401
        %v2463 = vunpack.c.l.b16 %v2402
        %v2464 = vunpack.c.h.b16 %v2402
        %v2465 = vunpack.c.l.b16 %v2403
        %v2466 = vunpack.c.h.b16 %v2403
        %v2467 = vunpack.c.l.b16 %v2404
        %v2468 = vunpack.c.h.b16 %v2404
        %v2469 = vunpack.c.l.b16 %v2405
        %v2470 = vunpack.c.h.b16 %v2405
        %v2471 = vunpack.c.l.b16 %v2406
        %v2472 = vunpack.c.h.b16 %v2406
        %v2473 = vunpack.c.l.b16 %v2407
        %v2474 = vunpack.c.h.b16 %v2407
        %v2475 = vunpack.c.l.b16 %v2408
        %v2476 = vunpack.c.h.b16 %v2408
        %v2477 = vunpack.c.l.b16 %v2409
        %v2478 = vunpack.c.h.b16 %v2409
        %v2479 = vunpack.c.l.b16 %v2410
        %v2480 = vunpack.c.h.b16 %v2410
        %v2481 = vpack.c.b16 %v2453, %v2449
        %v2482 = vpack.c.b16 %v2454, %v2450
        %v2483 = vpack.c.b16 %v2455, %v2451
        %v2484 = vpack.c.b16 %v2456, %v2452
        %v2485 = vpack.c.b16 %v2461, %v2457
        %v2486 = vpack.c.b16 %v2462, %v2458
        %v2487 = vpack.c.b16 %v2463, %v2459
        %v2488 = vpack.c.b16 %v2464, %v2460
        %v2489 = vpack.c.b16 %v2469, %v2465
        %v2490 = vpack.c.b16 %v2470, %v2466
        %v2491 = vpack.c.b16 %v2471, %v2467
        %v2492 = vpack.c.b16 %v2472, %v2468
        %v2493 = vpack.c.b16 %v2477, %v2473
        %v2494 = vpack.c.b16 %v2478, %v2474
        %v2495 = vpack.c.b16 %v2479, %v2475
        %v2496 = vpack.c.b16 %v2480, %v2476
        %2513 = vmatprep.subr.bf16.mxu0 %v2482
        %2514 = vmatpush1.bf16.msra.mxu0 %v2481
        %2515 = vmatprep.subr.bf16.mxu0 %v2486
        %2516 = vmatpush1.bf16.msra.mxu0 %v2485
        %2517 = vmatprep.subr.bf16.mxu0 %v2490
        %2518 = vmatpush1.bf16.msra.mxu0 %v2489
        %2519 = vmatprep.subr.bf16.mxu0 %v2494
        %2520 = vmatpush1.bf16.msra.mxu0 %v2493
        %2521 = vmatprep.subr.bf16.mxu0 0
        %2522 = vmatpush1.bf16.msra.mxu0 0
        %2523 = vmatprep.subr.bf16.mxu0 0
        %2524 = vmatpush1.bf16.msra.mxu0 0
        %2525 = vmatprep.subr.bf16.mxu0 0
        %2526 = vmatpush1.bf16.msra.mxu0 0
        %2527 = vmatprep.subr.bf16.mxu0 0
        %2528 = vmatpush1.bf16.msra.mxu0 0
        %2529 = vmatprep.subr.bf16.mxu0 0
        %2530 = vmatpush1.bf16.msra.mxu0 0
        %2531 = vmatprep.subr.bf16.mxu0 0
        %2532 = vmatpush1.bf16.msra.mxu0 0
        %2533 = vmatprep.subr.bf16.mxu0 0
        %2534 = vmatpush1.bf16.msra.mxu0 0
        %2535 = vmatprep.subr.bf16.mxu0 0
        %2536 = vmatpush1.bf16.msra.mxu0 0
        %2537 = vmatprep.subr.bf16.mxu0 0
        %2538 = vmatpush1.bf16.msra.mxu0 0
        %2539 = vmatprep.subr.bf16.mxu0 0
        %2540 = vmatpush1.bf16.msra.mxu0 0
        %2541 = vmatprep.subr.bf16.mxu0 0
        %2542 = vmatpush1.bf16.msra.mxu0 0
        %2543 = vmatprep.subr.bf16.mxu0 0
        %2544 = vmatpush1.bf16.msra.mxu0 0
        %2545 = vmatprep.mubr.bf16.mxu0 0
        %2546 = vmatmul.mubr.bf16.gmra.mrb[0].mxu0 %v1423
        %v2547 = vpop.f32.mrb[0].mxu0
        %v2548 = vadd.f32 %v2416, %v2547
        %v2549 = vpop.f32.mrb[0].mxu0
        %v2550 = vadd.f32 %v2420, %v2549
        %v2551 = vpop.f32.mrb[0].mxu0
        %v2552 = vpop.f32.mrb[0].mxu0
        %2553 = vdwg.mxu0
        %2554 = vmatprep.subr.bf16.mxu0 %v2484
        %2555 = vmatpush1.bf16.msra.mxu0 %v2483
        %2556 = vmatprep.subr.bf16.mxu0 %v2488
        %2557 = vmatpush1.bf16.msra.mxu0 %v2487
        %2558 = vmatprep.subr.bf16.mxu0 %v2492
        %2559 = vmatpush1.bf16.msra.mxu0 %v2491
        %2560 = vmatprep.subr.bf16.mxu0 %v2496
        %2561 = vmatpush1.bf16.msra.mxu0 %v2495
        %2562 = vmatprep.subr.bf16.mxu0 0
        %2563 = vmatpush1.bf16.msra.mxu0 0
        %2564 = vmatprep.subr.bf16.mxu0 0
        %2565 = vmatpush1.bf16.msra.mxu0 0
        %2566 = vmatprep.subr.bf16.mxu0 0
        %2567 = vmatpush1.bf16.msra.mxu0 0
        %2568 = vmatprep.subr.bf16.mxu0 0
        %2569 = vmatpush1.bf16.msra.mxu0 0
        %2570 = vmatprep.subr.bf16.mxu0 0
        %2571 = vmatpush1.bf16.msra.mxu0 0
        %2572 = vmatprep.subr.bf16.mxu0 0
        %2573 = vmatpush1.bf16.msra.mxu0 0
        %2574 = vmatprep.subr.bf16.mxu0 0
        %2575 = vmatpush1.bf16.msra.mxu0 0
        %2576 = vmatprep.subr.bf16.mxu0 0
        %2577 = vmatpush1.bf16.msra.mxu0 0
        %2578 = vmatprep.subr.bf16.mxu0 0
        %2579 = vmatpush1.bf16.msra.mxu0 0
        %2580 = vmatprep.subr.bf16.mxu0 0
        %2581 = vmatpush1.bf16.msra.mxu0 0
        %2582 = vmatprep.subr.bf16.mxu0 0
        %2583 = vmatpush1.bf16.msra.mxu0 0
        %2584 = vmatprep.subr.bf16.mxu0 0
        %2585 = vmatpush1.bf16.msra.mxu0 0
        %2586 = vmatprep.mubr.bf16.mxu0 0
        %2587 = vmatmul.mubr.bf16.gmra.mrb[0].mxu0 %v1423
        %v2588 = vpop.f32.mrb[0].mxu0
        %v2589 = vadd.f32 %v2424, %v2588
        %v2590 = vpop.f32.mrb[0].mxu0
        %v2591 = vadd.f32 %v2428, %v2590
        %v2592 = vpop.f32.mrb[0].mxu0
        %v2593 = vpop.f32.mrb[0].mxu0
        %2594 = vdwg.mxu0
        %v2595 = vmax.f32 %v2548, 0.0
        %v2596 = vmax.f32 %v2550, 0.0
        %v2597 = vmax.f32 %v2589, 0.0
        %v2598 = vmax.f32 %v2591, 0.0
        %v2599 = vpack.c.bf16 %v2595, %v2595
        %v2600 = vpack.c.bf16 %v2596, %v2596
        %v2601 = vpack.c.bf16 %v2597, %v2597
        %v2602 = vpack.c.bf16 %v2598, %v2598
        %v2603 = vld [vmem:[%s9 + $0x200] sm:$0xf]
        %v2604 = vld [vmem:[%s9 + $0x204] sm:$0xf]
        %v2605 = vld [vmem:[%s9 + $0x208] sm:$0xf]
        %v2606 = vld [vmem:[%s9 + $0x20c] sm:$0xf]
        %v2607 = vld [vmem:[%s9 + $0x210] sm:$0xf]
        %v2608 = vld [vmem:[%s9 + $0x214] sm:$0xf]
        %v2609 = vld [vmem:[%s9 + $0x218] sm:$0xf]
        %v2610 = vld [vmem:[%s9 + $0x21c] sm:$0xf]
        %v2611 = vld [vmem:[%s9 + $0x220] sm:$0xf]
        %v2612 = vld [vmem:[%s9 + $0x224] sm:$0xf]
        %v2613 = vld [vmem:[%s9 + $0x228] sm:$0xf]
        %v2614 = vld [vmem:[%s9 + $0x22c] sm:$0xf]
        %v2615 = vld [vmem:[%s9 + $0x230] sm:$0xf]
        %v2616 = vld [vmem:[%s9 + $0x234] sm:$0xf]
        %v2617 = vld [vmem:[%s9 + $0x238] sm:$0xf]
        %v2618 = vld [vmem:[%s9 + $0x23c] sm:$0xf]
        %v2619 = vld [vmem:[%s9 + $0x240] sm:$0xf]
        %v2620 = vld [vmem:[%s9 + $0x244] sm:$0xf]
        %v2621 = vld [vmem:[%s9 + $0x248] sm:$0xf]
        %v2622 = vld [vmem:[%s9 + $0x24c] sm:$0xf]
        %v2623 = vld [vmem:[%s9 + $0x250] sm:$0xf]
        %v2624 = vld [vmem:[%s9 + $0x254] sm:$0xf]
        %v2625 = vld [vmem:[%s9 + $0x258] sm:$0xf]
        %v2626 = vld [vmem:[%s9 + $0x25c] sm:$0xf]
        %v2627 = vld [vmem:[%s9 + $0x260] sm:$0xf]
        %v2628 = vld [vmem:[%s9 + $0x264] sm:$0xf]
        %v2629 = vld [vmem:[%s9 + $0x268] sm:$0xf]
        %v2630 = vld [vmem:[%s9 + $0x26c] sm:$0xf]
        %v2631 = vld [vmem:[%s9 + $0x270] sm:$0xf]
        %v2632 = vld [vmem:[%s9 + $0x274] sm:$0xf]
        %v2633 = vld [vmem:[%s9 + $0x278] sm:$0xf]
        %v2634 = vld [vmem:[%s9 + $0x27c] sm:$0xf]
        %v2635 = vld [vmem:[%s9 + $0x280] sm:$0xf]
        %v2636 = vld [vmem:[%s9 + $0x284] sm:$0xf]
        %v2637 = vld [vmem:[%s9 + $0x288] sm:$0xf]
        %v2638 = vld [vmem:[%s9 + $0x28c] sm:$0xf]
        %v2639 = vld [vmem:[%s9 + $0x290] sm:$0xf]
        %v2640 = vld [vmem:[%s9 + $0x294] sm:$0xf]
        %v2641 = vld [vmem:[%s9 + $0x298] sm:$0xf]
        %v2642 = vld [vmem:[%s9 + $0x29c] sm:$0xf]
        %v2643 = vld [vmem:[%s9 + $0x2a0] sm:$0xf]
        %v2644 = vld [vmem:[%s9 + $0x2a4] sm:$0xf]
        %v2645 = vld [vmem:[%s9 + $0x2a8] sm:$0xf]
        %v2646 = vld [vmem:[%s9 + $0x2ac] sm:$0xf]
        %v2647 = vld [vmem:[%s9 + $0x2b0] sm:$0xf]
        %v2648 = vld [vmem:[%s9 + $0x2b4] sm:$0xf]
        %v2649 = vld [vmem:[%s9 + $0x2b8] sm:$0xf]
        %v2650 = vld [vmem:[%s9 + $0x2bc] sm:$0xf]
        %v2651 = vld [vmem:[%s9 + $0x2c0] sm:$0xf]
        %v2652 = vld [vmem:[%s9 + $0x2c4] sm:$0xf]
        %v2653 = vld [vmem:[%s9 + $0x2c8] sm:$0xf]
        %v2654 = vld [vmem:[%s9 + $0x2cc] sm:$0xf]
        %v2655 = vld [vmem:[%s9 + $0x2d0] sm:$0xf]
        %v2656 = vld [vmem:[%s9 + $0x2d4] sm:$0xf]
        %v2657 = vld [vmem:[%s9 + $0x2d8] sm:$0xf]
        %v2658 = vld [vmem:[%s9 + $0x2dc] sm:$0xf]
        %v2659 = vld [vmem:[%s9 + $0x2e0] sm:$0xf]
        %v2660 = vld [vmem:[%s9 + $0x2e4] sm:$0xf]
        %v2661 = vld [vmem:[%s9 + $0x2e8] sm:$0xf]
        %v2662 = vld [vmem:[%s9 + $0x2ec] sm:$0xf]
        %v2663 = vld [vmem:[%s9 + $0x2f0] sm:$0xf]
        %v2664 = vld [vmem:[%s9 + $0x2f4] sm:$0xf]
        %v2665 = vld [vmem:[%s9 + $0x2f8] sm:$0xf]
        %v2666 = vld [vmem:[%s9 + $0x2fc] sm:$0xf]
        %v2731 = vunpack.c.l.b16 %v2603
        %v2732 = vunpack.c.l.b16 %v2604
        %v2733 = vunpack.c.l.b16 %v2605
        %v2734 = vunpack.c.l.b16 %v2606
        %v2735 = vunpack.c.l.b16 %v2607
        %v2736 = vunpack.c.l.b16 %v2608
        %v2737 = vunpack.c.l.b16 %v2609
        %v2738 = vunpack.c.l.b16 %v2610
        %v2739 = vunpack.c.l.b16 %v2611
        %v2740 = vunpack.c.l.b16 %v2612
        %v2741 = vunpack.c.l.b16 %v2613
        %v2742 = vunpack.c.l.b16 %v2614
        %v2743 = vunpack.c.l.b16 %v2615
        %v2744 = vunpack.c.l.b16 %v2616
        %v2745 = vunpack.c.l.b16 %v2617
        %v2746 = vunpack.c.l.b16 %v2618
        %v2747 = vunpack.c.l.b16 %v2619
        %v2748 = vunpack.c.l.b16 %v2620
        %v2749 = vunpack.c.l.b16 %v2621
        %v2750 = vunpack.c.l.b16 %v2622
        %v2751 = vunpack.c.l.b16 %v2623
        %v2752 = vunpack.c.l.b16 %v2624
        %v2753 = vunpack.c.l.b16 %v2625
        %v2754 = vunpack.c.l.b16 %v2626
        %v2755 = vunpack.c.l.b16 %v2627
        %v2756 = vunpack.c.l.b16 %v2628
        %v2757 = vunpack.c.l.b16 %v2629
        %v2758 = vunpack.c.l.b16 %v2630
        %v2759 = vunpack.c.l.b16 %v2631
        %v2760 = vunpack.c.l.b16 %v2632
        %v2761 = vunpack.c.l.b16 %v2633
        %v2762 = vunpack.c.l.b16 %v2634
        %v2763 = vunpack.c.l.b16 %v2635
        %v2764 = vunpack.c.l.b16 %v2636
        %v2765 = vunpack.c.l.b16 %v2637
        %v2766 = vunpack.c.l.b16 %v2638
        %v2767 = vunpack.c.l.b16 %v2639
        %v2768 = vunpack.c.l.b16 %v2640
        %v2769 = vunpack.c.l.b16 %v2641
        %v2770 = vunpack.c.l.b16 %v2642
        %v2771 = vunpack.c.l.b16 %v2643
        %v2772 = vunpack.c.l.b16 %v2644
        %v2773 = vunpack.c.l.b16 %v2645
        %v2774 = vunpack.c.l.b16 %v2646
        %v2775 = vunpack.c.l.b16 %v2647
        %v2776 = vunpack.c.l.b16 %v2648
        %v2777 = vunpack.c.l.b16 %v2649
        %v2778 = vunpack.c.l.b16 %v2650
        %v2779 = vunpack.c.l.b16 %v2651
        %v2780 = vunpack.c.l.b16 %v2652
        %v2781 = vunpack.c.l.b16 %v2653
        %v2782 = vunpack.c.l.b16 %v2654
        %v2783 = vunpack.c.l.b16 %v2655
        %v2784 = vunpack.c.l.b16 %v2656
        %v2785 = vunpack.c.l.b16 %v2657
        %v2786 = vunpack.c.l.b16 %v2658
        %v2787 = vunpack.c.l.b16 %v2659
        %v2788 = vunpack.c.l.b16 %v2660
        %v2789 = vunpack.c.l.b16 %v2661
        %v2790 = vunpack.c.l.b16 %v2662
        %v2791 = vunpack.c.l.b16 %v2663
        %v2792 = vunpack.c.l.b16 %v2664
        %v2793 = vunpack.c.l.b16 %v2665
        %v2794 = vunpack.c.l.b16 %v2666
        %v2795 = vpack.c.b16 %v2732, %v2731
        %v2796 = vpack.c.b16 %v2734, %v2733
        %v2797 = vpack.c.b16 %v2736, %v2735
        %v2798 = vpack.c.b16 %v2738, %v2737
        %v2799 = vpack.c.b16 %v2740, %v2739
        %v2800 = vpack.c.b16 %v2742, %v2741
        %v2801 = vpack.c.b16 %v2744, %v2743
        %v2802 = vpack.c.b16 %v2746, %v2745
        %v2803 = vpack.c.b16 %v2748, %v2747
        %v2804 = vpack.c.b16 %v2750, %v2749
        %v2805 = vpack.c.b16 %v2752, %v2751
        %v2806 = vpack.c.b16 %v2754, %v2753
        %v2807 = vpack.c.b16 %v2756, %v2755
        %v2808 = vpack.c.b16 %v2758, %v2757
        %v2809 = vpack.c.b16 %v2760, %v2759
        %v2810 = vpack.c.b16 %v2762, %v2761
        %v2811 = vpack.c.b16 %v2764, %v2763
        %v2812 = vpack.c.b16 %v2766, %v2765
        %v2813 = vpack.c.b16 %v2768, %v2767
        %v2814 = vpack.c.b16 %v2770, %v2769
        %v2815 = vpack.c.b16 %v2772, %v2771
        %v2816 = vpack.c.b16 %v2774, %v2773
        %v2817 = vpack.c.b16 %v2776, %v2775
        %v2818 = vpack.c.b16 %v2778, %v2777
        %v2819 = vpack.c.b16 %v2780, %v2779
        %v2820 = vpack.c.b16 %v2782, %v2781
        %v2821 = vpack.c.b16 %v2784, %v2783
        %v2822 = vpack.c.b16 %v2786, %v2785
        %v2823 = vpack.c.b16 %v2788, %v2787
        %v2824 = vpack.c.b16 %v2790, %v2789
        %v2825 = vpack.c.b16 %v2792, %v2791
        %v2826 = vpack.c.b16 %v2794, %v2793
        %2859 = vmatprep.subr.bf16.mxu0 0
        %2860 = vmatpush1.bf16.msra.mxu0 %v2795
        %2861 = vmatprep.subr.bf16.mxu0 0
        %2862 = vmatpush1.bf16.msra.mxu0 %v2796
        %2863 = vmatprep.subr.bf16.mxu0 0
        %2864 = vmatpush1.bf16.msra.mxu0 %v2797
        %2865 = vmatprep.subr.bf16.mxu0 0
        %2866 = vmatpush1.bf16.msra.mxu0 %v2798
        %2867 = vmatprep.subr.bf16.mxu0 0
        %2868 = vmatpush1.bf16.msra.mxu0 %v2799
        %2869 = vmatprep.subr.bf16.mxu0 0
        %2870 = vmatpush1.bf16.msra.mxu0 %v2800
        %2871 = vmatprep.subr.bf16.mxu0 0
        %2872 = vmatpush1.bf16.msra.mxu0 %v2801
        %2873 = vmatprep.subr.bf16.mxu0 0
        %2874 = vmatpush1.bf16.msra.mxu0 %v2802
        %2875 = vmatprep.subr.bf16.mxu0 0
        %2876 = vmatpush1.bf16.msra.mxu0 %v2803
        %2877 = vmatprep.subr.bf16.mxu0 0
        %2878 = vmatpush1.bf16.msra.mxu0 %v2804
        %2879 = vmatprep.subr.bf16.mxu0 0
        %2880 = vmatpush1.bf16.msra.mxu0 %v2805
        %2881 = vmatprep.subr.bf16.mxu0 0
        %2882 = vmatpush1.bf16.msra.mxu0 %v2806
        %2883 = vmatprep.subr.bf16.mxu0 0
        %2884 = vmatpush1.bf16.msra.mxu0 %v2807
        %2885 = vmatprep.subr.bf16.mxu0 0
        %2886 = vmatpush1.bf16.msra.mxu0 %v2808
        %2887 = vmatprep.subr.bf16.mxu0 0
        %2888 = vmatpush1.bf16.msra.mxu0 %v2809
        %2889 = vmatprep.subr.bf16.mxu0 0
        %2890 = vmatpush1.bf16.msra.mxu0 %v2810
        %2891 = vmatprep.mubr.bf16.mxu0 %v2600
        %2892 = vmatmul.mubr.bf16.gmra.mrb[0].mxu0 %v2599
        %v2893 = vpop.f32.mrb[0].mxu0
        %v2894 = vadd.f32 0.0, %v2893
        %v2895 = vpop.f32.mrb[0].mxu0
        %v2896 = vpop.f32.mrb[0].mxu0
        %v2897 = vpop.f32.mrb[0].mxu0
        %2898 = vdwg.mxu0
        %2899 = vmatprep.subr.bf16.mxu0 0
        %2900 = vmatpush1.bf16.msra.mxu0 %v2811
        %2901 = vmatprep.subr.bf16.mxu0 0
        %2902 = vmatpush1.bf16.msra.mxu0 %v2812
        %2903 = vmatprep.subr.bf16.mxu0 0
        %2904 = vmatpush1.bf16.msra.mxu0 %v2813
        %2905 = vmatprep.subr.bf16.mxu0 0
        %2906 = vmatpush1.bf16.msra.mxu0 %v2814
        %2907 = vmatprep.subr.bf16.mxu0 0
        %2908 = vmatpush1.bf16.msra.mxu0 %v2815
        %2909 = vmatprep.subr.bf16.mxu0 0
        %2910 = vmatpush1.bf16.msra.mxu0 %v2816
        %2911 = vmatprep.subr.bf16.mxu0 0
        %2912 = vmatpush1.bf16.msra.mxu0 %v2817
        %2913 = vmatprep.subr.bf16.mxu0 0
        %2914 = vmatpush1.bf16.msra.mxu0 %v2818
        %2915 = vmatprep.subr.bf16.mxu0 0
        %2916 = vmatpush1.bf16.msra.mxu0 %v2819
        %2917 = vmatprep.subr.bf16.mxu0 0
        %2918 = vmatpush1.bf16.msra.mxu0 %v2820
        %2919 = vmatprep.subr.bf16.mxu0 0
        %2920 = vmatpush1.bf16.msra.mxu0 %v2821
        %2921 = vmatprep.subr.bf16.mxu0 0
        %2922 = vmatpush1.bf16.msra.mxu0 %v2822
        %2923 = vmatprep.subr.bf16.mxu0 0
        %2924 = vmatpush1.bf16.msra.mxu0 %v2823
        %2925 = vmatprep.subr.bf16.mxu0 0
        %2926 = vmatpush1.bf16.msra.mxu0 %v2824
        %2927 = vmatprep.subr.bf16.mxu0 0
        %2928 = vmatpush1.bf16.msra.mxu0 %v2825
        %2929 = vmatprep.subr.bf16.mxu0 0
        %2930 = vmatpush1.bf16.msra.mxu0 %v2826
        %2931 = vmatprep.mubr.bf16.mxu0 %v2602
        %2932 = vmatmul.mubr.bf16.gmra.mrb[0].mxu0 %v2601
        %v2933 = vpop.f32.mrb[0].mxu0
        %v2934 = vadd.f32 %v2894, %v2933
        %v2935 = vpop.f32.mrb[0].mxu0
        %v2936 = vpop.f32.mrb[0].mxu0
        %v2937 = vpop.f32.mrb[0].mxu0
        %2938 = vdwg.mxu0
        %v2939 = vadd.f32 %v2390, %v2934
        %v2940 = vld [vmem:[%s7 + $0x30] sm:$0xff]
        %v2941 = vld [vmem:[%s7 + $0x38] sm:$0xff]
        %v2942 = vld [vmem:[%s7 + $0x70] sm:$0xff]
        %v2943 = vld [vmem:[%s7 + $0x78] sm:$0xff]
        %v2944 = vld [vmem:[%s7 + $0xb0] sm:$0xff]
        %v2945 = vld [vmem:[%s7 + $0xb8] sm:$0xff]
        %v2946 = vld [vmem:[%s7 + $0xf0] sm:$0xff]
        %v2947 = vld [vmem:[%s7 + $0xf8] sm:$0xff]
        %v2948 = vld [vmem:[%s7 + $0x130] sm:$0xff]
        %v2949 = vld [vmem:[%s7 + $0x138] sm:$0xff]
        %v2950 = vld [vmem:[%s7 + $0x170] sm:$0xff]
        %v2951 = vld [vmem:[%s7 + $0x178] sm:$0xff]
        %v2952 = vld [vmem:[%s7 + $0x1b0] sm:$0xff]
        %v2953 = vld [vmem:[%s7 + $0x1b8] sm:$0xff]
        %v2954 = vld [vmem:[%s7 + $0x1f0] sm:$0xff]
        %v2955 = vld [vmem:[%s7 + $0x1f8] sm:$0xff]
        %v2956 = vld [vmem:[%s8 + $0xc] sm:$0xf]
        %v2958 = vlaneseq
        %v2959 = vshrl.u32 %v2958, 7
        %v2960 = vsub.s32 0, %v2959
        %v2961 = vrot.slane %v2956, %v2960
        %v2962 = vlaneseq
        %v2963 = vshrl.u32 %v2962, 7
        %v2964 = vsub.s32 1, %v2963
        %v2965 = vrot.slane %v2956, %v2964
        %v2966 = vlaneseq
        %v2967 = vshrl.u32 %v2966, 7
        %v2968 = vsub.s32 2, %v2967
        %v2969 = vrot.slane %v2956, %v2968
        %v2970 = vlaneseq
        %v2971 = vshrl.u32 %v2970, 7
        %v2972 = vsub.s32 3, %v2971
        %v2973 = vrot.slane %v2956, %v2972
        %v2994 = vunpack.c.l.b16 %v2940
        %v2995 = vunpack.c.h.b16 %v2940
        %v2996 = vunpack.c.l.b16 %v2941
        %v2997 = vunpack.c.h.b16 %v2941
        %v2998 = vunpack.c.l.b16 %v2942
        %v2999 = vunpack.c.h.b16 %v2942
        %v3000 = vunpack.c.l.b16 %v2943
        %v3001 = vunpack.c.h.b16 %v2943
        %v3002 = vunpack.c.l.b16 %v2944
        %v3003 = vunpack.c.h.b16 %v2944
        %v3004 = vunpack.c.l.b16 %v2945
        %v3005 = vunpack.c.h.b16 %v2945
        %v3006 = vunpack.c.l.b16 %v2946
        %v3007 = vunpack.c.h.b16 %v2946
        %v3008 = vunpack.c.l.b16 %v2947
        %v3009 = vunpack.c.h.b16 %v2947
        %v3010 = vunpack.c.l.b16 %v2948
        %v3011 = vunpack.c.h.b16 %v2948
        %v3012 = vunpack.c.l.b16 %v2949
        %v3013 = vunpack.c.h.b16 %v2949
        %v3014 = vunpack.c.l.b16 %v2950
        %v3015 = vunpack.c.h.b16 %v2950
        %v3016 = vunpack.c.l.b16 %v2951
        %v3017 = vunpack.c.h.b16 %v2951
        %v3018 = vunpack.c.l.b16 %v2952
        %v3019 = vunpack.c.h.b16 %v2952
        %v3020 = vunpack.c.l.b16 %v2953
        %v3021 = vunpack.c.h.b16 %v2953
        %v3022 = vunpack.c.l.b16 %v2954
        %v3023 = vunpack.c.h.b16 %v2954
        %v3024 = vunpack.c.l.b16 %v2955
        %v3025 = vunpack.c.h.b16 %v2955
        %v3026 = vpack.c.b16 %v2998, %v2994
        %v3027 = vpack.c.b16 %v2999, %v2995
        %v3028 = vpack.c.b16 %v3000, %v2996
        %v3029 = vpack.c.b16 %v3001, %v2997
        %v3030 = vpack.c.b16 %v3006, %v3002
        %v3031 = vpack.c.b16 %v3007, %v3003
        %v3032 = vpack.c.b16 %v3008, %v3004
        %v3033 = vpack.c.b16 %v3009, %v3005
        %v3034 = vpack.c.b16 %v3014, %v3010
        %v3035 = vpack.c.b16 %v3015, %v3011
        %v3036 = vpack.c.b16 %v3016, %v3012
        %v3037 = vpack.c.b16 %v3017, %v3013
        %v3038 = vpack.c.b16 %v3022, %v3018
        %v3039 = vpack.c.b16 %v3023, %v3019
        %v3040 = vpack.c.b16 %v3024, %v3020
        %v3041 = vpack.c.b16 %v3025, %v3021
        %3058 = vmatprep.subr.bf16.mxu0 %v3027
        %3059 = vmatpush1.bf16.msra.mxu0 %v3026
        %3060 = vmatprep.subr.bf16.mxu0 %v3031
        %3061 = vmatpush1.bf16.msra.mxu0 %v3030
        %3062 = vmatprep.subr.bf16.mxu0 %v3035
        %3063 = vmatpush1.bf16.msra.mxu0 %v3034
        %3064 = vmatprep.subr.bf16.mxu0 %v3039
        %3065 = vmatpush1.bf16.msra.mxu0 %v3038
        %3066 = vmatprep.subr.bf16.mxu0 0
        %3067 = vmatpush1.bf16.msra.mxu0 0
        %3068 = vmatprep.subr.bf16.mxu0 0
        %3069 = vmatpush1.bf16.msra.mxu0 0
        %3070 = vmatprep.subr.bf16.mxu0 0
        %3071 = vmatpush1.bf16.msra.mxu0 0
        %3072 = vmatprep.subr.bf16.mxu0 0
        %3073 = vmatpush1.bf16.msra.mxu0 0
        %3074 = vmatprep.subr.bf16.mxu0 0
        %3075 = vmatpush1.bf16.msra.mxu0 0
        %3076 = vmatprep.subr.bf16.mxu0 0
        %3077 = vmatpush1.bf16.msra.mxu0 0
        %3078 = vmatprep.subr.bf16.mxu0 0
        %3079 = vmatpush1.bf16.msra.mxu0 0
        %3080 = vmatprep.subr.bf16.mxu0 0
        %3081 = vmatpush1.bf16.msra.mxu0 0
        %3082 = vmatprep.subr.bf16.mxu0 0
        %3083 = vmatpush1.bf16.msra.mxu0 0
        %3084 = vmatprep.subr.bf16.mxu0 0
        %3085 = vmatpush1.bf16.msra.mxu0 0
        %3086 = vmatprep.subr.bf16.mxu0 0
        %3087 = vmatpush1.bf16.msra.mxu0 0
        %3088 = vmatprep.subr.bf16.mxu0 0
        %3089 = vmatpush1.bf16.msra.mxu0 0
        %3090 = vmatprep.mubr.bf16.mxu0 0
        %3091 = vmatmul.mubr.bf16.gmra.mrb[0].mxu0 %v1423
        %v3092 = vpop.f32.mrb[0].mxu0
        %v3093 = vadd.f32 %v2961, %v3092
        %v3094 = vpop.f32.mrb[0].mxu0
        %v3095 = vadd.f32 %v2965, %v3094
        %v3096 = vpop.f32.mrb[0].mxu0
        %v3097 = vpop.f32.mrb[0].mxu0
        %3098 = vdwg.mxu0
        %3099 = vmatprep.subr.bf16.mxu0 %v3029
        %3100 = vmatpush1.bf16.msra.mxu0 %v3028
        %3101 = vmatprep.subr.bf16.mxu0 %v3033
        %3102 = vmatpush1.bf16.msra.mxu0 %v3032
        %3103 = vmatprep.subr.bf16.mxu0 %v3037
        %3104 = vmatpush1.bf16.msra.mxu0 %v3036
        %3105 = vmatprep.subr.bf16.mxu0 %v3041
        %3106 = vmatpush1.bf16.msra.mxu0 %v3040
        %3107 = vmatprep.subr.bf16.mxu0 0
        %3108 = vmatpush1.bf16.msra.mxu0 0
        %3109 = vmatprep.subr.bf16.mxu0 0
        %3110 = vmatpush1.bf16.msra.mxu0 0
        %3111 = vmatprep.subr.bf16.mxu0 0
        %3112 = vmatpush1.bf16.msra.mxu0 0
        %3113 = vmatprep.subr.bf16.mxu0 0
        %3114 = vmatpush1.bf16.msra.mxu0 0
        %3115 = vmatprep.subr.bf16.mxu0 0
        %3116 = vmatpush1.bf16.msra.mxu0 0
        %3117 = vmatprep.subr.bf16.mxu0 0
        %3118 = vmatpush1.bf16.msra.mxu0 0
        %3119 = vmatprep.subr.bf16.mxu0 0
        %3120 = vmatpush1.bf16.msra.mxu0 0
        %3121 = vmatprep.subr.bf16.mxu0 0
        %3122 = vmatpush1.bf16.msra.mxu0 0
        %3123 = vmatprep.subr.bf16.mxu0 0
        %3124 = vmatpush1.bf16.msra.mxu0 0
        %3125 = vmatprep.subr.bf16.mxu0 0
        %3126 = vmatpush1.bf16.msra.mxu0 0
        %3127 = vmatprep.subr.bf16.mxu0 0
        %3128 = vmatpush1.bf16.msra.mxu0 0
        %3129 = vmatprep.subr.bf16.mxu0 0
        %3130 = vmatpush1.bf16.msra.mxu0 0
        %3131 = vmatprep.mubr.bf16.mxu0 0
        %3132 = vmatmul.mubr.bf16.gmra.mrb[0].mxu0 %v1423
        %v3133 = vpop.f32.mrb[0].mxu0
        %v3134 = vadd.f32 %v2969, %v3133
        %v3135 = vpop.f32.mrb[0].mxu0
        %v3136 = vadd.f32 %v2973, %v3135
        %v3137 = vpop.f32.mrb[0].mxu0
        %v3138 = vpop.f32.mrb[0].mxu0
        %3139 = vdwg.mxu0
        %v3140 = vmax.f32 %v3093, 0.0
        %v3141 = vmax.f32 %v3095, 0.0
        %v3142 = vmax.f32 %v3134, 0.0
        %v3143 = vmax.f32 %v3136, 0.0
        %v3144 = vpack.c.bf16 %v3140, %v3140
        %v3145 = vpack.c.bf16 %v3141, %v3141
        %v3146 = vpack.c.bf16 %v3142, %v3142
        %v3147 = vpack.c.bf16 %v3143, %v3143
        %v3148 = vld [vmem:[%s9 + $0x300] sm:$0xf]
        %v3149 = vld [vmem:[%s9 + $0x304] sm:$0xf]
        %v3150 = vld [vmem:[%s9 + $0x308] sm:$0xf]
        %v3151 = vld [vmem:[%s9 + $0x30c] sm:$0xf]
        %v3152 = vld [vmem:[%s9 + $0x310] sm:$0xf]
        %v3153 = vld [vmem:[%s9 + $0x314] sm:$0xf]
        %v3154 = vld [vmem:[%s9 + $0x318] sm:$0xf]
        %v3155 = vld [vmem:[%s9 + $0x31c] sm:$0xf]
        %v3156 = vld [vmem:[%s9 + $0x320] sm:$0xf]
        %v3157 = vld [vmem:[%s9 + $0x324] sm:$0xf]
        %v3158 = vld [vmem:[%s9 + $0x328] sm:$0xf]
        %v3159 = vld [vmem:[%s9 + $0x32c] sm:$0xf]
        %v3160 = vld [vmem:[%s9 + $0x330] sm:$0xf]
        %v3161 = vld [vmem:[%s9 + $0x334] sm:$0xf]
        %v3162 = vld [vmem:[%s9 + $0x338] sm:$0xf]
        %v3163 = vld [vmem:[%s9 + $0x33c] sm:$0xf]
        %v3164 = vld [vmem:[%s9 + $0x340] sm:$0xf]
        %v3165 = vld [vmem:[%s9 + $0x344] sm:$0xf]
        %v3166 = vld [vmem:[%s9 + $0x348] sm:$0xf]
        %v3167 = vld [vmem:[%s9 + $0x34c] sm:$0xf]
        %v3168 = vld [vmem:[%s9 + $0x350] sm:$0xf]
        %v3169 = vld [vmem:[%s9 + $0x354] sm:$0xf]
        %v3170 = vld [vmem:[%s9 + $0x358] sm:$0xf]
        %v3171 = vld [vmem:[%s9 + $0x35c] sm:$0xf]
        %v3172 = vld [vmem:[%s9 + $0x360] sm:$0xf]
        %v3173 = vld [vmem:[%s9 + $0x364] sm:$0xf]
        %v3174 = vld [vmem:[%s9 + $0x368] sm:$0xf]
        %v3175 = vld [vmem:[%s9 + $0x36c] sm:$0xf]
        %v3176 = vld [vmem:[%s9 + $0x370] sm:$0xf]
        %v3177 = vld [vmem:[%s9 + $0x374] sm:$0xf]
        %v3178 = vld [vmem:[%s9 + $0x378] sm:$0xf]
        %v3179 = vld [vmem:[%s9 + $0x37c] sm:$0xf]
        %v3180 = vld [vmem:[%s9 + $0x380] sm:$0xf]
        %v3181 = vld [vmem:[%s9 + $0x384] sm:$0xf]
        %v3182 = vld [vmem:[%s9 + $0x388] sm:$0xf]
        %v3183 = vld [vmem:[%s9 + $0x38c] sm:$0xf]
        %v3184 = vld [vmem:[%s9 + $0x390] sm:$0xf]
        %v3185 = vld [vmem:[%s9 + $0x394] sm:$0xf]
        %v3186 = vld [vmem:[%s9 + $0x398] sm:$0xf]
        %v3187 = vld [vmem:[%s9 + $0x39c] sm:$0xf]
        %v3188 = vld [vmem:[%s9 + $0x3a0] sm:$0xf]
        %v3189 = vld [vmem:[%s9 + $0x3a4] sm:$0xf]
        %v3190 = vld [vmem:[%s9 + $0x3a8] sm:$0xf]
        %v3191 = vld [vmem:[%s9 + $0x3ac] sm:$0xf]
        %v3192 = vld [vmem:[%s9 + $0x3b0] sm:$0xf]
        %v3193 = vld [vmem:[%s9 + $0x3b4] sm:$0xf]
        %v3194 = vld [vmem:[%s9 + $0x3b8] sm:$0xf]
        %v3195 = vld [vmem:[%s9 + $0x3bc] sm:$0xf]
        %v3196 = vld [vmem:[%s9 + $0x3c0] sm:$0xf]
        %v3197 = vld [vmem:[%s9 + $0x3c4] sm:$0xf]
        %v3198 = vld [vmem:[%s9 + $0x3c8] sm:$0xf]
        %v3199 = vld [vmem:[%s9 + $0x3cc] sm:$0xf]
        %v3200 = vld [vmem:[%s9 + $0x3d0] sm:$0xf]
        %v3201 = vld [vmem:[%s9 + $0x3d4] sm:$0xf]
        %v3202 = vld [vmem:[%s9 + $0x3d8] sm:$0xf]
        %v3203 = vld [vmem:[%s9 + $0x3dc] sm:$0xf]
        %v3204 = vld [vmem:[%s9 + $0x3e0] sm:$0xf]
        %v3205 = vld [vmem:[%s9 + $0x3e4] sm:$0xf]
        %v3206 = vld [vmem:[%s9 + $0x3e8] sm:$0xf]
        %v3207 = vld [vmem:[%s9 + $0x3ec] sm:$0xf]
        %v3208 = vld [vmem:[%s9 + $0x3f0] sm:$0xf]
        %v3209 = vld [vmem:[%s9 + $0x3f4] sm:$0xf]
        %v3210 = vld [vmem:[%s9 + $0x3f8] sm:$0xf]
        %v3211 = vld [vmem:[%s9 + $0x3fc] sm:$0xf]
        %v3276 = vunpack.c.l.b16 %v3148
        %v3277 = vunpack.c.l.b16 %v3149
        %v3278 = vunpack.c.l.b16 %v3150
        %v3279 = vunpack.c.l.b16 %v3151
        %v3280 = vunpack.c.l.b16 %v3152
        %v3281 = vunpack.c.l.b16 %v3153
        %v3282 = vunpack.c.l.b16 %v3154
        %v3283 = vunpack.c.l.b16 %v3155
        %v3284 = vunpack.c.l.b16 %v3156
        %v3285 = vunpack.c.l.b16 %v3157
        %v3286 = vunpack.c.l.b16 %v3158
        %v3287 = vunpack.c.l.b16 %v3159
        %v3288 = vunpack.c.l.b16 %v3160
        %v3289 = vunpack.c.l.b16 %v3161
        %v3290 = vunpack.c.l.b16 %v3162
        %v3291 = vunpack.c.l.b16 %v3163
        %v3292 = vunpack.c.l.b16 %v3164
        %v3293 = vunpack.c.l.b16 %v3165
        %v3294 = vunpack.c.l.b16 %v3166
        %v3295 = vunpack.c.l.b16 %v3167
        %v3296 = vunpack.c.l.b16 %v3168
        %v3297 = vunpack.c.l.b16 %v3169
        %v3298 = vunpack.c.l.b16 %v3170
        %v3299 = vunpack.c.l.b16 %v3171
        %v3300 = vunpack.c.l.b16 %v3172
        %v3301 = vunpack.c.l.b16 %v3173
        %v3302 = vunpack.c.l.b16 %v3174
        %v3303 = vunpack.c.l.b16 %v3175
        %v3304 = vunpack.c.l.b16 %v3176
        %v3305 = vunpack.c.l.b16 %v3177
        %v3306 = vunpack.c.l.b16 %v3178
        %v3307 = vunpack.c.l.b16 %v3179
        %v3308 = vunpack.c.l.b16 %v3180
        %v3309 = vunpack.c.l.b16 %v3181
        %v3310 = vunpack.c.l.b16 %v3182
        %v3311 = vunpack.c.l.b16 %v3183
        %v3312 = vunpack.c.l.b16 %v3184
        %v3313 = vunpack.c.l.b16 %v3185
        %v3314 = vunpack.c.l.b16 %v3186
        %v3315 = vunpack.c.l.b16 %v3187
        %v3316 = vunpack.c.l.b16 %v3188
        %v3317 = vunpack.c.l.b16 %v3189
        %v3318 = vunpack.c.l.b16 %v3190
        %v3319 = vunpack.c.l.b16 %v3191
        %v3320 = vunpack.c.l.b16 %v3192
        %v3321 = vunpack.c.l.b16 %v3193
        %v3322 = vunpack.c.l.b16 %v3194
        %v3323 = vunpack.c.l.b16 %v3195
        %v3324 = vunpack.c.l.b16 %v3196
        %v3325 = vunpack.c.l.b16 %v3197
        %v3326 = vunpack.c.l.b16 %v3198
        %v3327 = vunpack.c.l.b16 %v3199
        %v3328 = vunpack.c.l.b16 %v3200
        %v3329 = vunpack.c.l.b16 %v3201
        %v3330 = vunpack.c.l.b16 %v3202
        %v3331 = vunpack.c.l.b16 %v3203
        %v3332 = vunpack.c.l.b16 %v3204
        %v3333 = vunpack.c.l.b16 %v3205
        %v3334 = vunpack.c.l.b16 %v3206
        %v3335 = vunpack.c.l.b16 %v3207
        %v3336 = vunpack.c.l.b16 %v3208
        %v3337 = vunpack.c.l.b16 %v3209
        %v3338 = vunpack.c.l.b16 %v3210
        %v3339 = vunpack.c.l.b16 %v3211
        %v3340 = vpack.c.b16 %v3277, %v3276
        %v3341 = vpack.c.b16 %v3279, %v3278
        %v3342 = vpack.c.b16 %v3281, %v3280
        %v3343 = vpack.c.b16 %v3283, %v3282
        %v3344 = vpack.c.b16 %v3285, %v3284
        %v3345 = vpack.c.b16 %v3287, %v3286
        %v3346 = vpack.c.b16 %v3289, %v3288
        %v3347 = vpack.c.b16 %v3291, %v3290
        %v3348 = vpack.c.b16 %v3293, %v3292
        %v3349 = vpack.c.b16 %v3295, %v3294
        %v3350 = vpack.c.b16 %v3297, %v3296
        %v3351 = vpack.c.b16 %v3299, %v3298
        %v3352 = vpack.c.b16 %v3301, %v3300
        %v3353 = vpack.c.b16 %v3303, %v3302
        %v3354 = vpack.c.b16 %v3305, %v3304
        %v3355 = vpack.c.b16 %v3307, %v3306
        %v3356 = vpack.c.b16 %v3309, %v3308
        %v3357 = vpack.c.b16 %v3311, %v3310
        %v3358 = vpack.c.b16 %v3313, %v3312
        %v3359 = vpack.c.b16 %v3315, %v3314
        %v3360 = vpack.c.b16 %v3317, %v3316
        %v3361 = vpack.c.b16 %v3319, %v3318
        %v3362 = vpack.c.b16 %v3321, %v3320
        %v3363 = vpack.c.b16 %v3323, %v3322
        %v3364 = vpack.c.b16 %v3325, %v3324
        %v3365 = vpack.c.b16 %v3327, %v3326
        %v3366 = vpack.c.b16 %v3329, %v3328
        %v3367 = vpack.c.b16 %v3331, %v3330
        %v3368 = vpack.c.b16 %v3333, %v3332
        %v3369 = vpack.c.b16 %v3335, %v3334
        %v3370 = vpack.c.b16 %v3337, %v3336
        %v3371 = vpack.c.b16 %v3339, %v3338
        %3404 = vmatprep.subr.bf16.mxu0 0
        %3405 = vmatpush1.bf16.msra.mxu0 %v3340
        %3406 = vmatprep.subr.bf16.mxu0 0
        %3407 = vmatpush1.bf16.msra.mxu0 %v3341
        %3408 = vmatprep.subr.bf16.mxu0 0
        %3409 = vmatpush1.bf16.msra.mxu0 %v3342
        %3410 = vmatprep.subr.bf16.mxu0 0
        %3411 = vmatpush1.bf16.msra.mxu0 %v3343
        %3412 = vmatprep.subr.bf16.mxu0 0
        %3413 = vmatpush1.bf16.msra.mxu0 %v3344
        %3414 = vmatprep.subr.bf16.mxu0 0
        %3415 = vmatpush1.bf16.msra.mxu0 %v3345
        %3416 = vmatprep.subr.bf16.mxu0 0
        %3417 = vmatpush1.bf16.msra.mxu0 %v3346
        %3418 = vmatprep.subr.bf16.mxu0 0
        %3419 = vmatpush1.bf16.msra.mxu0 %v3347
        %3420 = vmatprep.subr.bf16.mxu0 0
        %3421 = vmatpush1.bf16.msra.mxu0 %v3348
        %3422 = vmatprep.subr.bf16.mxu0 0
        %3423 = vmatpush1.bf16.msra.mxu0 %v3349
        %3424 = vmatprep.subr.bf16.mxu0 0
        %3425 = vmatpush1.bf16.msra.mxu0 %v3350
        %3426 = vmatprep.subr.bf16.mxu0 0
        %3427 = vmatpush1.bf16.msra.mxu0 %v3351
        %3428 = vmatprep.subr.bf16.mxu0 0
        %3429 = vmatpush1.bf16.msra.mxu0 %v3352
        %3430 = vmatprep.subr.bf16.mxu0 0
        %3431 = vmatpush1.bf16.msra.mxu0 %v3353
        %3432 = vmatprep.subr.bf16.mxu0 0
        %3433 = vmatpush1.bf16.msra.mxu0 %v3354
        %3434 = vmatprep.subr.bf16.mxu0 0
        %3435 = vmatpush1.bf16.msra.mxu0 %v3355
        %3436 = vmatprep.mubr.bf16.mxu0 %v3145
        %3437 = vmatmul.mubr.bf16.gmra.mrb[0].mxu0 %v3144
        %v3438 = vpop.f32.mrb[0].mxu0
        %v3439 = vadd.f32 0.0, %v3438
        %v3440 = vpop.f32.mrb[0].mxu0
        %v3441 = vpop.f32.mrb[0].mxu0
        %v3442 = vpop.f32.mrb[0].mxu0
        %3443 = vdwg.mxu0
        %3444 = vmatprep.subr.bf16.mxu0 0
        %3445 = vmatpush1.bf16.msra.mxu0 %v3356
        %3446 = vmatprep.subr.bf16.mxu0 0
        %3447 = vmatpush1.bf16.msra.mxu0 %v3357
        %3448 = vmatprep.subr.bf16.mxu0 0
        %3449 = vmatpush1.bf16.msra.mxu0 %v3358
        %3450 = vmatprep.subr.bf16.mxu0 0
        %3451 = vmatpush1.bf16.msra.mxu0 %v3359
        %3452 = vmatprep.subr.bf16.mxu0 0
        %3453 = vmatpush1.bf16.msra.mxu0 %v3360
        %3454 = vmatprep.subr.bf16.mxu0 0
        %3455 = vmatpush1.bf16.msra.mxu0 %v3361
        %3456 = vmatprep.subr.bf16.mxu0 0
        %3457 = vmatpush1.bf16.msra.mxu0 %v3362
        %3458 = vmatprep.subr.bf16.mxu0 0
        %3459 = vmatpush1.bf16.msra.mxu0 %v3363
        %3460 = vmatprep.subr.bf16.mxu0 0
        %3461 = vmatpush1.bf16.msra.mxu0 %v3364
        %3462 = vmatprep.subr.bf16.mxu0 0
        %3463 = vmatpush1.bf16.msra.mxu0 %v3365
        %3464 = vmatprep.subr.bf16.mxu0 0
        %3465 = vmatpush1.bf16.msra.mxu0 %v3366
        %3466 = vmatprep.subr.bf16.mxu0 0
        %3467 = vmatpush1.bf16.msra.mxu0 %v3367
        %3468 = vmatprep.subr.bf16.mxu0 0
        %3469 = vmatpush1.bf16.msra.mxu0 %v3368
        %3470 = vmatprep.subr.bf16.mxu0 0
        %3471 = vmatpush1.bf16.msra.mxu0 %v3369
        %3472 = vmatprep.subr.bf16.mxu0 0
        %3473 = vmatpush1.bf16.msra.mxu0 %v3370
        %3474 = vmatprep.subr.bf16.mxu0 0
        %3475 = vmatpush1.bf16.msra.mxu0 %v3371
        %3476 = vmatprep.mubr.bf16.mxu0 %v3147
        %3477 = vmatmul.mubr.bf16.gmra.mrb[0].mxu0 %v3146
        %v3478 = vpop.f32.mrb[0].mxu0
        %v3479 = vadd.f32 %v3439, %v3478
        %v3480 = vpop.f32.mrb[0].mxu0
        %v3481 = vpop.f32.mrb[0].mxu0
        %v3482 = vpop.f32.mrb[0].mxu0
        %3483 = vdwg.mxu0
        %v3484 = vadd.f32 %v2939, %v3479
        %v3485 = vadd.f32 %v1302, %v3484
        %v3486 = vld [vmem:[%s10] sm:$0x1]
        %v3488 = vlaneseq
        %v3489 = vshrl.u32 %v3488, 7
        %v3490 = vsub.s32 0, %v3489
        %v3491 = vrot.slane %v3486, %v3490
        %v3493 = vadd.f32 %v3485, %v3491
        %v3494 = vld [vmem:[%s11] sm:$0x1]
        %v3495 = vld [vmem:[%s12] sm:$0x1]
        %v3496 = vsel %vm1229, %v3493, 0.0
        %3497 = vadd.xlane.f32.xlu0 %v3496
        %v3498 = vpop.xlane.xlu0 %3497
        %v3499 = vmul.f32 %v3498, %v1278
        %v3500 = vsub.f32 %v3493, %v3499
        %v3501 = vmul.f32 %v3500, %v3500
        %v3502 = vsel %vm1229, %v3501, 0.0
        %3503 = vadd.xlane.f32.xlu0 %v3502
        %v3504 = vpop.xlane.xlu0 %3503
        %v3505 = vmul.f32 %v3504, %v1278
        %v3506 = vadd.f32 %v3505, 1e-05
        %v3507 = vrsqrt.pop %v3506
        %v3508 = vmul.f32 %v3500, %v3507
        %v3510 = vlaneseq
        %v3511 = vshrl.u32 %v3510, 7
        %v3512 = vsub.s32 0, %v3511
        %v3513 = vrot.slane %v3494, %v3512
        %v3515 = vmul.f32 %v3508, %v3513
        %v3517 = vlaneseq
        %v3518 = vshrl.u32 %v3517, 7
        %v3519 = vsub.s32 0, %v3518
        %v3520 = vrot.slane %v3495, %v3519
        %v3522 = vadd.f32 %v3515, %v3520
        %v3523 = vpack.c.bf16 %v3522, %v3522
        %s3524 = scalar_lea.vmem %s3, 32
        %v3525 = vld [vmem:[%s3524] sm:$0xf]
        %v3526 = vld [vmem:[%s3524 + $0x4] sm:$0xf]
        %v3527 = vld [vmem:[%s3524 + $0x8] sm:$0xf]
        %v3528 = vld [vmem:[%s3524 + $0xc] sm:$0xf]
        %v3529 = vld [vmem:[%s3524 + $0x10] sm:$0xf]
        %v3530 = vld [vmem:[%s3524 + $0x14] sm:$0xf]
        %v3531 = vld [vmem:[%s3524 + $0x18] sm:$0xf]
        %v3532 = vld [vmem:[%s3524 + $0x1c] sm:$0xf]
        %s3533 = scalar_lea.vmem %s4, 1
        %v3534 = vld [vmem:[%s3533] sm:$0x1]
        %v3536 = vlaneseq
        %v3537 = vshrl.u32 %v3536, 7
        %v3538 = vsub.s32 0, %v3537
        %v3539 = vrot.slane %v3534, %v3538
        %v3549 = vunpack.c.l.b16 %v3525
        %v3550 = vunpack.c.l.b16 %v3526
        %v3551 = vunpack.c.l.b16 %v3527
        %v3552 = vunpack.c.l.b16 %v3528
        %v3553 = vunpack.c.l.b16 %v3529
        %v3554 = vunpack.c.l.b16 %v3530
        %v3555 = vunpack.c.l.b16 %v3531
        %v3556 = vunpack.c.l.b16 %v3532
        %v3557 = vpack.c.b16 %v3550, %v3549
        %v3558 = vpack.c.b16 %v3552, %v3551
        %v3559 = vpack.c.b16 %v3554, %v3553
        %v3560 = vpack.c.b16 %v3556, %v3555
        %v3566 = vsel %vm1229, %v3523, 0
        %3568 = vmatprep.subr.bf16.mxu0 0
        %3569 = vmatpush1.bf16.msra.mxu0 %v3557
        %3570 = vmatprep.subr.bf16.mxu0 0
        %3571 = vmatpush1.bf16.msra.mxu0 %v3558
        %3572 = vmatprep.subr.bf16.mxu0 0
        %3573 = vmatpush1.bf16.msra.mxu0 %v3559
        %3574 = vmatprep.subr.bf16.mxu0 0
        %3575 = vmatpush1.bf16.msra.mxu0 %v3560
        %3576 = vmatprep.subr.bf16.mxu0 0
        %3577 = vmatpush1.bf16.msra.mxu0 0
        %3578 = vmatprep.subr.bf16.mxu0 0
        %3579 = vmatpush1.bf16.msra.mxu0 0
        %3580 = vmatprep.subr.bf16.mxu0 0
        %3581 = vmatpush1.bf16.msra.mxu0 0
        %3582 = vmatprep.subr.bf16.mxu0 0
        %3583 = vmatpush1.bf16.msra.mxu0 0
        %3584 = vmatprep.subr.bf16.mxu0 0
        %3585 = vmatpush1.bf16.msra.mxu0 0
        %3586 = vmatprep.subr.bf16.mxu0 0
        %3587 = vmatpush1.bf16.msra.mxu0 0
        %3588 = vmatprep.subr.bf16.mxu0 0
        %3589 = vmatpush1.bf16.msra.mxu0 0
        %3590 = vmatprep.subr.bf16.mxu0 0
        %3591 = vmatpush1.bf16.msra.mxu0 0
        %3592 = vmatprep.subr.bf16.mxu0 0
        %3593 = vmatpush1.bf16.msra.mxu0 0
        %3594 = vmatprep.subr.bf16.mxu0 0
        %3595 = vmatpush1.bf16.msra.mxu0 0
        %3596 = vmatprep.subr.bf16.mxu0 0
        %3597 = vmatpush1.bf16.msra.mxu0 0
        %3598 = vmatprep.subr.bf16.mxu0 0
        %3599 = vmatpush1.bf16.msra.mxu0 0
        %3600 = vmatprep.mubr.bf16.mxu0 0
        %3601 = vmatmul.mubr.bf16.gmra.mrb[0].mxu0 %v3566
        %v3602 = vpop.f32.mrb[0].mxu0
        %v3603 = vadd.f32 %v3539, %v3602
        %v3604 = vpop.f32.mrb[0].mxu0
        %v3605 = vpop.f32.mrb[0].mxu0
        %v3606 = vpop.f32.mrb[0].mxu0
        %3607 = vdwg.mxu0
        %s3608 = scalar_lea.vmem %s5, 1
        %v3609 = vld [vmem:[%s3608] sm:$0x1]
        %s3610 = scalar_lea.vmem %s6, 1
        %v3611 = vld [vmem:[%s3610] sm:$0x1]
        %v3612 = vsel %vm1229, %v3603, 0.0
        %3613 = vadd.xlane.f32.xlu0 %v3612
        %v3614 = vpop.xlane.xlu0 %3613
        %v3615 = vmul.f32 %v3614, %v1278
        %v3616 = vsub.f32 %v3603, %v3615
        %v3617 = vmul.f32 %v3616, %v3616
        %v3618 = vsel %vm1229, %v3617, 0.0
        %3619 = vadd.xlane.f32.xlu0 %v3618
        %v3620 = vpop.xlane.xlu0 %3619
        %v3621 = vmul.f32 %v3620, %v1278
        %v3622 = vadd.f32 %v3621, 1e-05
        %v3623 = vrsqrt.pop %v3622
        %v3624 = vmul.f32 %v3616, %v3623
        %v3626 = vlaneseq
        %v3627 = vshrl.u32 %v3626, 7
        %v3628 = vsub.s32 0, %v3627
        %v3629 = vrot.slane %v3609, %v3628
        %v3631 = vmul.f32 %v3624, %v3629
        %v3633 = vlaneseq
        %v3634 = vshrl.u32 %v3633, 7
        %v3635 = vsub.s32 0, %v3634
        %v3636 = vrot.slane %v3611, %v3635
        %v3638 = vadd.f32 %v3631, %v3636
        %v3639 = vpack.c.bf16 %v3638, %v3638
        %s3640 = scalar_lea.vmem %s7, 512
        %v3641 = vld [vmem:[%s3640] sm:$0xff]
        %v3642 = vld [vmem:[%s3640 + $0x8] sm:$0xff]
        %v3643 = vld [vmem:[%s3640 + $0x40] sm:$0xff]
        %v3644 = vld [vmem:[%s3640 + $0x48] sm:$0xff]
        %v3645 = vld [vmem:[%s3640 + $0x80] sm:$0xff]
        %v3646 = vld [vmem:[%s3640 + $0x88] sm:$0xff]
        %v3647 = vld [vmem:[%s3640 + $0xc0] sm:$0xff]
        %v3648 = vld [vmem:[%s3640 + $0xc8] sm:$0xff]
        %v3649 = vld [vmem:[%s3640 + $0x100] sm:$0xff]
        %v3650 = vld [vmem:[%s3640 + $0x108] sm:$0xff]
        %v3651 = vld [vmem:[%s3640 + $0x140] sm:$0xff]
        %v3652 = vld [vmem:[%s3640 + $0x148] sm:$0xff]
        %v3653 = vld [vmem:[%s3640 + $0x180] sm:$0xff]
        %v3654 = vld [vmem:[%s3640 + $0x188] sm:$0xff]
        %v3655 = vld [vmem:[%s3640 + $0x1c0] sm:$0xff]
        %v3656 = vld [vmem:[%s3640 + $0x1c8] sm:$0xff]
        %s3657 = scalar_lea.vmem %s8, 16
        %v3658 = vld [vmem:[%s3657] sm:$0xf]
        %v3660 = vlaneseq
        %v3661 = vshrl.u32 %v3660, 7
        %v3662 = vsub.s32 0, %v3661
        %v3663 = vrot.slane %v3658, %v3662
        %v3664 = vlaneseq
        %v3665 = vshrl.u32 %v3664, 7
        %v3666 = vsub.s32 1, %v3665
        %v3667 = vrot.slane %v3658, %v3666
        %v3668 = vlaneseq
        %v3669 = vshrl.u32 %v3668, 7
        %v3670 = vsub.s32 2, %v3669
        %v3671 = vrot.slane %v3658, %v3670
        %v3672 = vlaneseq
        %v3673 = vshrl.u32 %v3672, 7
        %v3674 = vsub.s32 3, %v3673
        %v3675 = vrot.slane %v3658, %v3674
        %v3696 = vunpack.c.l.b16 %v3641
        %v3697 = vunpack.c.h.b16 %v3641
        %v3698 = vunpack.c.l.b16 %v3642
        %v3699 = vunpack.c.h.b16 %v3642
        %v3700 = vunpack.c.l.b16 %v3643
        %v3701 = vunpack.c.h.b16 %v3643
        %v3702 = vunpack.c.l.b16 %v3644
        %v3703 = vunpack.c.h.b16 %v3644
        %v3704 = vunpack.c.l.b16 %v3645
        %v3705 = vunpack.c.h.b16 %v3645
        %v3706 = vunpack.c.l.b16 %v3646
        %v3707 = vunpack.c.h.b16 %v3646
        %v3708 = vunpack.c.l.b16 %v3647
        %v3709 = vunpack.c.h.b16 %v3647
        %v3710 = vunpack.c.l.b16 %v3648
        %v3711 = vunpack.c.h.b16 %v3648
        %v3712 = vunpack.c.l.b16 %v3649
        %v3713 = vunpack.c.h.b16 %v3649
        %v3714 = vunpack.c.l.b16 %v3650
        %v3715 = vunpack.c.h.b16 %v3650
        %v3716 = vunpack.c.l.b16 %v3651
        %v3717 = vunpack.c.h.b16 %v3651
        %v3718 = vunpack.c.l.b16 %v3652
        %v3719 = vunpack.c.h.b16 %v3652
        %v3720 = vunpack.c.l.b16 %v3653
        %v3721 = vunpack.c.h.b16 %v3653
        %v3722 = vunpack.c.l.b16 %v3654
        %v3723 = vunpack.c.h.b16 %v3654
        %v3724 = vunpack.c.l.b16 %v3655
        %v3725 = vunpack.c.h.b16 %v3655
        %v3726 = vunpack.c.l.b16 %v3656
        %v3727 = vunpack.c.h.b16 %v3656
        %v3728 = vpack.c.b16 %v3700, %v3696
        %v3729 = vpack.c.b16 %v3701, %v3697
        %v3730 = vpack.c.b16 %v3702, %v3698
        %v3731 = vpack.c.b16 %v3703, %v3699
        %v3732 = vpack.c.b16 %v3708, %v3704
        %v3733 = vpack.c.b16 %v3709, %v3705
        %v3734 = vpack.c.b16 %v3710, %v3706
        %v3735 = vpack.c.b16 %v3711, %v3707
        %v3736 = vpack.c.b16 %v3716, %v3712
        %v3737 = vpack.c.b16 %v3717, %v3713
        %v3738 = vpack.c.b16 %v3718, %v3714
        %v3739 = vpack.c.b16 %v3719, %v3715
        %v3740 = vpack.c.b16 %v3724, %v3720
        %v3741 = vpack.c.b16 %v3725, %v3721
        %v3742 = vpack.c.b16 %v3726, %v3722
        %v3743 = vpack.c.b16 %v3727, %v3723
        %v3761 = vsel %vm1229, %v3639, 0
        %3763 = vmatprep.subr.bf16.mxu0 %v3729
        %3764 = vmatpush1.bf16.msra.mxu0 %v3728
        %3765 = vmatprep.subr.bf16.mxu0 %v3733
        %3766 = vmatpush1.bf16.msra.mxu0 %v3732
        %3767 = vmatprep.subr.bf16.mxu0 %v3737
        %3768 = vmatpush1.bf16.msra.mxu0 %v3736
        %3769 = vmatprep.subr.bf16.mxu0 %v3741
        %3770 = vmatpush1.bf16.msra.mxu0 %v3740
        %3771 = vmatprep.subr.bf16.mxu0 0
        %3772 = vmatpush1.bf16.msra.mxu0 0
        %3773 = vmatprep.subr.bf16.mxu0 0
        %3774 = vmatpush1.bf16.msra.mxu0 0
        %3775 = vmatprep.subr.bf16.mxu0 0
        %3776 = vmatpush1.bf16.msra.mxu0 0
        %3777 = vmatprep.subr.bf16.mxu0 0
        %3778 = vmatpush1.bf16.msra.mxu0 0
        %3779 = vmatprep.subr.bf16.mxu0 0
        %3780 = vmatpush1.bf16.msra.mxu0 0
        %3781 = vmatprep.subr.bf16.mxu0 0
        %3782 = vmatpush1.bf16.msra.mxu0 0
        %3783 = vmatprep.subr.bf16.mxu0 0
        %3784 = vmatpush1.bf16.msra.mxu0 0
        %3785 = vmatprep.subr.bf16.mxu0 0
        %3786 = vmatpush1.bf16.msra.mxu0 0
        %3787 = vmatprep.subr.bf16.mxu0 0
        %3788 = vmatpush1.bf16.msra.mxu0 0
        %3789 = vmatprep.subr.bf16.mxu0 0
        %3790 = vmatpush1.bf16.msra.mxu0 0
        %3791 = vmatprep.subr.bf16.mxu0 0
        %3792 = vmatpush1.bf16.msra.mxu0 0
        %3793 = vmatprep.subr.bf16.mxu0 0
        %3794 = vmatpush1.bf16.msra.mxu0 0
        %3795 = vmatprep.mubr.bf16.mxu0 0
        %3796 = vmatmul.mubr.bf16.gmra.mrb[0].mxu0 %v3761
        %v3797 = vpop.f32.mrb[0].mxu0
        %v3798 = vadd.f32 %v3663, %v3797
        %v3799 = vpop.f32.mrb[0].mxu0
        %v3800 = vadd.f32 %v3667, %v3799
        %v3801 = vpop.f32.mrb[0].mxu0
        %v3802 = vpop.f32.mrb[0].mxu0
        %3803 = vdwg.mxu0
        %3804 = vmatprep.subr.bf16.mxu0 %v3731
        %3805 = vmatpush1.bf16.msra.mxu0 %v3730
        %3806 = vmatprep.subr.bf16.mxu0 %v3735
        %3807 = vmatpush1.bf16.msra.mxu0 %v3734
        %3808 = vmatprep.subr.bf16.mxu0 %v3739
        %3809 = vmatpush1.bf16.msra.mxu0 %v3738
        %3810 = vmatprep.subr.bf16.mxu0 %v3743
        %3811 = vmatpush1.bf16.msra.mxu0 %v3742
        %3812 = vmatprep.subr.bf16.mxu0 0
        %3813 = vmatpush1.bf16.msra.mxu0 0
        %3814 = vmatprep.subr.bf16.mxu0 0
        %3815 = vmatpush1.bf16.msra.mxu0 0
        %3816 = vmatprep.subr.bf16.mxu0 0
        %3817 = vmatpush1.bf16.msra.mxu0 0
        %3818 = vmatprep.subr.bf16.mxu0 0
        %3819 = vmatpush1.bf16.msra.mxu0 0
        %3820 = vmatprep.subr.bf16.mxu0 0
        %3821 = vmatpush1.bf16.msra.mxu0 0
        %3822 = vmatprep.subr.bf16.mxu0 0
        %3823 = vmatpush1.bf16.msra.mxu0 0
        %3824 = vmatprep.subr.bf16.mxu0 0
        %3825 = vmatpush1.bf16.msra.mxu0 0
        %3826 = vmatprep.subr.bf16.mxu0 0
        %3827 = vmatpush1.bf16.msra.mxu0 0
        %3828 = vmatprep.subr.bf16.mxu0 0
        %3829 = vmatpush1.bf16.msra.mxu0 0
        %3830 = vmatprep.subr.bf16.mxu0 0
        %3831 = vmatpush1.bf16.msra.mxu0 0
        %3832 = vmatprep.subr.bf16.mxu0 0
        %3833 = vmatpush1.bf16.msra.mxu0 0
        %3834 = vmatprep.subr.bf16.mxu0 0
        %3835 = vmatpush1.bf16.msra.mxu0 0
        %3836 = vmatprep.mubr.bf16.mxu0 0
        %3837 = vmatmul.mubr.bf16.gmra.mrb[0].mxu0 %v3761
        %v3838 = vpop.f32.mrb[0].mxu0
        %v3839 = vadd.f32 %v3671, %v3838
        %v3840 = vpop.f32.mrb[0].mxu0
        %v3841 = vadd.f32 %v3675, %v3840
        %v3842 = vpop.f32.mrb[0].mxu0
        %v3843 = vpop.f32.mrb[0].mxu0
        %3844 = vdwg.mxu0
        %v3845 = vmax.f32 %v3798, 0.0
        %v3846 = vmax.f32 %v3800, 0.0
        %v3847 = vmax.f32 %v3839, 0.0
        %v3848 = vmax.f32 %v3841, 0.0
        %v3849 = vpack.c.bf16 %v3845, %v3845
        %v3850 = vpack.c.bf16 %v3846, %v3846
        %v3851 = vpack.c.bf16 %v3847, %v3847
        %v3852 = vpack.c.bf16 %v3848, %v3848
        %s3853 = scalar_lea.vmem %s9, 1024
        %v3854 = vld [vmem:[%s3853] sm:$0xf]
        %v3855 = vld [vmem:[%s3853 + $0x4] sm:$0xf]
        %v3856 = vld [vmem:[%s3853 + $0x8] sm:$0xf]
        %v3857 = vld [vmem:[%s3853 + $0xc] sm:$0xf]
        %v3858 = vld [vmem:[%s3853 + $0x10] sm:$0xf]
        %v3859 = vld [vmem:[%s3853 + $0x14] sm:$0xf]
        %v3860 = vld [vmem:[%s3853 + $0x18] sm:$0xf]
        %v3861 = vld [vmem:[%s3853 + $0x1c] sm:$0xf]
        %v3862 = vld [vmem:[%s3853 + $0x20] sm:$0xf]
        %v3863 = vld [vmem:[%s3853 + $0x24] sm:$0xf]
        %v3864 = vld [vmem:[%s3853 + $0x28] sm:$0xf]
        %v3865 = vld [vmem:[%s3853 + $0x2c] sm:$0xf]
        %v3866 = vld [vmem:[%s3853 + $0x30] sm:$0xf]
        %v3867 = vld [vmem:[%s3853 + $0x34] sm:$0xf]
        %v3868 = vld [vmem:[%s3853 + $0x38] sm:$0xf]
        %v3869 = vld [vmem:[%s3853 + $0x3c] sm:$0xf]
        %v3870 = vld [vmem:[%s3853 + $0x40] sm:$0xf]
        %v3871 = vld [vmem:[%s3853 + $0x44] sm:$0xf]
        %v3872 = vld [vmem:[%s3853 + $0x48] sm:$0xf]
        %v3873 = vld [vmem:[%s3853 + $0x4c] sm:$0xf]
        %v3874 = vld [vmem:[%s3853 + $0x50] sm:$0xf]
        %v3875 = vld [vmem:[%s3853 + $0x54] sm:$0xf]
        %v3876 = vld [vmem:[%s3853 + $0x58] sm:$0xf]
        %v3877 = vld [vmem:[%s3853 + $0x5c] sm:$0xf]
        %v3878 = vld [vmem:[%s3853 + $0x60] sm:$0xf]
        %v3879 = vld [vmem:[%s3853 + $0x64] sm:$0xf]
        %v3880 = vld [vmem:[%s3853 + $0x68] sm:$0xf]
        %v3881 = vld [vmem:[%s3853 + $0x6c] sm:$0xf]
        %v3882 = vld [vmem:[%s3853 + $0x70] sm:$0xf]
        %v3883 = vld [vmem:[%s3853 + $0x74] sm:$0xf]
        %v3884 = vld [vmem:[%s3853 + $0x78] sm:$0xf]
        %v3885 = vld [vmem:[%s3853 + $0x7c] sm:$0xf]
        %v3886 = vld [vmem:[%s3853 + $0x80] sm:$0xf]
        %v3887 = vld [vmem:[%s3853 + $0x84] sm:$0xf]
        %v3888 = vld [vmem:[%s3853 + $0x88] sm:$0xf]
        %v3889 = vld [vmem:[%s3853 + $0x8c] sm:$0xf]
        %v3890 = vld [vmem:[%s3853 + $0x90] sm:$0xf]
        %v3891 = vld [vmem:[%s3853 + $0x94] sm:$0xf]
        %v3892 = vld [vmem:[%s3853 + $0x98] sm:$0xf]
        %v3893 = vld [vmem:[%s3853 + $0x9c] sm:$0xf]
        %v3894 = vld [vmem:[%s3853 + $0xa0] sm:$0xf]
        %v3895 = vld [vmem:[%s3853 + $0xa4] sm:$0xf]
        %v3896 = vld [vmem:[%s3853 + $0xa8] sm:$0xf]
        %v3897 = vld [vmem:[%s3853 + $0xac] sm:$0xf]
        %v3898 = vld [vmem:[%s3853 + $0xb0] sm:$0xf]
        %v3899 = vld [vmem:[%s3853 + $0xb4] sm:$0xf]
        %v3900 = vld [vmem:[%s3853 + $0xb8] sm:$0xf]
        %v3901 = vld [vmem:[%s3853 + $0xbc] sm:$0xf]
        %v3902 = vld [vmem:[%s3853 + $0xc0] sm:$0xf]
        %v3903 = vld [vmem:[%s3853 + $0xc4] sm:$0xf]
        %v3904 = vld [vmem:[%s3853 + $0xc8] sm:$0xf]
        %v3905 = vld [vmem:[%s3853 + $0xcc] sm:$0xf]
        %v3906 = vld [vmem:[%s3853 + $0xd0] sm:$0xf]
        %v3907 = vld [vmem:[%s3853 + $0xd4] sm:$0xf]
        %v3908 = vld [vmem:[%s3853 + $0xd8] sm:$0xf]
        %v3909 = vld [vmem:[%s3853 + $0xdc] sm:$0xf]
        %v3910 = vld [vmem:[%s3853 + $0xe0] sm:$0xf]
        %v3911 = vld [vmem:[%s3853 + $0xe4] sm:$0xf]
        %v3912 = vld [vmem:[%s3853 + $0xe8] sm:$0xf]
        %v3913 = vld [vmem:[%s3853 + $0xec] sm:$0xf]
        %v3914 = vld [vmem:[%s3853 + $0xf0] sm:$0xf]
        %v3915 = vld [vmem:[%s3853 + $0xf4] sm:$0xf]
        %v3916 = vld [vmem:[%s3853 + $0xf8] sm:$0xf]
        %v3917 = vld [vmem:[%s3853 + $0xfc] sm:$0xf]
        %v3918 = vld [vmem:[%s3640 + $0x10] sm:$0xff]
        %v3919 = vld [vmem:[%s3640 + $0x18] sm:$0xff]
        %v3920 = vld [vmem:[%s3640 + $0x50] sm:$0xff]
        %v3921 = vld [vmem:[%s3640 + $0x58] sm:$0xff]
        %v3922 = vld [vmem:[%s3640 + $0x90] sm:$0xff]
        %v3923 = vld [vmem:[%s3640 + $0x98] sm:$0xff]
        %v3924 = vld [vmem:[%s3640 + $0xd0] sm:$0xff]
        %v3925 = vld [vmem:[%s3640 + $0xd8] sm:$0xff]
        %v3926 = vld [vmem:[%s3640 + $0x110] sm:$0xff]
        %v3927 = vld [vmem:[%s3640 + $0x118] sm:$0xff]
        %v3928 = vld [vmem:[%s3640 + $0x150] sm:$0xff]
        %v3929 = vld [vmem:[%s3640 + $0x158] sm:$0xff]
        %v3930 = vld [vmem:[%s3640 + $0x190] sm:$0xff]
        %v3931 = vld [vmem:[%s3640 + $0x198] sm:$0xff]
        %v3932 = vld [vmem:[%s3640 + $0x1d0] sm:$0xff]
        %v3933 = vld [vmem:[%s3640 + $0x1d8] sm:$0xff]
        %v3934 = vld [vmem:[%s3657 + $0x4] sm:$0xf]
        %v3936 = vlaneseq
        %v3937 = vshrl.u32 %v3936, 7
        %v3938 = vsub.s32 0, %v3937
        %v3939 = vrot.slane %v3934, %v3938
        %v3940 = vlaneseq
        %v3941 = vshrl.u32 %v3940, 7
        %v3942 = vsub.s32 1, %v3941
        %v3943 = vrot.slane %v3934, %v3942
        %v3944 = vlaneseq
        %v3945 = vshrl.u32 %v3944, 7
        %v3946 = vsub.s32 2, %v3945
        %v3947 = vrot.slane %v3934, %v3946
        %v3948 = vlaneseq
        %v3949 = vshrl.u32 %v3948, 7
        %v3950 = vsub.s32 3, %v3949
        %v3951 = vrot.slane %v3934, %v3950
        %v3972 = vunpack.c.l.b16 %v3918
        %v3973 = vunpack.c.h.b16 %v3918
        %v3974 = vunpack.c.l.b16 %v3919
        %v3975 = vunpack.c.h.b16 %v3919
        %v3976 = vunpack.c.l.b16 %v3920
        %v3977 = vunpack.c.h.b16 %v3920
        %v3978 = vunpack.c.l.b16 %v3921
        %v3979 = vunpack.c.h.b16 %v3921
        %v3980 = vunpack.c.l.b16 %v3922
        %v3981 = vunpack.c.h.b16 %v3922
        %v3982 = vunpack.c.l.b16 %v3923
        %v3983 = vunpack.c.h.b16 %v3923
        %v3984 = vunpack.c.l.b16 %v3924
        %v3985 = vunpack.c.h.b16 %v3924
        %v3986 = vunpack.c.l.b16 %v3925
        %v3987 = vunpack.c.h.b16 %v3925
        %v3988 = vunpack.c.l.b16 %v3926
        %v3989 = vunpack.c.h.b16 %v3926
        %v3990 = vunpack.c.l.b16 %v3927
        %v3991 = vunpack.c.h.b16 %v3927
        %v3992 = vunpack.c.l.b16 %v3928
        %v3993 = vunpack.c.h.b16 %v3928
        %v3994 = vunpack.c.l.b16 %v3929
        %v3995 = vunpack.c.h.b16 %v3929
        %v3996 = vunpack.c.l.b16 %v3930
        %v3997 = vunpack.c.h.b16 %v3930
        %v3998 = vunpack.c.l.b16 %v3931
        %v3999 = vunpack.c.h.b16 %v3931
        %v4000 = vunpack.c.l.b16 %v3932
        %v4001 = vunpack.c.h.b16 %v3932
        %v4002 = vunpack.c.l.b16 %v3933
        %v4003 = vunpack.c.h.b16 %v3933
        %v4004 = vpack.c.b16 %v3976, %v3972
        %v4005 = vpack.c.b16 %v3977, %v3973
        %v4006 = vpack.c.b16 %v3978, %v3974
        %v4007 = vpack.c.b16 %v3979, %v3975
        %v4008 = vpack.c.b16 %v3984, %v3980
        %v4009 = vpack.c.b16 %v3985, %v3981
        %v4010 = vpack.c.b16 %v3986, %v3982
        %v4011 = vpack.c.b16 %v3987, %v3983
        %v4012 = vpack.c.b16 %v3992, %v3988
        %v4013 = vpack.c.b16 %v3993, %v3989
        %v4014 = vpack.c.b16 %v3994, %v3990
        %v4015 = vpack.c.b16 %v3995, %v3991
        %v4016 = vpack.c.b16 %v4000, %v3996
        %v4017 = vpack.c.b16 %v4001, %v3997
        %v4018 = vpack.c.b16 %v4002, %v3998
        %v4019 = vpack.c.b16 %v4003, %v3999
        %4036 = vmatprep.subr.bf16.mxu0 %v4005
        %4037 = vmatpush1.bf16.msra.mxu0 %v4004
        %4038 = vmatprep.subr.bf16.mxu0 %v4009
        %4039 = vmatpush1.bf16.msra.mxu0 %v4008
        %4040 = vmatprep.subr.bf16.mxu0 %v4013
        %4041 = vmatpush1.bf16.msra.mxu0 %v4012
        %4042 = vmatprep.subr.bf16.mxu0 %v4017
        %4043 = vmatpush1.bf16.msra.mxu0 %v4016
        %4044 = vmatprep.subr.bf16.mxu0 0
        %4045 = vmatpush1.bf16.msra.mxu0 0
        %4046 = vmatprep.subr.bf16.mxu0 0
        %4047 = vmatpush1.bf16.msra.mxu0 0
        %4048 = vmatprep.subr.bf16.mxu0 0
        %4049 = vmatpush1.bf16.msra.mxu0 0
        %4050 = vmatprep.subr.bf16.mxu0 0
        %4051 = vmatpush1.bf16.msra.mxu0 0
        %4052 = vmatprep.subr.bf16.mxu0 0
        %4053 = vmatpush1.bf16.msra.mxu0 0
        %4054 = vmatprep.subr.bf16.mxu0 0
        %4055 = vmatpush1.bf16.msra.mxu0 0
        %4056 = vmatprep.subr.bf16.mxu0 0
        %4057 = vmatpush1.bf16.msra.mxu0 0
        %4058 = vmatprep.subr.bf16.mxu0 0
        %4059 = vmatpush1.bf16.msra.mxu0 0
        %4060 = vmatprep.subr.bf16.mxu0 0
        %4061 = vmatpush1.bf16.msra.mxu0 0
        %4062 = vmatprep.subr.bf16.mxu0 0
        %4063 = vmatpush1.bf16.msra.mxu0 0
        %4064 = vmatprep.subr.bf16.mxu0 0
        %4065 = vmatpush1.bf16.msra.mxu0 0
        %4066 = vmatprep.subr.bf16.mxu0 0
        %4067 = vmatpush1.bf16.msra.mxu0 0
        %4068 = vmatprep.mubr.bf16.mxu0 0
        %4069 = vmatmul.mubr.bf16.gmra.mrb[0].mxu0 %v3761
        %v4070 = vpop.f32.mrb[0].mxu0
        %v4071 = vadd.f32 %v3939, %v4070
        %v4072 = vpop.f32.mrb[0].mxu0
        %v4073 = vadd.f32 %v3943, %v4072
        %v4074 = vpop.f32.mrb[0].mxu0
        %v4075 = vpop.f32.mrb[0].mxu0
        %4076 = vdwg.mxu0
        %4077 = vmatprep.subr.bf16.mxu0 %v4007
        %4078 = vmatpush1.bf16.msra.mxu0 %v4006
        %4079 = vmatprep.subr.bf16.mxu0 %v4011
        %4080 = vmatpush1.bf16.msra.mxu0 %v4010
        %4081 = vmatprep.subr.bf16.mxu0 %v4015
        %4082 = vmatpush1.bf16.msra.mxu0 %v4014
        %4083 = vmatprep.subr.bf16.mxu0 %v4019
        %4084 = vmatpush1.bf16.msra.mxu0 %v4018
        %4085 = vmatprep.subr.bf16.mxu0 0
        %4086 = vmatpush1.bf16.msra.mxu0 0
        %4087 = vmatprep.subr.bf16.mxu0 0
        %4088 = vmatpush1.bf16.msra.mxu0 0
        %4089 = vmatprep.subr.bf16.mxu0 0
        %4090 = vmatpush1.bf16.msra.mxu0 0
        %4091 = vmatprep.subr.bf16.mxu0 0
        %4092 = vmatpush1.bf16.msra.mxu0 0
        %4093 = vmatprep.subr.bf16.mxu0 0
        %4094 = vmatpush1.bf16.msra.mxu0 0
        %4095 = vmatprep.subr.bf16.mxu0 0
        %4096 = vmatpush1.bf16.msra.mxu0 0
        %4097 = vmatprep.subr.bf16.mxu0 0
        %4098 = vmatpush1.bf16.msra.mxu0 0
        %4099 = vmatprep.subr.bf16.mxu0 0
        %4100 = vmatpush1.bf16.msra.mxu0 0
        %4101 = vmatprep.subr.bf16.mxu0 0
        %4102 = vmatpush1.bf16.msra.mxu0 0
        %4103 = vmatprep.subr.bf16.mxu0 0
        %4104 = vmatpush1.bf16.msra.mxu0 0
        %4105 = vmatprep.subr.bf16.mxu0 0
        %4106 = vmatpush1.bf16.msra.mxu0 0
        %4107 = vmatprep.subr.bf16.mxu0 0
        %4108 = vmatpush1.bf16.msra.mxu0 0
        %4109 = vmatprep.mubr.bf16.mxu0 0
        %4110 = vmatmul.mubr.bf16.gmra.mrb[0].mxu0 %v3761
        %v4111 = vpop.f32.mrb[0].mxu0
        %v4112 = vadd.f32 %v3947, %v4111
        %v4113 = vpop.f32.mrb[0].mxu0
        %v4114 = vadd.f32 %v3951, %v4113
        %v4115 = vpop.f32.mrb[0].mxu0
        %v4116 = vpop.f32.mrb[0].mxu0
        %4117 = vdwg.mxu0
        %v4118 = vmax.f32 %v4071, 0.0
        %v4119 = vmax.f32 %v4073, 0.0
        %v4120 = vmax.f32 %v4112, 0.0
        %v4121 = vmax.f32 %v4114, 0.0
        %v4122 = vpack.c.bf16 %v4118, %v4118
        %v4123 = vpack.c.bf16 %v4119, %v4119
        %v4124 = vpack.c.bf16 %v4120, %v4120
        %v4125 = vpack.c.bf16 %v4121, %v4121
        %v4126 = vld [vmem:[%s3853 + $0x100] sm:$0xf]
        %v4127 = vld [vmem:[%s3853 + $0x104] sm:$0xf]
        %v4128 = vld [vmem:[%s3853 + $0x108] sm:$0xf]
        %v4129 = vld [vmem:[%s3853 + $0x10c] sm:$0xf]
        %v4130 = vld [vmem:[%s3853 + $0x110] sm:$0xf]
        %v4131 = vld [vmem:[%s3853 + $0x114] sm:$0xf]
        %v4132 = vld [vmem:[%s3853 + $0x118] sm:$0xf]
        %v4133 = vld [vmem:[%s3853 + $0x11c] sm:$0xf]
        %v4134 = vld [vmem:[%s3853 + $0x120] sm:$0xf]
        %v4135 = vld [vmem:[%s3853 + $0x124] sm:$0xf]
        %v4136 = vld [vmem:[%s3853 + $0x128] sm:$0xf]
        %v4137 = vld [vmem:[%s3853 + $0x12c] sm:$0xf]
        %v4138 = vld [vmem:[%s3853 + $0x130] sm:$0xf]
        %v4139 = vld [vmem:[%s3853 + $0x134] sm:$0xf]
        %v4140 = vld [vmem:[%s3853 + $0x138] sm:$0xf]
        %v4141 = vld [vmem:[%s3853 + $0x13c] sm:$0xf]
        %v4142 = vld [vmem:[%s3853 + $0x140] sm:$0xf]
        %v4143 = vld [vmem:[%s3853 + $0x144] sm:$0xf]
        %v4144 = vld [vmem:[%s3853 + $0x148] sm:$0xf]
        %v4145 = vld [vmem:[%s3853 + $0x14c] sm:$0xf]
        %v4146 = vld [vmem:[%s3853 + $0x150] sm:$0xf]
        %v4147 = vld [vmem:[%s3853 + $0x154] sm:$0xf]
        %v4148 = vld [vmem:[%s3853 + $0x158] sm:$0xf]
        %v4149 = vld [vmem:[%s3853 + $0x15c] sm:$0xf]
        %v4150 = vld [vmem:[%s3853 + $0x160] sm:$0xf]
        %v4151 = vld [vmem:[%s3853 + $0x164] sm:$0xf]
        %v4152 = vld [vmem:[%s3853 + $0x168] sm:$0xf]
        %v4153 = vld [vmem:[%s3853 + $0x16c] sm:$0xf]
        %v4154 = vld [vmem:[%s3853 + $0x170] sm:$0xf]
        %v4155 = vld [vmem:[%s3853 + $0x174] sm:$0xf]
        %v4156 = vld [vmem:[%s3853 + $0x178] sm:$0xf]
        %v4157 = vld [vmem:[%s3853 + $0x17c] sm:$0xf]
        %v4158 = vld [vmem:[%s3853 + $0x180] sm:$0xf]
        %v4159 = vld [vmem:[%s3853 + $0x184] sm:$0xf]
        %v4160 = vld [vmem:[%s3853 + $0x188] sm:$0xf]
        %v4161 = vld [vmem:[%s3853 + $0x18c] sm:$0xf]
        %v4162 = vld [vmem:[%s3853 + $0x190] sm:$0xf]
        %v4163 = vld [vmem:[%s3853 + $0x194] sm:$0xf]
        %v4164 = vld [vmem:[%s3853 + $0x198] sm:$0xf]
        %v4165 = vld [vmem:[%s3853 + $0x19c] sm:$0xf]
        %v4166 = vld [vmem:[%s3853 + $0x1a0] sm:$0xf]
        %v4167 = vld [vmem:[%s3853 + $0x1a4] sm:$0xf]
        %v4168 = vld [vmem:[%s3853 + $0x1a8] sm:$0xf]
        %v4169 = vld [vmem:[%s3853 + $0x1ac] sm:$0xf]
        %v4170 = vld [vmem:[%s3853 + $0x1b0] sm:$0xf]
        %v4171 = vld [vmem:[%s3853 + $0x1b4] sm:$0xf]
        %v4172 = vld [vmem:[%s3853 + $0x1b8] sm:$0xf]
        %v4173 = vld [vmem:[%s3853 + $0x1bc] sm:$0xf]
        %v4174 = vld [vmem:[%s3853 + $0x1c0] sm:$0xf]
        %v4175 = vld [vmem:[%s3853 + $0x1c4] sm:$0xf]
        %v4176 = vld [vmem:[%s3853 + $0x1c8] sm:$0xf]
        %v4177 = vld [vmem:[%s3853 + $0x1cc] sm:$0xf]
        %v4178 = vld [vmem:[%s3853 + $0x1d0] sm:$0xf]
        %v4179 = vld [vmem:[%s3853 + $0x1d4] sm:$0xf]
        %v4180 = vld [vmem:[%s3853 + $0x1d8] sm:$0xf]
        %v4181 = vld [vmem:[%s3853 + $0x1dc] sm:$0xf]
        %v4182 = vld [vmem:[%s3853 + $0x1e0] sm:$0xf]
        %v4183 = vld [vmem:[%s3853 + $0x1e4] sm:$0xf]
        %v4184 = vld [vmem:[%s3853 + $0x1e8] sm:$0xf]
        %v4185 = vld [vmem:[%s3853 + $0x1ec] sm:$0xf]
        %v4186 = vld [vmem:[%s3853 + $0x1f0] sm:$0xf]
        %v4187 = vld [vmem:[%s3853 + $0x1f4] sm:$0xf]
        %v4188 = vld [vmem:[%s3853 + $0x1f8] sm:$0xf]
        %v4189 = vld [vmem:[%s3853 + $0x1fc] sm:$0xf]
        %v4254 = vunpack.c.l.b16 %v4126
        %v4255 = vunpack.c.l.b16 %v4127
        %v4256 = vunpack.c.l.b16 %v4128
        %v4257 = vunpack.c.l.b16 %v4129
        %v4258 = vunpack.c.l.b16 %v4130
        %v4259 = vunpack.c.l.b16 %v4131
        %v4260 = vunpack.c.l.b16 %v4132
        %v4261 = vunpack.c.l.b16 %v4133
        %v4262 = vunpack.c.l.b16 %v4134
        %v4263 = vunpack.c.l.b16 %v4135
        %v4264 = vunpack.c.l.b16 %v4136
        %v4265 = vunpack.c.l.b16 %v4137
        %v4266 = vunpack.c.l.b16 %v4138
        %v4267 = vunpack.c.l.b16 %v4139
        %v4268 = vunpack.c.l.b16 %v4140
        %v4269 = vunpack.c.l.b16 %v4141
        %v4270 = vunpack.c.l.b16 %v4142
        %v4271 = vunpack.c.l.b16 %v4143
        %v4272 = vunpack.c.l.b16 %v4144
        %v4273 = vunpack.c.l.b16 %v4145
        %v4274 = vunpack.c.l.b16 %v4146
        %v4275 = vunpack.c.l.b16 %v4147
        %v4276 = vunpack.c.l.b16 %v4148
        %v4277 = vunpack.c.l.b16 %v4149
        %v4278 = vunpack.c.l.b16 %v4150
        %v4279 = vunpack.c.l.b16 %v4151
        %v4280 = vunpack.c.l.b16 %v4152
        %v4281 = vunpack.c.l.b16 %v4153
        %v4282 = vunpack.c.l.b16 %v4154
        %v4283 = vunpack.c.l.b16 %v4155
        %v4284 = vunpack.c.l.b16 %v4156
        %v4285 = vunpack.c.l.b16 %v4157
        %v4286 = vunpack.c.l.b16 %v4158
        %v4287 = vunpack.c.l.b16 %v4159
        %v4288 = vunpack.c.l.b16 %v4160
        %v4289 = vunpack.c.l.b16 %v4161
        %v4290 = vunpack.c.l.b16 %v4162
        %v4291 = vunpack.c.l.b16 %v4163
        %v4292 = vunpack.c.l.b16 %v4164
        %v4293 = vunpack.c.l.b16 %v4165
        %v4294 = vunpack.c.l.b16 %v4166
        %v4295 = vunpack.c.l.b16 %v4167
        %v4296 = vunpack.c.l.b16 %v4168
        %v4297 = vunpack.c.l.b16 %v4169
        %v4298 = vunpack.c.l.b16 %v4170
        %v4299 = vunpack.c.l.b16 %v4171
        %v4300 = vunpack.c.l.b16 %v4172
        %v4301 = vunpack.c.l.b16 %v4173
        %v4302 = vunpack.c.l.b16 %v4174
        %v4303 = vunpack.c.l.b16 %v4175
        %v4304 = vunpack.c.l.b16 %v4176
        %v4305 = vunpack.c.l.b16 %v4177
        %v4306 = vunpack.c.l.b16 %v4178
        %v4307 = vunpack.c.l.b16 %v4179
        %v4308 = vunpack.c.l.b16 %v4180
        %v4309 = vunpack.c.l.b16 %v4181
        %v4310 = vunpack.c.l.b16 %v4182
        %v4311 = vunpack.c.l.b16 %v4183
        %v4312 = vunpack.c.l.b16 %v4184
        %v4313 = vunpack.c.l.b16 %v4185
        %v4314 = vunpack.c.l.b16 %v4186
        %v4315 = vunpack.c.l.b16 %v4187
        %v4316 = vunpack.c.l.b16 %v4188
        %v4317 = vunpack.c.l.b16 %v4189
        %v4318 = vpack.c.b16 %v4255, %v4254
        %v4319 = vpack.c.b16 %v4257, %v4256
        %v4320 = vpack.c.b16 %v4259, %v4258
        %v4321 = vpack.c.b16 %v4261, %v4260
        %v4322 = vpack.c.b16 %v4263, %v4262
        %v4323 = vpack.c.b16 %v4265, %v4264
        %v4324 = vpack.c.b16 %v4267, %v4266
        %v4325 = vpack.c.b16 %v4269, %v4268
        %v4326 = vpack.c.b16 %v4271, %v4270
        %v4327 = vpack.c.b16 %v4273, %v4272
        %v4328 = vpack.c.b16 %v4275, %v4274
        %v4329 = vpack.c.b16 %v4277, %v4276
        %v4330 = vpack.c.b16 %v4279, %v4278
        %v4331 = vpack.c.b16 %v4281, %v4280
        %v4332 = vpack.c.b16 %v4283, %v4282
        %v4333 = vpack.c.b16 %v4285, %v4284
        %v4334 = vpack.c.b16 %v4287, %v4286
        %v4335 = vpack.c.b16 %v4289, %v4288
        %v4336 = vpack.c.b16 %v4291, %v4290
        %v4337 = vpack.c.b16 %v4293, %v4292
        %v4338 = vpack.c.b16 %v4295, %v4294
        %v4339 = vpack.c.b16 %v4297, %v4296
        %v4340 = vpack.c.b16 %v4299, %v4298
        %v4341 = vpack.c.b16 %v4301, %v4300
        %v4342 = vpack.c.b16 %v4303, %v4302
        %v4343 = vpack.c.b16 %v4305, %v4304
        %v4344 = vpack.c.b16 %v4307, %v4306
        %v4345 = vpack.c.b16 %v4309, %v4308
        %v4346 = vpack.c.b16 %v4311, %v4310
        %v4347 = vpack.c.b16 %v4313, %v4312
        %v4348 = vpack.c.b16 %v4315, %v4314
        %v4349 = vpack.c.b16 %v4317, %v4316
        %4382 = vmatprep.subr.bf16.mxu0 0
        %4383 = vmatpush1.bf16.msra.mxu0 %v4318
        %4384 = vmatprep.subr.bf16.mxu0 0
        %4385 = vmatpush1.bf16.msra.mxu0 %v4319
        %4386 = vmatprep.subr.bf16.mxu0 0
        %4387 = vmatpush1.bf16.msra.mxu0 %v4320
        %4388 = vmatprep.subr.bf16.mxu0 0
        %4389 = vmatpush1.bf16.msra.mxu0 %v4321
        %4390 = vmatprep.subr.bf16.mxu0 0
        %4391 = vmatpush1.bf16.msra.mxu0 %v4322
        %4392 = vmatprep.subr.bf16.mxu0 0
        %4393 = vmatpush1.bf16.msra.mxu0 %v4323
        %4394 = vmatprep.subr.bf16.mxu0 0
        %4395 = vmatpush1.bf16.msra.mxu0 %v4324
        %4396 = vmatprep.subr.bf16.mxu0 0
        %4397 = vmatpush1.bf16.msra.mxu0 %v4325
        %4398 = vmatprep.subr.bf16.mxu0 0
        %4399 = vmatpush1.bf16.msra.mxu0 %v4326
        %4400 = vmatprep.subr.bf16.mxu0 0
        %4401 = vmatpush1.bf16.msra.mxu0 %v4327
        %4402 = vmatprep.subr.bf16.mxu0 0
        %4403 = vmatpush1.bf16.msra.mxu0 %v4328
        %4404 = vmatprep.subr.bf16.mxu0 0
        %4405 = vmatpush1.bf16.msra.mxu0 %v4329
        %4406 = vmatprep.subr.bf16.mxu0 0
        %4407 = vmatpush1.bf16.msra.mxu0 %v4330
        %4408 = vmatprep.subr.bf16.mxu0 0
        %4409 = vmatpush1.bf16.msra.mxu0 %v4331
        %4410 = vmatprep.subr.bf16.mxu0 0
        %4411 = vmatpush1.bf16.msra.mxu0 %v4332
        %4412 = vmatprep.subr.bf16.mxu0 0
        %4413 = vmatpush1.bf16.msra.mxu0 %v4333
        %4414 = vmatprep.mubr.bf16.mxu0 %v4123
        %4415 = vmatmul.mubr.bf16.gmra.mrb[0].mxu0 %v4122
        %v4416 = vpop.f32.mrb[0].mxu0
        %v4417 = vadd.f32 0.0, %v4416
        %v4418 = vpop.f32.mrb[0].mxu0
        %v4419 = vpop.f32.mrb[0].mxu0
        %v4420 = vpop.f32.mrb[0].mxu0
        %4421 = vdwg.mxu0
        %4422 = vmatprep.subr.bf16.mxu0 0
        %4423 = vmatpush1.bf16.msra.mxu0 %v4334
        %4424 = vmatprep.subr.bf16.mxu0 0
        %4425 = vmatpush1.bf16.msra.mxu0 %v4335
        %4426 = vmatprep.subr.bf16.mxu0 0
        %4427 = vmatpush1.bf16.msra.mxu0 %v4336
        %4428 = vmatprep.subr.bf16.mxu0 0
        %4429 = vmatpush1.bf16.msra.mxu0 %v4337
        %4430 = vmatprep.subr.bf16.mxu0 0
        %4431 = vmatpush1.bf16.msra.mxu0 %v4338
        %4432 = vmatprep.subr.bf16.mxu0 0
        %4433 = vmatpush1.bf16.msra.mxu0 %v4339
        %4434 = vmatprep.subr.bf16.mxu0 0
        %4435 = vmatpush1.bf16.msra.mxu0 %v4340
        %4436 = vmatprep.subr.bf16.mxu0 0
        %4437 = vmatpush1.bf16.msra.mxu0 %v4341
        %4438 = vmatprep.subr.bf16.mxu0 0
        %4439 = vmatpush1.bf16.msra.mxu0 %v4342
        %4440 = vmatprep.subr.bf16.mxu0 0
        %4441 = vmatpush1.bf16.msra.mxu0 %v4343
        %4442 = vmatprep.subr.bf16.mxu0 0
        %4443 = vmatpush1.bf16.msra.mxu0 %v4344
        %4444 = vmatprep.subr.bf16.mxu0 0
        %4445 = vmatpush1.bf16.msra.mxu0 %v4345
        %4446 = vmatprep.subr.bf16.mxu0 0
        %4447 = vmatpush1.bf16.msra.mxu0 %v4346
        %4448 = vmatprep.subr.bf16.mxu0 0
        %4449 = vmatpush1.bf16.msra.mxu0 %v4347
        %4450 = vmatprep.subr.bf16.mxu0 0
        %4451 = vmatpush1.bf16.msra.mxu0 %v4348
        %4452 = vmatprep.subr.bf16.mxu0 0
        %4453 = vmatpush1.bf16.msra.mxu0 %v4349
        %4454 = vmatprep.mubr.bf16.mxu0 %v4125
        %4455 = vmatmul.mubr.bf16.gmra.mrb[0].mxu0 %v4124
        %v4456 = vpop.f32.mrb[0].mxu0
        %v4457 = vadd.f32 %v4417, %v4456
        %v4458 = vpop.f32.mrb[0].mxu0
        %v4459 = vpop.f32.mrb[0].mxu0
        %v4460 = vpop.f32.mrb[0].mxu0
        %4461 = vdwg.mxu0
        %v4526 = vunpack.c.l.b16 %v3854
        %v4527 = vunpack.c.l.b16 %v3855
        %v4528 = vunpack.c.l.b16 %v3856
        %v4529 = vunpack.c.l.b16 %v3857
        %v4530 = vunpack.c.l.b16 %v3858
        %v4531 = vunpack.c.l.b16 %v3859
        %v4532 = vunpack.c.l.b16 %v3860
        %v4533 = vunpack.c.l.b16 %v3861
        %v4534 = vunpack.c.l.b16 %v3862
        %v4535 = vunpack.c.l.b16 %v3863
        %v4536 = vunpack.c.l.b16 %v3864
        %v4537 = vunpack.c.l.b16 %v3865
        %v4538 = vunpack.c.l.b16 %v3866
        %v4539 = vunpack.c.l.b16 %v3867
        %v4540 = vunpack.c.l.b16 %v3868
        %v4541 = vunpack.c.l.b16 %v3869
        %v4542 = vunpack.c.l.b16 %v3870
        %v4543 = vunpack.c.l.b16 %v3871
        %v4544 = vunpack.c.l.b16 %v3872
        %v4545 = vunpack.c.l.b16 %v3873
        %v4546 = vunpack.c.l.b16 %v3874
        %v4547 = vunpack.c.l.b16 %v3875
        %v4548 = vunpack.c.l.b16 %v3876
        %v4549 = vunpack.c.l.b16 %v3877
        %v4550 = vunpack.c.l.b16 %v3878
        %v4551 = vunpack.c.l.b16 %v3879
        %v4552 = vunpack.c.l.b16 %v3880
        %v4553 = vunpack.c.l.b16 %v3881
        %v4554 = vunpack.c.l.b16 %v3882
        %v4555 = vunpack.c.l.b16 %v3883
        %v4556 = vunpack.c.l.b16 %v3884
        %v4557 = vunpack.c.l.b16 %v3885
        %v4558 = vunpack.c.l.b16 %v3886
        %v4559 = vunpack.c.l.b16 %v3887
        %v4560 = vunpack.c.l.b16 %v3888
        %v4561 = vunpack.c.l.b16 %v3889
        %v4562 = vunpack.c.l.b16 %v3890
        %v4563 = vunpack.c.l.b16 %v3891
        %v4564 = vunpack.c.l.b16 %v3892
        %v4565 = vunpack.c.l.b16 %v3893
        %v4566 = vunpack.c.l.b16 %v3894
        %v4567 = vunpack.c.l.b16 %v3895
        %v4568 = vunpack.c.l.b16 %v3896
        %v4569 = vunpack.c.l.b16 %v3897
        %v4570 = vunpack.c.l.b16 %v3898
        %v4571 = vunpack.c.l.b16 %v3899
        %v4572 = vunpack.c.l.b16 %v3900
        %v4573 = vunpack.c.l.b16 %v3901
        %v4574 = vunpack.c.l.b16 %v3902
        %v4575 = vunpack.c.l.b16 %v3903
        %v4576 = vunpack.c.l.b16 %v3904
        %v4577 = vunpack.c.l.b16 %v3905
        %v4578 = vunpack.c.l.b16 %v3906
        %v4579 = vunpack.c.l.b16 %v3907
        %v4580 = vunpack.c.l.b16 %v3908
        %v4581 = vunpack.c.l.b16 %v3909
        %v4582 = vunpack.c.l.b16 %v3910
        %v4583 = vunpack.c.l.b16 %v3911
        %v4584 = vunpack.c.l.b16 %v3912
        %v4585 = vunpack.c.l.b16 %v3913
        %v4586 = vunpack.c.l.b16 %v3914
        %v4587 = vunpack.c.l.b16 %v3915
        %v4588 = vunpack.c.l.b16 %v3916
        %v4589 = vunpack.c.l.b16 %v3917
        %v4590 = vpack.c.b16 %v4527, %v4526
        %v4591 = vpack.c.b16 %v4529, %v4528
        %v4592 = vpack.c.b16 %v4531, %v4530
        %v4593 = vpack.c.b16 %v4533, %v4532
        %v4594 = vpack.c.b16 %v4535, %v4534
        %v4595 = vpack.c.b16 %v4537, %v4536
        %v4596 = vpack.c.b16 %v4539, %v4538
        %v4597 = vpack.c.b16 %v4541, %v4540
        %v4598 = vpack.c.b16 %v4543, %v4542
        %v4599 = vpack.c.b16 %v4545, %v4544
        %v4600 = vpack.c.b16 %v4547, %v4546
        %v4601 = vpack.c.b16 %v4549, %v4548
        %v4602 = vpack.c.b16 %v4551, %v4550
        %v4603 = vpack.c.b16 %v4553, %v4552
        %v4604 = vpack.c.b16 %v4555, %v4554
        %v4605 = vpack.c.b16 %v4557, %v4556
        %v4606 = vpack.c.b16 %v4559, %v4558
        %v4607 = vpack.c.b16 %v4561, %v4560
        %v4608 = vpack.c.b16 %v4563, %v4562
        %v4609 = vpack.c.b16 %v4565, %v4564
        %v4610 = vpack.c.b16 %v4567, %v4566
        %v4611 = vpack.c.b16 %v4569, %v4568
        %v4612 = vpack.c.b16 %v4571, %v4570
        %v4613 = vpack.c.b16 %v4573, %v4572
        %v4614 = vpack.c.b16 %v4575, %v4574
        %v4615 = vpack.c.b16 %v4577, %v4576
        %v4616 = vpack.c.b16 %v4579, %v4578
        %v4617 = vpack.c.b16 %v4581, %v4580
        %v4618 = vpack.c.b16 %v4583, %v4582
        %v4619 = vpack.c.b16 %v4585, %v4584
        %v4620 = vpack.c.b16 %v4587, %v4586
        %v4621 = vpack.c.b16 %v4589, %v4588
        %4654 = vmatprep.subr.bf16.mxu0 0
        %4655 = vmatpush1.bf16.msra.mxu0 %v4590
        %4656 = vmatprep.subr.bf16.mxu0 0
        %4657 = vmatpush1.bf16.msra.mxu0 %v4591
        %4658 = vmatprep.subr.bf16.mxu0 0
        %4659 = vmatpush1.bf16.msra.mxu0 %v4592
        %4660 = vmatprep.subr.bf16.mxu0 0
        %4661 = vmatpush1.bf16.msra.mxu0 %v4593
        %4662 = vmatprep.subr.bf16.mxu0 0
        %4663 = vmatpush1.bf16.msra.mxu0 %v4594
        %4664 = vmatprep.subr.bf16.mxu0 0
        %4665 = vmatpush1.bf16.msra.mxu0 %v4595
        %4666 = vmatprep.subr.bf16.mxu0 0
        %4667 = vmatpush1.bf16.msra.mxu0 %v4596
        %4668 = vmatprep.subr.bf16.mxu0 0
        %4669 = vmatpush1.bf16.msra.mxu0 %v4597
        %4670 = vmatprep.subr.bf16.mxu0 0
        %4671 = vmatpush1.bf16.msra.mxu0 %v4598
        %4672 = vmatprep.subr.bf16.mxu0 0
        %4673 = vmatpush1.bf16.msra.mxu0 %v4599
        %4674 = vmatprep.subr.bf16.mxu0 0
        %4675 = vmatpush1.bf16.msra.mxu0 %v4600
        %4676 = vmatprep.subr.bf16.mxu0 0
        %4677 = vmatpush1.bf16.msra.mxu0 %v4601
        %4678 = vmatprep.subr.bf16.mxu0 0
        %4679 = vmatpush1.bf16.msra.mxu0 %v4602
        %4680 = vmatprep.subr.bf16.mxu0 0
        %4681 = vmatpush1.bf16.msra.mxu0 %v4603
        %4682 = vmatprep.subr.bf16.mxu0 0
        %4683 = vmatpush1.bf16.msra.mxu0 %v4604
        %4684 = vmatprep.subr.bf16.mxu0 0
        %4685 = vmatpush1.bf16.msra.mxu0 %v4605
        %4686 = vmatprep.mubr.bf16.mxu0 %v3850
        %4687 = vmatmul.mubr.bf16.gmra.mrb[0].mxu0 %v3849
        %v4688 = vpop.f32.mrb[0].mxu0
        %v4689 = vadd.f32 %v4457, %v4688
        %v4690 = vpop.f32.mrb[0].mxu0
        %v4691 = vpop.f32.mrb[0].mxu0
        %v4692 = vpop.f32.mrb[0].mxu0
        %4693 = vdwg.mxu0
        %4694 = vmatprep.subr.bf16.mxu0 0
        %4695 = vmatpush1.bf16.msra.mxu0 %v4606
        %4696 = vmatprep.subr.bf16.mxu0 0
        %4697 = vmatpush1.bf16.msra.mxu0 %v4607
        %4698 = vmatprep.subr.bf16.mxu0 0
        %4699 = vmatpush1.bf16.msra.mxu0 %v4608
        %4700 = vmatprep.subr.bf16.mxu0 0
        %4701 = vmatpush1.bf16.msra.mxu0 %v4609
        %4702 = vmatprep.subr.bf16.mxu0 0
        %4703 = vmatpush1.bf16.msra.mxu0 %v4610
        %4704 = vmatprep.subr.bf16.mxu0 0
        %4705 = vmatpush1.bf16.msra.mxu0 %v4611
        %4706 = vmatprep.subr.bf16.mxu0 0
        %4707 = vmatpush1.bf16.msra.mxu0 %v4612
        %4708 = vmatprep.subr.bf16.mxu0 0
        %4709 = vmatpush1.bf16.msra.mxu0 %v4613
        %4710 = vmatprep.subr.bf16.mxu0 0
        %4711 = vmatpush1.bf16.msra.mxu0 %v4614
        %4712 = vmatprep.subr.bf16.mxu0 0
        %4713 = vmatpush1.bf16.msra.mxu0 %v4615
        %4714 = vmatprep.subr.bf16.mxu0 0
        %4715 = vmatpush1.bf16.msra.mxu0 %v4616
        %4716 = vmatprep.subr.bf16.mxu0 0
        %4717 = vmatpush1.bf16.msra.mxu0 %v4617
        %4718 = vmatprep.subr.bf16.mxu0 0
        %4719 = vmatpush1.bf16.msra.mxu0 %v4618
        %4720 = vmatprep.subr.bf16.mxu0 0
        %4721 = vmatpush1.bf16.msra.mxu0 %v4619
        %4722 = vmatprep.subr.bf16.mxu0 0
        %4723 = vmatpush1.bf16.msra.mxu0 %v4620
        %4724 = vmatprep.subr.bf16.mxu0 0
        %4725 = vmatpush1.bf16.msra.mxu0 %v4621
        %4726 = vmatprep.mubr.bf16.mxu0 %v3852
        %4727 = vmatmul.mubr.bf16.gmra.mrb[0].mxu0 %v3851
        %v4728 = vpop.f32.mrb[0].mxu0
        %v4729 = vadd.f32 %v4689, %v4728
        %v4730 = vpop.f32.mrb[0].mxu0
        %v4731 = vpop.f32.mrb[0].mxu0
        %v4732 = vpop.f32.mrb[0].mxu0
        %4733 = vdwg.mxu0
        %v4734 = vld [vmem:[%s3640 + $0x20] sm:$0xff]
        %v4735 = vld [vmem:[%s3640 + $0x28] sm:$0xff]
        %v4736 = vld [vmem:[%s3640 + $0x60] sm:$0xff]
        %v4737 = vld [vmem:[%s3640 + $0x68] sm:$0xff]
        %v4738 = vld [vmem:[%s3640 + $0xa0] sm:$0xff]
        %v4739 = vld [vmem:[%s3640 + $0xa8] sm:$0xff]
        %v4740 = vld [vmem:[%s3640 + $0xe0] sm:$0xff]
        %v4741 = vld [vmem:[%s3640 + $0xe8] sm:$0xff]
        %v4742 = vld [vmem:[%s3640 + $0x120] sm:$0xff]
        %v4743 = vld [vmem:[%s3640 + $0x128] sm:$0xff]
        %v4744 = vld [vmem:[%s3640 + $0x160] sm:$0xff]
        %v4745 = vld [vmem:[%s3640 + $0x168] sm:$0xff]
        %v4746 = vld [vmem:[%s3640 + $0x1a0] sm:$0xff]
        %v4747 = vld [vmem:[%s3640 + $0x1a8] sm:$0xff]
        %v4748 = vld [vmem:[%s3640 + $0x1e0] sm:$0xff]
        %v4749 = vld [vmem:[%s3640 + $0x1e8] sm:$0xff]
        %v4750 = vld [vmem:[%s3657 + $0x8] sm:$0xf]
        %v4752 = vlaneseq
        %v4753 = vshrl.u32 %v4752, 7
        %v4754 = vsub.s32 0, %v4753
        %v4755 = vrot.slane %v4750, %v4754
        %v4756 = vlaneseq
        %v4757 = vshrl.u32 %v4756, 7
        %v4758 = vsub.s32 1, %v4757
        %v4759 = vrot.slane %v4750, %v4758
        %v4760 = vlaneseq
        %v4761 = vshrl.u32 %v4760, 7
        %v4762 = vsub.s32 2, %v4761
        %v4763 = vrot.slane %v4750, %v4762
        %v4764 = vlaneseq
        %v4765 = vshrl.u32 %v4764, 7
        %v4766 = vsub.s32 3, %v4765
        %v4767 = vrot.slane %v4750, %v4766
        %v4788 = vunpack.c.l.b16 %v4734
        %v4789 = vunpack.c.h.b16 %v4734
        %v4790 = vunpack.c.l.b16 %v4735
        %v4791 = vunpack.c.h.b16 %v4735
        %v4792 = vunpack.c.l.b16 %v4736
        %v4793 = vunpack.c.h.b16 %v4736
        %v4794 = vunpack.c.l.b16 %v4737
        %v4795 = vunpack.c.h.b16 %v4737
        %v4796 = vunpack.c.l.b16 %v4738
        %v4797 = vunpack.c.h.b16 %v4738
        %v4798 = vunpack.c.l.b16 %v4739
        %v4799 = vunpack.c.h.b16 %v4739
        %v4800 = vunpack.c.l.b16 %v4740
        %v4801 = vunpack.c.h.b16 %v4740
        %v4802 = vunpack.c.l.b16 %v4741
        %v4803 = vunpack.c.h.b16 %v4741
        %v4804 = vunpack.c.l.b16 %v4742
        %v4805 = vunpack.c.h.b16 %v4742
        %v4806 = vunpack.c.l.b16 %v4743
        %v4807 = vunpack.c.h.b16 %v4743
        %v4808 = vunpack.c.l.b16 %v4744
        %v4809 = vunpack.c.h.b16 %v4744
        %v4810 = vunpack.c.l.b16 %v4745
        %v4811 = vunpack.c.h.b16 %v4745
        %v4812 = vunpack.c.l.b16 %v4746
        %v4813 = vunpack.c.h.b16 %v4746
        %v4814 = vunpack.c.l.b16 %v4747
        %v4815 = vunpack.c.h.b16 %v4747
        %v4816 = vunpack.c.l.b16 %v4748
        %v4817 = vunpack.c.h.b16 %v4748
        %v4818 = vunpack.c.l.b16 %v4749
        %v4819 = vunpack.c.h.b16 %v4749
        %v4820 = vpack.c.b16 %v4792, %v4788
        %v4821 = vpack.c.b16 %v4793, %v4789
        %v4822 = vpack.c.b16 %v4794, %v4790
        %v4823 = vpack.c.b16 %v4795, %v4791
        %v4824 = vpack.c.b16 %v4800, %v4796
        %v4825 = vpack.c.b16 %v4801, %v4797
        %v4826 = vpack.c.b16 %v4802, %v4798
        %v4827 = vpack.c.b16 %v4803, %v4799
        %v4828 = vpack.c.b16 %v4808, %v4804
        %v4829 = vpack.c.b16 %v4809, %v4805
        %v4830 = vpack.c.b16 %v4810, %v4806
        %v4831 = vpack.c.b16 %v4811, %v4807
        %v4832 = vpack.c.b16 %v4816, %v4812
        %v4833 = vpack.c.b16 %v4817, %v4813
        %v4834 = vpack.c.b16 %v4818, %v4814
        %v4835 = vpack.c.b16 %v4819, %v4815
        %4852 = vmatprep.subr.bf16.mxu0 %v4821
        %4853 = vmatpush1.bf16.msra.mxu0 %v4820
        %4854 = vmatprep.subr.bf16.mxu0 %v4825
        %4855 = vmatpush1.bf16.msra.mxu0 %v4824
        %4856 = vmatprep.subr.bf16.mxu0 %v4829
        %4857 = vmatpush1.bf16.msra.mxu0 %v4828
        %4858 = vmatprep.subr.bf16.mxu0 %v4833
        %4859 = vmatpush1.bf16.msra.mxu0 %v4832
        %4860 = vmatprep.subr.bf16.mxu0 0
        %4861 = vmatpush1.bf16.msra.mxu0 0
        %4862 = vmatprep.subr.bf16.mxu0 0
        %4863 = vmatpush1.bf16.msra.mxu0 0
        %4864 = vmatprep.subr.bf16.mxu0 0
        %4865 = vmatpush1.bf16.msra.mxu0 0
        %4866 = vmatprep.subr.bf16.mxu0 0
        %4867 = vmatpush1.bf16.msra.mxu0 0
        %4868 = vmatprep.subr.bf16.mxu0 0
        %4869 = vmatpush1.bf16.msra.mxu0 0
        %4870 = vmatprep.subr.bf16.mxu0 0
        %4871 = vmatpush1.bf16.msra.mxu0 0
        %4872 = vmatprep.subr.bf16.mxu0 0
        %4873 = vmatpush1.bf16.msra.mxu0 0
        %4874 = vmatprep.subr.bf16.mxu0 0
        %4875 = vmatpush1.bf16.msra.mxu0 0
        %4876 = vmatprep.subr.bf16.mxu0 0
        %4877 = vmatpush1.bf16.msra.mxu0 0
        %4878 = vmatprep.subr.bf16.mxu0 0
        %4879 = vmatpush1.bf16.msra.mxu0 0
        %4880 = vmatprep.subr.bf16.mxu0 0
        %4881 = vmatpush1.bf16.msra.mxu0 0
        %4882 = vmatprep.subr.bf16.mxu0 0
        %4883 = vmatpush1.bf16.msra.mxu0 0
        %4884 = vmatprep.mubr.bf16.mxu0 0
        %4885 = vmatmul.mubr.bf16.gmra.mrb[0].mxu0 %v3761
        %v4886 = vpop.f32.mrb[0].mxu0
        %v4887 = vadd.f32 %v4755, %v4886
        %v4888 = vpop.f32.mrb[0].mxu0
        %v4889 = vadd.f32 %v4759, %v4888
        %v4890 = vpop.f32.mrb[0].mxu0
        %v4891 = vpop.f32.mrb[0].mxu0
        %4892 = vdwg.mxu0
        %4893 = vmatprep.subr.bf16.mxu0 %v4823
        %4894 = vmatpush1.bf16.msra.mxu0 %v4822
        %4895 = vmatprep.subr.bf16.mxu0 %v4827
        %4896 = vmatpush1.bf16.msra.mxu0 %v4826
        %4897 = vmatprep.subr.bf16.mxu0 %v4831
        %4898 = vmatpush1.bf16.msra.mxu0 %v4830
        %4899 = vmatprep.subr.bf16.mxu0 %v4835
        %4900 = vmatpush1.bf16.msra.mxu0 %v4834
        %4901 = vmatprep.subr.bf16.mxu0 0
        %4902 = vmatpush1.bf16.msra.mxu0 0
        %4903 = vmatprep.subr.bf16.mxu0 0
        %4904 = vmatpush1.bf16.msra.mxu0 0
        %4905 = vmatprep.subr.bf16.mxu0 0
        %4906 = vmatpush1.bf16.msra.mxu0 0
        %4907 = vmatprep.subr.bf16.mxu0 0
        %4908 = vmatpush1.bf16.msra.mxu0 0
        %4909 = vmatprep.subr.bf16.mxu0 0
        %4910 = vmatpush1.bf16.msra.mxu0 0
        %4911 = vmatprep.subr.bf16.mxu0 0
        %4912 = vmatpush1.bf16.msra.mxu0 0
        %4913 = vmatprep.subr.bf16.mxu0 0
        %4914 = vmatpush1.bf16.msra.mxu0 0
        %4915 = vmatprep.subr.bf16.mxu0 0
        %4916 = vmatpush1.bf16.msra.mxu0 0
        %4917 = vmatprep.subr.bf16.mxu0 0
        %4918 = vmatpush1.bf16.msra.mxu0 0
        %4919 = vmatprep.subr.bf16.mxu0 0
        %4920 = vmatpush1.bf16.msra.mxu0 0
        %4921 = vmatprep.subr.bf16.mxu0 0
        %4922 = vmatpush1.bf16.msra.mxu0 0
        %4923 = vmatprep.subr.bf16.mxu0 0
        %4924 = vmatpush1.bf16.msra.mxu0 0
        %4925 = vmatprep.mubr.bf16.mxu0 0
        %4926 = vmatmul.mubr.bf16.gmra.mrb[0].mxu0 %v3761
        %v4927 = vpop.f32.mrb[0].mxu0
        %v4928 = vadd.f32 %v4763, %v4927
        %v4929 = vpop.f32.mrb[0].mxu0
        %v4930 = vadd.f32 %v4767, %v4929
        %v4931 = vpop.f32.mrb[0].mxu0
        %v4932 = vpop.f32.mrb[0].mxu0
        %4933 = vdwg.mxu0
        %v4934 = vmax.f32 %v4887, 0.0
        %v4935 = vmax.f32 %v4889, 0.0
        %v4936 = vmax.f32 %v4928, 0.0
        %v4937 = vmax.f32 %v4930, 0.0
        %v4938 = vpack.c.bf16 %v4934, %v4934
        %v4939 = vpack.c.bf16 %v4935, %v4935
        %v4940 = vpack.c.bf16 %v4936, %v4936
        %v4941 = vpack.c.bf16 %v4937, %v4937
        %v4942 = vld [vmem:[%s3853 + $0x200] sm:$0xf]
        %v4943 = vld [vmem:[%s3853 + $0x204] sm:$0xf]
        %v4944 = vld [vmem:[%s3853 + $0x208] sm:$0xf]
        %v4945 = vld [vmem:[%s3853 + $0x20c] sm:$0xf]
        %v4946 = vld [vmem:[%s3853 + $0x210] sm:$0xf]
        %v4947 = vld [vmem:[%s3853 + $0x214] sm:$0xf]
        %v4948 = vld [vmem:[%s3853 + $0x218] sm:$0xf]
        %v4949 = vld [vmem:[%s3853 + $0x21c] sm:$0xf]
        %v4950 = vld [vmem:[%s3853 + $0x220] sm:$0xf]
        %v4951 = vld [vmem:[%s3853 + $0x224] sm:$0xf]
        %v4952 = vld [vmem:[%s3853 + $0x228] sm:$0xf]
        %v4953 = vld [vmem:[%s3853 + $0x22c] sm:$0xf]
        %v4954 = vld [vmem:[%s3853 + $0x230] sm:$0xf]
        %v4955 = vld [vmem:[%s3853 + $0x234] sm:$0xf]
        %v4956 = vld [vmem:[%s3853 + $0x238] sm:$0xf]
        %v4957 = vld [vmem:[%s3853 + $0x23c] sm:$0xf]
        %v4958 = vld [vmem:[%s3853 + $0x240] sm:$0xf]
        %v4959 = vld [vmem:[%s3853 + $0x244] sm:$0xf]
        %v4960 = vld [vmem:[%s3853 + $0x248] sm:$0xf]
        %v4961 = vld [vmem:[%s3853 + $0x24c] sm:$0xf]
        %v4962 = vld [vmem:[%s3853 + $0x250] sm:$0xf]
        %v4963 = vld [vmem:[%s3853 + $0x254] sm:$0xf]
        %v4964 = vld [vmem:[%s3853 + $0x258] sm:$0xf]
        %v4965 = vld [vmem:[%s3853 + $0x25c] sm:$0xf]
        %v4966 = vld [vmem:[%s3853 + $0x260] sm:$0xf]
        %v4967 = vld [vmem:[%s3853 + $0x264] sm:$0xf]
        %v4968 = vld [vmem:[%s3853 + $0x268] sm:$0xf]
        %v4969 = vld [vmem:[%s3853 + $0x26c] sm:$0xf]
        %v4970 = vld [vmem:[%s3853 + $0x270] sm:$0xf]
        %v4971 = vld [vmem:[%s3853 + $0x274] sm:$0xf]
        %v4972 = vld [vmem:[%s3853 + $0x278] sm:$0xf]
        %v4973 = vld [vmem:[%s3853 + $0x27c] sm:$0xf]
        %v4974 = vld [vmem:[%s3853 + $0x280] sm:$0xf]
        %v4975 = vld [vmem:[%s3853 + $0x284] sm:$0xf]
        %v4976 = vld [vmem:[%s3853 + $0x288] sm:$0xf]
        %v4977 = vld [vmem:[%s3853 + $0x28c] sm:$0xf]
        %v4978 = vld [vmem:[%s3853 + $0x290] sm:$0xf]
        %v4979 = vld [vmem:[%s3853 + $0x294] sm:$0xf]
        %v4980 = vld [vmem:[%s3853 + $0x298] sm:$0xf]
        %v4981 = vld [vmem:[%s3853 + $0x29c] sm:$0xf]
        %v4982 = vld [vmem:[%s3853 + $0x2a0] sm:$0xf]
        %v4983 = vld [vmem:[%s3853 + $0x2a4] sm:$0xf]
        %v4984 = vld [vmem:[%s3853 + $0x2a8] sm:$0xf]
        %v4985 = vld [vmem:[%s3853 + $0x2ac] sm:$0xf]
        %v4986 = vld [vmem:[%s3853 + $0x2b0] sm:$0xf]
        %v4987 = vld [vmem:[%s3853 + $0x2b4] sm:$0xf]
        %v4988 = vld [vmem:[%s3853 + $0x2b8] sm:$0xf]
        %v4989 = vld [vmem:[%s3853 + $0x2bc] sm:$0xf]
        %v4990 = vld [vmem:[%s3853 + $0x2c0] sm:$0xf]
        %v4991 = vld [vmem:[%s3853 + $0x2c4] sm:$0xf]
        %v4992 = vld [vmem:[%s3853 + $0x2c8] sm:$0xf]
        %v4993 = vld [vmem:[%s3853 + $0x2cc] sm:$0xf]
        %v4994 = vld [vmem:[%s3853 + $0x2d0] sm:$0xf]
        %v4995 = vld [vmem:[%s3853 + $0x2d4] sm:$0xf]
        %v4996 = vld [vmem:[%s3853 + $0x2d8] sm:$0xf]
        %v4997 = vld [vmem:[%s3853 + $0x2dc] sm:$0xf]
        %v4998 = vld [vmem:[%s3853 + $0x2e0] sm:$0xf]
        %v4999 = vld [vmem:[%s3853 + $0x2e4] sm:$0xf]
        %v5000 = vld [vmem:[%s3853 + $0x2e8] sm:$0xf]
        %v5001 = vld [vmem:[%s3853 + $0x2ec] sm:$0xf]
        %v5002 = vld [vmem:[%s3853 + $0x2f0] sm:$0xf]
        %v5003 = vld [vmem:[%s3853 + $0x2f4] sm:$0xf]
        %v5004 = vld [vmem:[%s3853 + $0x2f8] sm:$0xf]
        %v5005 = vld [vmem:[%s3853 + $0x2fc] sm:$0xf]
        %v5070 = vunpack.c.l.b16 %v4942
        %v5071 = vunpack.c.l.b16 %v4943
        %v5072 = vunpack.c.l.b16 %v4944
        %v5073 = vunpack.c.l.b16 %v4945
        %v5074 = vunpack.c.l.b16 %v4946
        %v5075 = vunpack.c.l.b16 %v4947
        %v5076 = vunpack.c.l.b16 %v4948
        %v5077 = vunpack.c.l.b16 %v4949
        %v5078 = vunpack.c.l.b16 %v4950
        %v5079 = vunpack.c.l.b16 %v4951
        %v5080 = vunpack.c.l.b16 %v4952
        %v5081 = vunpack.c.l.b16 %v4953
        %v5082 = vunpack.c.l.b16 %v4954
        %v5083 = vunpack.c.l.b16 %v4955
        %v5084 = vunpack.c.l.b16 %v4956
        %v5085 = vunpack.c.l.b16 %v4957
        %v5086 = vunpack.c.l.b16 %v4958
        %v5087 = vunpack.c.l.b16 %v4959
        %v5088 = vunpack.c.l.b16 %v4960
        %v5089 = vunpack.c.l.b16 %v4961
        %v5090 = vunpack.c.l.b16 %v4962
        %v5091 = vunpack.c.l.b16 %v4963
        %v5092 = vunpack.c.l.b16 %v4964
        %v5093 = vunpack.c.l.b16 %v4965
        %v5094 = vunpack.c.l.b16 %v4966
        %v5095 = vunpack.c.l.b16 %v4967
        %v5096 = vunpack.c.l.b16 %v4968
        %v5097 = vunpack.c.l.b16 %v4969
        %v5098 = vunpack.c.l.b16 %v4970
        %v5099 = vunpack.c.l.b16 %v4971
        %v5100 = vunpack.c.l.b16 %v4972
        %v5101 = vunpack.c.l.b16 %v4973
        %v5102 = vunpack.c.l.b16 %v4974
        %v5103 = vunpack.c.l.b16 %v4975
        %v5104 = vunpack.c.l.b16 %v4976
        %v5105 = vunpack.c.l.b16 %v4977
        %v5106 = vunpack.c.l.b16 %v4978
        %v5107 = vunpack.c.l.b16 %v4979
        %v5108 = vunpack.c.l.b16 %v4980
        %v5109 = vunpack.c.l.b16 %v4981
        %v5110 = vunpack.c.l.b16 %v4982
        %v5111 = vunpack.c.l.b16 %v4983
        %v5112 = vunpack.c.l.b16 %v4984
        %v5113 = vunpack.c.l.b16 %v4985
        %v5114 = vunpack.c.l.b16 %v4986
        %v5115 = vunpack.c.l.b16 %v4987
        %v5116 = vunpack.c.l.b16 %v4988
        %v5117 = vunpack.c.l.b16 %v4989
        %v5118 = vunpack.c.l.b16 %v4990
        %v5119 = vunpack.c.l.b16 %v4991
        %v5120 = vunpack.c.l.b16 %v4992
        %v5121 = vunpack.c.l.b16 %v4993
        %v5122 = vunpack.c.l.b16 %v4994
        %v5123 = vunpack.c.l.b16 %v4995
        %v5124 = vunpack.c.l.b16 %v4996
        %v5125 = vunpack.c.l.b16 %v4997
        %v5126 = vunpack.c.l.b16 %v4998
        %v5127 = vunpack.c.l.b16 %v4999
        %v5128 = vunpack.c.l.b16 %v5000
        %v5129 = vunpack.c.l.b16 %v5001
        %v5130 = vunpack.c.l.b16 %v5002
        %v5131 = vunpack.c.l.b16 %v5003
        %v5132 = vunpack.c.l.b16 %v5004
        %v5133 = vunpack.c.l.b16 %v5005
        %v5134 = vpack.c.b16 %v5071, %v5070
        %v5135 = vpack.c.b16 %v5073, %v5072
        %v5136 = vpack.c.b16 %v5075, %v5074
        %v5137 = vpack.c.b16 %v5077, %v5076
        %v5138 = vpack.c.b16 %v5079, %v5078
        %v5139 = vpack.c.b16 %v5081, %v5080
        %v5140 = vpack.c.b16 %v5083, %v5082
        %v5141 = vpack.c.b16 %v5085, %v5084
        %v5142 = vpack.c.b16 %v5087, %v5086
        %v5143 = vpack.c.b16 %v5089, %v5088
        %v5144 = vpack.c.b16 %v5091, %v5090
        %v5145 = vpack.c.b16 %v5093, %v5092
        %v5146 = vpack.c.b16 %v5095, %v5094
        %v5147 = vpack.c.b16 %v5097, %v5096
        %v5148 = vpack.c.b16 %v5099, %v5098
        %v5149 = vpack.c.b16 %v5101, %v5100
        %v5150 = vpack.c.b16 %v5103, %v5102
        %v5151 = vpack.c.b16 %v5105, %v5104
        %v5152 = vpack.c.b16 %v5107, %v5106
        %v5153 = vpack.c.b16 %v5109, %v5108
        %v5154 = vpack.c.b16 %v5111, %v5110
        %v5155 = vpack.c.b16 %v5113, %v5112
        %v5156 = vpack.c.b16 %v5115, %v5114
        %v5157 = vpack.c.b16 %v5117, %v5116
        %v5158 = vpack.c.b16 %v5119, %v5118
        %v5159 = vpack.c.b16 %v5121, %v5120
        %v5160 = vpack.c.b16 %v5123, %v5122
        %v5161 = vpack.c.b16 %v5125, %v5124
        %v5162 = vpack.c.b16 %v5127, %v5126
        %v5163 = vpack.c.b16 %v5129, %v5128
        %v5164 = vpack.c.b16 %v5131, %v5130
        %v5165 = vpack.c.b16 %v5133, %v5132
        %5198 = vmatprep.subr.bf16.mxu0 0
        %5199 = vmatpush1.bf16.msra.mxu0 %v5134
        %5200 = vmatprep.subr.bf16.mxu0 0
        %5201 = vmatpush1.bf16.msra.mxu0 %v5135
        %5202 = vmatprep.subr.bf16.mxu0 0
        %5203 = vmatpush1.bf16.msra.mxu0 %v5136
        %5204 = vmatprep.subr.bf16.mxu0 0
        %5205 = vmatpush1.bf16.msra.mxu0 %v5137
        %5206 = vmatprep.subr.bf16.mxu0 0
        %5207 = vmatpush1.bf16.msra.mxu0 %v5138
        %5208 = vmatprep.subr.bf16.mxu0 0
        %5209 = vmatpush1.bf16.msra.mxu0 %v5139
        %5210 = vmatprep.subr.bf16.mxu0 0
        %5211 = vmatpush1.bf16.msra.mxu0 %v5140
        %5212 = vmatprep.subr.bf16.mxu0 0
        %5213 = vmatpush1.bf16.msra.mxu0 %v5141
        %5214 = vmatprep.subr.bf16.mxu0 0
        %5215 = vmatpush1.bf16.msra.mxu0 %v5142
        %5216 = vmatprep.subr.bf16.mxu0 0
        %5217 = vmatpush1.bf16.msra.mxu0 %v5143
        %5218 = vmatprep.subr.bf16.mxu0 0
        %5219 = vmatpush1.bf16.msra.mxu0 %v5144
        %5220 = vmatprep.subr.bf16.mxu0 0
        %5221 = vmatpush1.bf16.msra.mxu0 %v5145
        %5222 = vmatprep.subr.bf16.mxu0 0
        %5223 = vmatpush1.bf16.msra.mxu0 %v5146
        %5224 = vmatprep.subr.bf16.mxu0 0
        %5225 = vmatpush1.bf16.msra.mxu0 %v5147
        %5226 = vmatprep.subr.bf16.mxu0 0
        %5227 = vmatpush1.bf16.msra.mxu0 %v5148
        %5228 = vmatprep.subr.bf16.mxu0 0
        %5229 = vmatpush1.bf16.msra.mxu0 %v5149
        %5230 = vmatprep.mubr.bf16.mxu0 %v4939
        %5231 = vmatmul.mubr.bf16.gmra.mrb[0].mxu0 %v4938
        %v5232 = vpop.f32.mrb[0].mxu0
        %v5233 = vadd.f32 0.0, %v5232
        %v5234 = vpop.f32.mrb[0].mxu0
        %v5235 = vpop.f32.mrb[0].mxu0
        %v5236 = vpop.f32.mrb[0].mxu0
        %5237 = vdwg.mxu0
        %5238 = vmatprep.subr.bf16.mxu0 0
        %5239 = vmatpush1.bf16.msra.mxu0 %v5150
        %5240 = vmatprep.subr.bf16.mxu0 0
        %5241 = vmatpush1.bf16.msra.mxu0 %v5151
        %5242 = vmatprep.subr.bf16.mxu0 0
        %5243 = vmatpush1.bf16.msra.mxu0 %v5152
        %5244 = vmatprep.subr.bf16.mxu0 0
        %5245 = vmatpush1.bf16.msra.mxu0 %v5153
        %5246 = vmatprep.subr.bf16.mxu0 0
        %5247 = vmatpush1.bf16.msra.mxu0 %v5154
        %5248 = vmatprep.subr.bf16.mxu0 0
        %5249 = vmatpush1.bf16.msra.mxu0 %v5155
        %5250 = vmatprep.subr.bf16.mxu0 0
        %5251 = vmatpush1.bf16.msra.mxu0 %v5156
        %5252 = vmatprep.subr.bf16.mxu0 0
        %5253 = vmatpush1.bf16.msra.mxu0 %v5157
        %5254 = vmatprep.subr.bf16.mxu0 0
        %5255 = vmatpush1.bf16.msra.mxu0 %v5158
        %5256 = vmatprep.subr.bf16.mxu0 0
        %5257 = vmatpush1.bf16.msra.mxu0 %v5159
        %5258 = vmatprep.subr.bf16.mxu0 0
        %5259 = vmatpush1.bf16.msra.mxu0 %v5160
        %5260 = vmatprep.subr.bf16.mxu0 0
        %5261 = vmatpush1.bf16.msra.mxu0 %v5161
        %5262 = vmatprep.subr.bf16.mxu0 0
        %5263 = vmatpush1.bf16.msra.mxu0 %v5162
        %5264 = vmatprep.subr.bf16.mxu0 0
        %5265 = vmatpush1.bf16.msra.mxu0 %v5163
        %5266 = vmatprep.subr.bf16.mxu0 0
        %5267 = vmatpush1.bf16.msra.mxu0 %v5164
        %5268 = vmatprep.subr.bf16.mxu0 0
        %5269 = vmatpush1.bf16.msra.mxu0 %v5165
        %5270 = vmatprep.mubr.bf16.mxu0 %v4941
        %5271 = vmatmul.mubr.bf16.gmra.mrb[0].mxu0 %v4940
        %v5272 = vpop.f32.mrb[0].mxu0
        %v5273 = vadd.f32 %v5233, %v5272
        %v5274 = vpop.f32.mrb[0].mxu0
        %v5275 = vpop.f32.mrb[0].mxu0
        %v5276 = vpop.f32.mrb[0].mxu0
        %5277 = vdwg.mxu0
        %v5278 = vadd.f32 %v4729, %v5273
        %v5279 = vld [vmem:[%s3640 + $0x30] sm:$0xff]
        %v5280 = vld [vmem:[%s3640 + $0x38] sm:$0xff]
        %v5281 = vld [vmem:[%s3640 + $0x70] sm:$0xff]
        %v5282 = vld [vmem:[%s3640 + $0x78] sm:$0xff]
        %v5283 = vld [vmem:[%s3640 + $0xb0] sm:$0xff]
        %v5284 = vld [vmem:[%s3640 + $0xb8] sm:$0xff]
        %v5285 = vld [vmem:[%s3640 + $0xf0] sm:$0xff]
        %v5286 = vld [vmem:[%s3640 + $0xf8] sm:$0xff]
        %v5287 = vld [vmem:[%s3640 + $0x130] sm:$0xff]
        %v5288 = vld [vmem:[%s3640 + $0x138] sm:$0xff]
        %v5289 = vld [vmem:[%s3640 + $0x170] sm:$0xff]
        %v5290 = vld [vmem:[%s3640 + $0x178] sm:$0xff]
        %v5291 = vld [vmem:[%s3640 + $0x1b0] sm:$0xff]
        %v5292 = vld [vmem:[%s3640 + $0x1b8] sm:$0xff]
        %v5293 = vld [vmem:[%s3640 + $0x1f0] sm:$0xff]
        %v5294 = vld [vmem:[%s3640 + $0x1f8] sm:$0xff]
        %v5295 = vld [vmem:[%s3657 + $0xc] sm:$0xf]
        %v5297 = vlaneseq
        %v5298 = vshrl.u32 %v5297, 7
        %v5299 = vsub.s32 0, %v5298
        %v5300 = vrot.slane %v5295, %v5299
        %v5301 = vlaneseq
        %v5302 = vshrl.u32 %v5301, 7
        %v5303 = vsub.s32 1, %v5302
        %v5304 = vrot.slane %v5295, %v5303
        %v5305 = vlaneseq
        %v5306 = vshrl.u32 %v5305, 7
        %v5307 = vsub.s32 2, %v5306
        %v5308 = vrot.slane %v5295, %v5307
        %v5309 = vlaneseq
        %v5310 = vshrl.u32 %v5309, 7
        %v5311 = vsub.s32 3, %v5310
        %v5312 = vrot.slane %v5295, %v5311
        %v5333 = vunpack.c.l.b16 %v5279
        %v5334 = vunpack.c.h.b16 %v5279
        %v5335 = vunpack.c.l.b16 %v5280
        %v5336 = vunpack.c.h.b16 %v5280
        %v5337 = vunpack.c.l.b16 %v5281
        %v5338 = vunpack.c.h.b16 %v5281
        %v5339 = vunpack.c.l.b16 %v5282
        %v5340 = vunpack.c.h.b16 %v5282
        %v5341 = vunpack.c.l.b16 %v5283
        %v5342 = vunpack.c.h.b16 %v5283
        %v5343 = vunpack.c.l.b16 %v5284
        %v5344 = vunpack.c.h.b16 %v5284
        %v5345 = vunpack.c.l.b16 %v5285
        %v5346 = vunpack.c.h.b16 %v5285
        %v5347 = vunpack.c.l.b16 %v5286
        %v5348 = vunpack.c.h.b16 %v5286
        %v5349 = vunpack.c.l.b16 %v5287
        %v5350 = vunpack.c.h.b16 %v5287
        %v5351 = vunpack.c.l.b16 %v5288
        %v5352 = vunpack.c.h.b16 %v5288
        %v5353 = vunpack.c.l.b16 %v5289
        %v5354 = vunpack.c.h.b16 %v5289
        %v5355 = vunpack.c.l.b16 %v5290
        %v5356 = vunpack.c.h.b16 %v5290
        %v5357 = vunpack.c.l.b16 %v5291
        %v5358 = vunpack.c.h.b16 %v5291
        %v5359 = vunpack.c.l.b16 %v5292
        %v5360 = vunpack.c.h.b16 %v5292
        %v5361 = vunpack.c.l.b16 %v5293
        %v5362 = vunpack.c.h.b16 %v5293
        %v5363 = vunpack.c.l.b16 %v5294
        %v5364 = vunpack.c.h.b16 %v5294
        %v5365 = vpack.c.b16 %v5337, %v5333
        %v5366 = vpack.c.b16 %v5338, %v5334
        %v5367 = vpack.c.b16 %v5339, %v5335
        %v5368 = vpack.c.b16 %v5340, %v5336
        %v5369 = vpack.c.b16 %v5345, %v5341
        %v5370 = vpack.c.b16 %v5346, %v5342
        %v5371 = vpack.c.b16 %v5347, %v5343
        %v5372 = vpack.c.b16 %v5348, %v5344
        %v5373 = vpack.c.b16 %v5353, %v5349
        %v5374 = vpack.c.b16 %v5354, %v5350
        %v5375 = vpack.c.b16 %v5355, %v5351
        %v5376 = vpack.c.b16 %v5356, %v5352
        %v5377 = vpack.c.b16 %v5361, %v5357
        %v5378 = vpack.c.b16 %v5362, %v5358
        %v5379 = vpack.c.b16 %v5363, %v5359
        %v5380 = vpack.c.b16 %v5364, %v5360
        %5397 = vmatprep.subr.bf16.mxu0 %v5366
        %5398 = vmatpush1.bf16.msra.mxu0 %v5365
        %5399 = vmatprep.subr.bf16.mxu0 %v5370
        %5400 = vmatpush1.bf16.msra.mxu0 %v5369
        %5401 = vmatprep.subr.bf16.mxu0 %v5374
        %5402 = vmatpush1.bf16.msra.mxu0 %v5373
        %5403 = vmatprep.subr.bf16.mxu0 %v5378
        %5404 = vmatpush1.bf16.msra.mxu0 %v5377
        %5405 = vmatprep.subr.bf16.mxu0 0
        %5406 = vmatpush1.bf16.msra.mxu0 0
        %5407 = vmatprep.subr.bf16.mxu0 0
        %5408 = vmatpush1.bf16.msra.mxu0 0
        %5409 = vmatprep.subr.bf16.mxu0 0
        %5410 = vmatpush1.bf16.msra.mxu0 0
        %5411 = vmatprep.subr.bf16.mxu0 0
        %5412 = vmatpush1.bf16.msra.mxu0 0
        %5413 = vmatprep.subr.bf16.mxu0 0
        %5414 = vmatpush1.bf16.msra.mxu0 0
        %5415 = vmatprep.subr.bf16.mxu0 0
        %5416 = vmatpush1.bf16.msra.mxu0 0
        %5417 = vmatprep.subr.bf16.mxu0 0
        %5418 = vmatpush1.bf16.msra.mxu0 0
        %5419 = vmatprep.subr.bf16.mxu0 0
        %5420 = vmatpush1.bf16.msra.mxu0 0
        %5421 = vmatprep.subr.bf16.mxu0 0
        %5422 = vmatpush1.bf16.msra.mxu0 0
        %5423 = vmatprep.subr.bf16.mxu0 0
        %5424 = vmatpush1.bf16.msra.mxu0 0
        %5425 = vmatprep.subr.bf16.mxu0 0
        %5426 = vmatpush1.bf16.msra.mxu0 0
        %5427 = vmatprep.subr.bf16.mxu0 0
        %5428 = vmatpush1.bf16.msra.mxu0 0
        %5429 = vmatprep.mubr.bf16.mxu0 0
        %5430 = vmatmul.mubr.bf16.gmra.mrb[0].mxu0 %v3761
        %v5431 = vpop.f32.mrb[0].mxu0
        %v5432 = vadd.f32 %v5300, %v5431
        %v5433 = vpop.f32.mrb[0].mxu0
        %v5434 = vadd.f32 %v5304, %v5433
        %v5435 = vpop.f32.mrb[0].mxu0
        %v5436 = vpop.f32.mrb[0].mxu0
        %5437 = vdwg.mxu0
        %5438 = vmatprep.subr.bf16.mxu0 %v5368
        %5439 = vmatpush1.bf16.msra.mxu0 %v5367
        %5440 = vmatprep.subr.bf16.mxu0 %v5372
        %5441 = vmatpush1.bf16.msra.mxu0 %v5371
        %5442 = vmatprep.subr.bf16.mxu0 %v5376
        %5443 = vmatpush1.bf16.msra.mxu0 %v5375
        %5444 = vmatprep.subr.bf16.mxu0 %v5380
        %5445 = vmatpush1.bf16.msra.mxu0 %v5379
        %5446 = vmatprep.subr.bf16.mxu0 0
        %5447 = vmatpush1.bf16.msra.mxu0 0
        %5448 = vmatprep.subr.bf16.mxu0 0
        %5449 = vmatpush1.bf16.msra.mxu0 0
        %5450 = vmatprep.subr.bf16.mxu0 0
        %5451 = vmatpush1.bf16.msra.mxu0 0
        %5452 = vmatprep.subr.bf16.mxu0 0
        %5453 = vmatpush1.bf16.msra.mxu0 0
        %5454 = vmatprep.subr.bf16.mxu0 0
        %5455 = vmatpush1.bf16.msra.mxu0 0
        %5456 = vmatprep.subr.bf16.mxu0 0
        %5457 = vmatpush1.bf16.msra.mxu0 0
        %5458 = vmatprep.subr.bf16.mxu0 0
        %5459 = vmatpush1.bf16.msra.mxu0 0
        %5460 = vmatprep.subr.bf16.mxu0 0
        %5461 = vmatpush1.bf16.msra.mxu0 0
        %5462 = vmatprep.subr.bf16.mxu0 0
        %5463 = vmatpush1.bf16.msra.mxu0 0
        %5464 = vmatprep.subr.bf16.mxu0 0
        %5465 = vmatpush1.bf16.msra.mxu0 0
        %5466 = vmatprep.subr.bf16.mxu0 0
        %5467 = vmatpush1.bf16.msra.mxu0 0
        %5468 = vmatprep.subr.bf16.mxu0 0
        %5469 = vmatpush1.bf16.msra.mxu0 0
        %5470 = vmatprep.mubr.bf16.mxu0 0
        %5471 = vmatmul.mubr.bf16.gmra.mrb[0].mxu0 %v3761
        %v5472 = vpop.f32.mrb[0].mxu0
        %v5473 = vadd.f32 %v5308, %v5472
        %v5474 = vpop.f32.mrb[0].mxu0
        %v5475 = vadd.f32 %v5312, %v5474
        %v5476 = vpop.f32.mrb[0].mxu0
        %v5477 = vpop.f32.mrb[0].mxu0
        %5478 = vdwg.mxu0
        %v5479 = vmax.f32 %v5432, 0.0
        %v5480 = vmax.f32 %v5434, 0.0
        %v5481 = vmax.f32 %v5473, 0.0
        %v5482 = vmax.f32 %v5475, 0.0
        %v5483 = vpack.c.bf16 %v5479, %v5479
        %v5484 = vpack.c.bf16 %v5480, %v5480
        %v5485 = vpack.c.bf16 %v5481, %v5481
        %v5486 = vpack.c.bf16 %v5482, %v5482
        %v5487 = vld [vmem:[%s3853 + $0x300] sm:$0xf]
        %v5488 = vld [vmem:[%s3853 + $0x304] sm:$0xf]
        %v5489 = vld [vmem:[%s3853 + $0x308] sm:$0xf]
        %v5490 = vld [vmem:[%s3853 + $0x30c] sm:$0xf]
        %v5491 = vld [vmem:[%s3853 + $0x310] sm:$0xf]
        %v5492 = vld [vmem:[%s3853 + $0x314] sm:$0xf]
        %v5493 = vld [vmem:[%s3853 + $0x318] sm:$0xf]
        %v5494 = vld [vmem:[%s3853 + $0x31c] sm:$0xf]
        %v5495 = vld [vmem:[%s3853 + $0x320] sm:$0xf]
        %v5496 = vld [vmem:[%s3853 + $0x324] sm:$0xf]
        %v5497 = vld [vmem:[%s3853 + $0x328] sm:$0xf]
        %v5498 = vld [vmem:[%s3853 + $0x32c] sm:$0xf]
        %v5499 = vld [vmem:[%s3853 + $0x330] sm:$0xf]
        %v5500 = vld [vmem:[%s3853 + $0x334] sm:$0xf]
        %v5501 = vld [vmem:[%s3853 + $0x338] sm:$0xf]
        %v5502 = vld [vmem:[%s3853 + $0x33c] sm:$0xf]
        %v5503 = vld [vmem:[%s3853 + $0x340] sm:$0xf]
        %v5504 = vld [vmem:[%s3853 + $0x344] sm:$0xf]
        %v5505 = vld [vmem:[%s3853 + $0x348] sm:$0xf]
        %v5506 = vld [vmem:[%s3853 + $0x34c] sm:$0xf]
        %v5507 = vld [vmem:[%s3853 + $0x350] sm:$0xf]
        %v5508 = vld [vmem:[%s3853 + $0x354] sm:$0xf]
        %v5509 = vld [vmem:[%s3853 + $0x358] sm:$0xf]
        %v5510 = vld [vmem:[%s3853 + $0x35c] sm:$0xf]
        %v5511 = vld [vmem:[%s3853 + $0x360] sm:$0xf]
        %v5512 = vld [vmem:[%s3853 + $0x364] sm:$0xf]
        %v5513 = vld [vmem:[%s3853 + $0x368] sm:$0xf]
        %v5514 = vld [vmem:[%s3853 + $0x36c] sm:$0xf]
        %v5515 = vld [vmem:[%s3853 + $0x370] sm:$0xf]
        %v5516 = vld [vmem:[%s3853 + $0x374] sm:$0xf]
        %v5517 = vld [vmem:[%s3853 + $0x378] sm:$0xf]
        %v5518 = vld [vmem:[%s3853 + $0x37c] sm:$0xf]
        %v5519 = vld [vmem:[%s3853 + $0x380] sm:$0xf]
        %v5520 = vld [vmem:[%s3853 + $0x384] sm:$0xf]
        %v5521 = vld [vmem:[%s3853 + $0x388] sm:$0xf]
        %v5522 = vld [vmem:[%s3853 + $0x38c] sm:$0xf]
        %v5523 = vld [vmem:[%s3853 + $0x390] sm:$0xf]
        %v5524 = vld [vmem:[%s3853 + $0x394] sm:$0xf]
        %v5525 = vld [vmem:[%s3853 + $0x398] sm:$0xf]
        %v5526 = vld [vmem:[%s3853 + $0x39c] sm:$0xf]
        %v5527 = vld [vmem:[%s3853 + $0x3a0] sm:$0xf]
        %v5528 = vld [vmem:[%s3853 + $0x3a4] sm:$0xf]
        %v5529 = vld [vmem:[%s3853 + $0x3a8] sm:$0xf]
        %v5530 = vld [vmem:[%s3853 + $0x3ac] sm:$0xf]
        %v5531 = vld [vmem:[%s3853 + $0x3b0] sm:$0xf]
        %v5532 = vld [vmem:[%s3853 + $0x3b4] sm:$0xf]
        %v5533 = vld [vmem:[%s3853 + $0x3b8] sm:$0xf]
        %v5534 = vld [vmem:[%s3853 + $0x3bc] sm:$0xf]
        %v5535 = vld [vmem:[%s3853 + $0x3c0] sm:$0xf]
        %v5536 = vld [vmem:[%s3853 + $0x3c4] sm:$0xf]
        %v5537 = vld [vmem:[%s3853 + $0x3c8] sm:$0xf]
        %v5538 = vld [vmem:[%s3853 + $0x3cc] sm:$0xf]
        %v5539 = vld [vmem:[%s3853 + $0x3d0] sm:$0xf]
        %v5540 = vld [vmem:[%s3853 + $0x3d4] sm:$0xf]
        %v5541 = vld [vmem:[%s3853 + $0x3d8] sm:$0xf]
        %v5542 = vld [vmem:[%s3853 + $0x3dc] sm:$0xf]
        %v5543 = vld [vmem:[%s3853 + $0x3e0] sm:$0xf]
        %v5544 = vld [vmem:[%s3853 + $0x3e4] sm:$0xf]
        %v5545 = vld [vmem:[%s3853 + $0x3e8] sm:$0xf]
        %v5546 = vld [vmem:[%s3853 + $0x3ec] sm:$0xf]
        %v5547 = vld [vmem:[%s3853 + $0x3f0] sm:$0xf]
        %v5548 = vld [vmem:[%s3853 + $0x3f4] sm:$0xf]
        %v5549 = vld [vmem:[%s3853 + $0x3f8] sm:$0xf]
        %v5550 = vld [vmem:[%s3853 + $0x3fc] sm:$0xf]
        %v5615 = vunpack.c.l.b16 %v5487
        %v5616 = vunpack.c.l.b16 %v5488
        %v5617 = vunpack.c.l.b16 %v5489
        %v5618 = vunpack.c.l.b16 %v5490
        %v5619 = vunpack.c.l.b16 %v5491
        %v5620 = vunpack.c.l.b16 %v5492
        %v5621 = vunpack.c.l.b16 %v5493
        %v5622 = vunpack.c.l.b16 %v5494
        %v5623 = vunpack.c.l.b16 %v5495
        %v5624 = vunpack.c.l.b16 %v5496
        %v5625 = vunpack.c.l.b16 %v5497
        %v5626 = vunpack.c.l.b16 %v5498
        %v5627 = vunpack.c.l.b16 %v5499
        %v5628 = vunpack.c.l.b16 %v5500
        %v5629 = vunpack.c.l.b16 %v5501
        %v5630 = vunpack.c.l.b16 %v5502
        %v5631 = vunpack.c.l.b16 %v5503
        %v5632 = vunpack.c.l.b16 %v5504
        %v5633 = vunpack.c.l.b16 %v5505
        %v5634 = vunpack.c.l.b16 %v5506
        %v5635 = vunpack.c.l.b16 %v5507
        %v5636 = vunpack.c.l.b16 %v5508
        %v5637 = vunpack.c.l.b16 %v5509
        %v5638 = vunpack.c.l.b16 %v5510
        %v5639 = vunpack.c.l.b16 %v5511
        %v5640 = vunpack.c.l.b16 %v5512
        %v5641 = vunpack.c.l.b16 %v5513
        %v5642 = vunpack.c.l.b16 %v5514
        %v5643 = vunpack.c.l.b16 %v5515
        %v5644 = vunpack.c.l.b16 %v5516
        %v5645 = vunpack.c.l.b16 %v5517
        %v5646 = vunpack.c.l.b16 %v5518
        %v5647 = vunpack.c.l.b16 %v5519
        %v5648 = vunpack.c.l.b16 %v5520
        %v5649 = vunpack.c.l.b16 %v5521
        %v5650 = vunpack.c.l.b16 %v5522
        %v5651 = vunpack.c.l.b16 %v5523
        %v5652 = vunpack.c.l.b16 %v5524
        %v5653 = vunpack.c.l.b16 %v5525
        %v5654 = vunpack.c.l.b16 %v5526
        %v5655 = vunpack.c.l.b16 %v5527
        %v5656 = vunpack.c.l.b16 %v5528
        %v5657 = vunpack.c.l.b16 %v5529
        %v5658 = vunpack.c.l.b16 %v5530
        %v5659 = vunpack.c.l.b16 %v5531
        %v5660 = vunpack.c.l.b16 %v5532
        %v5661 = vunpack.c.l.b16 %v5533
        %v5662 = vunpack.c.l.b16 %v5534
        %v5663 = vunpack.c.l.b16 %v5535
        %v5664 = vunpack.c.l.b16 %v5536
        %v5665 = vunpack.c.l.b16 %v5537
        %v5666 = vunpack.c.l.b16 %v5538
        %v5667 = vunpack.c.l.b16 %v5539
        %v5668 = vunpack.c.l.b16 %v5540
        %v5669 = vunpack.c.l.b16 %v5541
        %v5670 = vunpack.c.l.b16 %v5542
        %v5671 = vunpack.c.l.b16 %v5543
        %v5672 = vunpack.c.l.b16 %v5544
        %v5673 = vunpack.c.l.b16 %v5545
        %v5674 = vunpack.c.l.b16 %v5546
        %v5675 = vunpack.c.l.b16 %v5547
        %v5676 = vunpack.c.l.b16 %v5548
        %v5677 = vunpack.c.l.b16 %v5549
        %v5678 = vunpack.c.l.b16 %v5550
        %v5679 = vpack.c.b16 %v5616, %v5615
        %v5680 = vpack.c.b16 %v5618, %v5617
        %v5681 = vpack.c.b16 %v5620, %v5619
        %v5682 = vpack.c.b16 %v5622, %v5621
        %v5683 = vpack.c.b16 %v5624, %v5623
        %v5684 = vpack.c.b16 %v5626, %v5625
        %v5685 = vpack.c.b16 %v5628, %v5627
        %v5686 = vpack.c.b16 %v5630, %v5629
        %v5687 = vpack.c.b16 %v5632, %v5631
        %v5688 = vpack.c.b16 %v5634, %v5633
        %v5689 = vpack.c.b16 %v5636, %v5635
        %v5690 = vpack.c.b16 %v5638, %v5637
        %v5691 = vpack.c.b16 %v5640, %v5639
        %v5692 = vpack.c.b16 %v5642, %v5641
        %v5693 = vpack.c.b16 %v5644, %v5643
        %v5694 = vpack.c.b16 %v5646, %v5645
        %v5695 = vpack.c.b16 %v5648, %v5647
        %v5696 = vpack.c.b16 %v5650, %v5649
        %v5697 = vpack.c.b16 %v5652, %v5651
        %v5698 = vpack.c.b16 %v5654, %v5653
        %v5699 = vpack.c.b16 %v5656, %v5655
        %v5700 = vpack.c.b16 %v5658, %v5657
        %v5701 = vpack.c.b16 %v5660, %v5659
        %v5702 = vpack.c.b16 %v5662, %v5661
        %v5703 = vpack.c.b16 %v5664, %v5663
        %v5704 = vpack.c.b16 %v5666, %v5665
        %v5705 = vpack.c.b16 %v5668, %v5667
        %v5706 = vpack.c.b16 %v5670, %v5669
        %v5707 = vpack.c.b16 %v5672, %v5671
        %v5708 = vpack.c.b16 %v5674, %v5673
        %v5709 = vpack.c.b16 %v5676, %v5675
        %v5710 = vpack.c.b16 %v5678, %v5677
        %5743 = vmatprep.subr.bf16.mxu0 0
        %5744 = vmatpush1.bf16.msra.mxu0 %v5679
        %5745 = vmatprep.subr.bf16.mxu0 0
        %5746 = vmatpush1.bf16.msra.mxu0 %v5680
        %5747 = vmatprep.subr.bf16.mxu0 0
        %5748 = vmatpush1.bf16.msra.mxu0 %v5681
        %5749 = vmatprep.subr.bf16.mxu0 0
        %5750 = vmatpush1.bf16.msra.mxu0 %v5682
        %5751 = vmatprep.subr.bf16.mxu0 0
        %5752 = vmatpush1.bf16.msra.mxu0 %v5683
        %5753 = vmatprep.subr.bf16.mxu0 0
        %5754 = vmatpush1.bf16.msra.mxu0 %v5684
        %5755 = vmatprep.subr.bf16.mxu0 0
        %5756 = vmatpush1.bf16.msra.mxu0 %v5685
        %5757 = vmatprep.subr.bf16.mxu0 0
        %5758 = vmatpush1.bf16.msra.mxu0 %v5686
        %5759 = vmatprep.subr.bf16.mxu0 0
        %5760 = vmatpush1.bf16.msra.mxu0 %v5687
        %5761 = vmatprep.subr.bf16.mxu0 0
        %5762 = vmatpush1.bf16.msra.mxu0 %v5688
        %5763 = vmatprep.subr.bf16.mxu0 0
        %5764 = vmatpush1.bf16.msra.mxu0 %v5689
        %5765 = vmatprep.subr.bf16.mxu0 0
        %5766 = vmatpush1.bf16.msra.mxu0 %v5690
        %5767 = vmatprep.subr.bf16.mxu0 0
        %5768 = vmatpush1.bf16.msra.mxu0 %v5691
        %5769 = vmatprep.subr.bf16.mxu0 0
        %5770 = vmatpush1.bf16.msra.mxu0 %v5692
        %5771 = vmatprep.subr.bf16.mxu0 0
        %5772 = vmatpush1.bf16.msra.mxu0 %v5693
        %5773 = vmatprep.subr.bf16.mxu0 0
        %5774 = vmatpush1.bf16.msra.mxu0 %v5694
        %5775 = vmatprep.mubr.bf16.mxu0 %v5484
        %5776 = vmatmul.mubr.bf16.gmra.mrb[0].mxu0 %v5483
        %v5777 = vpop.f32.mrb[0].mxu0
        %v5778 = vadd.f32 0.0, %v5777
        %v5779 = vpop.f32.mrb[0].mxu0
        %v5780 = vpop.f32.mrb[0].mxu0
        %v5781 = vpop.f32.mrb[0].mxu0
        %5782 = vdwg.mxu0
        %5783 = vmatprep.subr.bf16.mxu0 0
        %5784 = vmatpush1.bf16.msra.mxu0 %v5695
        %5785 = vmatprep.subr.bf16.mxu0 0
        %5786 = vmatpush1.bf16.msra.mxu0 %v5696
        %5787 = vmatprep.subr.bf16.mxu0 0
        %5788 = vmatpush1.bf16.msra.mxu0 %v5697
        %5789 = vmatprep.subr.bf16.mxu0 0
        %5790 = vmatpush1.bf16.msra.mxu0 %v5698
        %5791 = vmatprep.subr.bf16.mxu0 0
        %5792 = vmatpush1.bf16.msra.mxu0 %v5699
        %5793 = vmatprep.subr.bf16.mxu0 0
        %5794 = vmatpush1.bf16.msra.mxu0 %v5700
        %5795 = vmatprep.subr.bf16.mxu0 0
        %5796 = vmatpush1.bf16.msra.mxu0 %v5701
        %5797 = vmatprep.subr.bf16.mxu0 0
        %5798 = vmatpush1.bf16.msra.mxu0 %v5702
        %5799 = vmatprep.subr.bf16.mxu0 0
        %5800 = vmatpush1.bf16.msra.mxu0 %v5703
        %5801 = vmatprep.subr.bf16.mxu0 0
        %5802 = vmatpush1.bf16.msra.mxu0 %v5704
        %5803 = vmatprep.subr.bf16.mxu0 0
        %5804 = vmatpush1.bf16.msra.mxu0 %v5705
        %5805 = vmatprep.subr.bf16.mxu0 0
        %5806 = vmatpush1.bf16.msra.mxu0 %v5706
        %5807 = vmatprep.subr.bf16.mxu0 0
        %5808 = vmatpush1.bf16.msra.mxu0 %v5707
        %5809 = vmatprep.subr.bf16.mxu0 0
        %5810 = vmatpush1.bf16.msra.mxu0 %v5708
        %5811 = vmatprep.subr.bf16.mxu0 0
        %5812 = vmatpush1.bf16.msra.mxu0 %v5709
        %5813 = vmatprep.subr.bf16.mxu0 0
        %5814 = vmatpush1.bf16.msra.mxu0 %v5710
        %5815 = vmatprep.mubr.bf16.mxu0 %v5486
        %5816 = vmatmul.mubr.bf16.gmra.mrb[0].mxu0 %v5485
        %v5817 = vpop.f32.mrb[0].mxu0
        %v5818 = vadd.f32 %v5778, %v5817
        %v5819 = vpop.f32.mrb[0].mxu0
        %v5820 = vpop.f32.mrb[0].mxu0
        %v5821 = vpop.f32.mrb[0].mxu0
        %5822 = vdwg.mxu0
        %v5823 = vadd.f32 %v5278, %v5818
        %v5824 = vadd.f32 %v3638, %v5823
        %s5825 = scalar_lea.vmem %s10, 1
        %v5826 = vld [vmem:[%s5825] sm:$0x1]
        %v5828 = vlaneseq
        %v5829 = vshrl.u32 %v5828, 7
        %v5830 = vsub.s32 0, %v5829
        %v5831 = vrot.slane %v5826, %v5830
        %v5833 = vadd.f32 %v5824, %v5831
        %s5834 = scalar_lea.vmem %s11, 1
        %v5835 = vld [vmem:[%s5834] sm:$0x1]
        %s5836 = scalar_lea.vmem %s12, 1
        %v5837 = vld [vmem:[%s5836] sm:$0x1]
        %v5838 = vsel %vm1229, %v5833, 0.0
        %5839 = vadd.xlane.f32.xlu0 %v5838
        %v5840 = vpop.xlane.xlu0 %5839
        %v5841 = vmul.f32 %v5840, %v1278
        %v5842 = vsub.f32 %v5833, %v5841
        %v5843 = vmul.f32 %v5842, %v5842
        %v5844 = vsel %vm1229, %v5843, 0.0
        %5845 = vadd.xlane.f32.xlu0 %v5844
        %v5846 = vpop.xlane.xlu0 %5845
        %v5847 = vmul.f32 %v5846, %v1278
        %v5848 = vadd.f32 %v5847, 1e-05
        %v5849 = vrsqrt.pop %v5848
        %v5850 = vmul.f32 %v5842, %v5849
        %v5852 = vlaneseq
        %v5853 = vshrl.u32 %v5852, 7
        %v5854 = vsub.s32 0, %v5853
        %v5855 = vrot.slane %v5835, %v5854
        %v5857 = vmul.f32 %v5850, %v5855
        %v5859 = vlaneseq
        %v5860 = vshrl.u32 %v5859, 7
        %v5861 = vsub.s32 0, %v5860
        %v5862 = vrot.slane %v5837, %v5861
        %v5864 = vadd.f32 %v5857, %v5862
        %5865 = vst.msk [vmem:[%s433] sm:$0xff] %vm1229, %v5864
        %s5866 = sand.u32 %s313, 1
        %s5867 = scalar_lea.sflag [#allocation3], %s5866
        %s5868 = sand.u32 %s313, 1
        %s5869 = smul.addr %s5868, 8
        %s5870 = scalar_lea.vmem [#allocation2], %s5869
        // Predicated region
        $region73: #{tpu_custom_call.1} parent=71 // pred_check
          %p5871 = pneg %p323
        $region74: #{tpu_custom_call.1} parent=71 // pred_check_branch
          %5873 = sbr.rel (%p5871) target = $region76
        $region75: #{tpu_custom_call.1} parent=71 // pred_region
          %s5875 = ssub.s32 128, 128
          %5876 = vsyncadd %s5867, %s5875
          %s5877 = smul.addr %s27, 128
          %s5878 = scalar_lea.hbm %s13, %s5877
          %s5880 = sshll.u32 %s5870, 4
          %s5881 = int_to_ptr.vmem [resolvable:$true] %s5880
          %5883 = dma.vmem_to_hbm [thread:$0]  %s5881, 128, %s5878, %s5867
        $region76: #{tpu_custom_call.1} parent=71 // pred_fallthru
          _
      $region72: #{tpu_custom_call.1} parent=5 // pred_fallthru
        _
      %p5884 = scmp.le.s32.totalorder 2, %s22
      // Predicated region
      $region77: #{tpu_custom_call.1} parent=5 // pred_check
        %p5885 = pneg %p5884
      $region78: #{tpu_custom_call.1} parent=5 // pred_check_branch
        %5887 = sbr.rel (%p5885) target = $region80
      $region79: #{tpu_custom_call.1} parent=5 // pred_region
        %s5888 = ssub.s32 %s22, 2
        // Predicated region
        $region81: #{tpu_custom_call.1} parent=79 // pred_check
          %p5889 = pneg %p329
        $region82: #{tpu_custom_call.1} parent=79 // pred_check_branch
          %5891 = sbr.rel (%p5889) target = $region84
        $region83: #{tpu_custom_call.1} parent=79 // pred_region
          %s5892 = sand.u32 %s314, 1
          %s5893 = scalar_lea.sflag [#allocation3], %s5892
          %s5894 = sand.u32 %s314, 1
          %s5895 = smul.addr %s5894, 8
          %s5896 = scalar_lea.vmem [#allocation2], %s5895
          %5897 = dma.done %s5893, 128
        $region84: #{tpu_custom_call.1} parent=79 // pred_fallthru
          _
      $region80: #{tpu_custom_call.1} parent=5 // pred_fallthru
        _
    $region6: #{tpu_custom_call.1} parent=1 // loop_footer
      %s26 = sadd.s32 1, %s22
    $region7: #{tpu_custom_call.1} parent=1 // loop_footer_branch
      %21 = sbr.rel target = $region3
    $region8: #{tpu_custom_call.1} parent=1 // loop_exit
      _
    %5898 = vsyncpa [#allocation3], 1
    %s5899 = scalar_lea.sflag [#allocation3], 1
    %5900 = vsyncpa %s5899, 1

</llo_original>
